<compile_context>
chip_gen: v6e
topology: v6e:2x2x1
jax: 0.10.0
libtpu: 0.0.40
codegen_flags: <defaults>
</compile_context>

<pallas_src>
import functools

import jax
import jax.numpy as jnp
from jax import lax
from jax.experimental import pallas as pl
from jax.experimental.pallas import tpu as pltpu


# ----------------------------------------------------------------------------- helpers
def _round_up(x, m):
    return (x + m - 1) // m * m


def _pick_images_per_step(n):
    """Images per grid step: whole batch for tiny N, else keep >=16 grid steps."""
    for nb in (8, 4, 2):
        if n % nb == 0 and (n // nb >= 16 or nb >= n):
            return nb
    return 1


def _roll_lanes(x, shift, size):
    """Circular roll (jnp.roll semantics) along the last (lane) axis, static shift."""
    shift = shift % size
    if shift == 0:
        return x
    return pltpu.roll(x, shift, axis=1)


def _stacked_taps(x, *, W, S, mfirst, mlast):
    """Stack the 9 circularly shifted taps of x (C, S) into one (9*C, S) slab.

    Row order r = (kw*3 + kh)*C + ci matches the weight layout built in the
    wrapper.  A circular shift in H is an exact flat roll by -dh*W; a shift in W
    is a flat roll whose wrap column is fixed with a single vselect.
    """
    slabs = []
    for dw in (-1, 0, 1):
        if dw == 0:
            xw = x
        elif dw == 1:
            main = _roll_lanes(x, -1, S)         # right for all columns j <= W-2
            wrap = _roll_lanes(x, W - 1, S)      # right for the j == W-1 wrap column
            xw = jnp.where(mlast, wrap, main)
        else:  # dw == -1
            main = _roll_lanes(x, 1, S)          # right for all columns j >= 1
            wrap = _roll_lanes(x, -(W - 1), S)   # right for the j == 0 wrap column
            xw = jnp.where(mfirst, wrap, main)
        for dh in (-1, 0, 1):
            slabs.append(_roll_lanes(xw, -dh * W, S))
    return jnp.concatenate(slabs, axis=0)        # (9*C, S), sublane-aligned (C % 8 == 0)


def _relu_instance_norm(z, gamma, beta, *, S, eps=1e-5):
    """ReLU then InstanceNorm2d (per-channel stats over the S spatial positions)."""
    y = jnp.maximum(z, 0.0)
    inv_cnt = 1.0 / S                            # static; no runtime divide
    s1 = jnp.sum(y, axis=1, keepdims=True)       # both sums in one pass
    s2 = jnp.sum(y * y, axis=1, keepdims=True)
    mean = s1 * inv_cnt
    var = jnp.maximum(s2 * inv_cnt - mean * mean, 0.0)
    scale = gamma * lax.rsqrt(var + eps)         # EUP rsqrt
    return (y - mean) * scale + beta


# ----------------------------------------------------------------------------- kernel
def _conv_block_ine_kernel(x_ref, mfirst_ref, mlast_ref,
                           w1_ref, b1_ref, g1_ref, bt1_ref,
                           w2_ref, b2_ref, g2_ref, bt2_ref,
                           o_ref, *, W):
    nb, cin_p, S = x_ref.shape
    cout_p = o_ref.shape[1]

    # Resident parameter tiles, loaded once per grid step.
    w1 = w1_ref[...]      # (cout_p, 9*cin_p)
    b1 = b1_ref[...]      # (cout_p, 1)
    g1 = g1_ref[...]
    bt1 = bt1_ref[...]
    w2 = w2_ref[...]      # (cout_p, 9*cout_p)
    b2 = b2_ref[...]
    g2 = g2_ref[...]
    bt2 = bt2_ref[...]

    # Wrap-column masks, broadcast once per channel width (hoisted out of loops).
    mf = mfirst_ref[...]  # (1, S) f32 {0,1}
    ml = mlast_ref[...]
    masks = {}
    for c in sorted({cin_p, cout_p}):
        masks[c] = (jnp.broadcast_to(mf, (c, S)) != 0.0,
                    jnp.broadcast_to(ml, (c, S)) != 0.0)

    outs = []
    for b in range(nb):                 # static unroll; images are independent work
        x = x_ref[b]                    # (cin_p, S)

        # conv1 -> ReLU -> InstanceNorm1  (one MXU dot over the stacked taps)
        mfi, mla = masks[cin_p]
        t = _stacked_taps(x, W=W, S=S, mfirst=mfi, mlast=mla)       # (9*cin_p, S)
        h = jnp.dot(w1, t, preferred_element_type=jnp.float32,
                    precision=lax.Precision.HIGHEST) + b1
        h = _relu_instance_norm(h, g1, bt1, S=S)

        # conv2 -> ReLU -> InstanceNorm2
        mfi, mla = masks[cout_p]
        t = _stacked_taps(h, W=W, S=S, mfirst=mfi, mlast=mla)       # (9*cout_p, S)
        h = jnp.dot(w2, t, preferred_element_type=jnp.float32,
                    precision=lax.Precision.HIGHEST) + b2
        h = _relu_instance_norm(h, g2, bt2, S=S)

        outs.append(h)

    # Single lane-dense (nb, cout_p, S) store (S multiple of 128 -> unmasked vst).
    o_ref[...] = jnp.stack(outs, axis=0)


# ----------------------------------------------------------------------------- wrapper
def conv_block_ine(x, params):
    N, Cin, H, W = x.shape
    Cout = params["w1"].shape[0]
    S = H * W
    cin_p = _round_up(Cin, 8)      # pad channels to full sublane groups so every
    cout_p = _round_up(Cout, 8)    # tap slab / weight tile is (8,128)-friendly
    nb = _pick_images_per_step(N)

    # Flatten spatial dims onto the lane axis; zero-pad input channels.
    xf = x.reshape(N, Cin, S).astype(jnp.float32)
    if cin_p != Cin:
        xf = jnp.pad(xf, ((0, 0), (0, cin_p - Cin), (0, 0)))

    # Weight matrices laid out so column r = (kw*3 + kh)*C_in_p + ci matches the
    # tap-stacking order in the kernel; zero-padded to (cout_p, 9*c_in_p).
    def _wmat(w, ci_p):
        co, ci = w.shape[:2]
        wp = jnp.zeros((cout_p, ci_p, 3, 3), jnp.float32)
        wp = wp.at[:co, :ci].set(w.astype(jnp.float32))
        return wp.transpose(0, 3, 2, 1).reshape(cout_p, 9 * ci_p)

    def _col(v):
        vp = jnp.zeros((cout_p,), jnp.float32).at[:v.shape[0]].set(v.astype(jnp.float32))
        return vp.reshape(cout_p, 1)

    # Wrap-column indicators for the W-direction circular shift (static, tiny).
    col = jnp.arange(S, dtype=jnp.int32) % W
    mfirst = (col == 0).astype(jnp.float32)[None, :]       # j == 0
    mlast = (col == W - 1).astype(jnp.float32)[None, :]    # j == W-1

    def _full(shape):
        zeros = (0,) * len(shape)
        return pl.BlockSpec(shape, lambda n, _z=zeros: _z)

    # Advisory cost hint for XLA's scheduler around the custom call.
    flops = 2 * N * S * 9 * (Cin * Cout + Cout * Cout) + 12 * N * S * Cout
    cost = pl.CostEstimate(
        flops=int(flops),
        transcendentals=int(2 * N * Cout),
        bytes_accessed=int(4 * (N * S * (Cin + Cout) + 9 * Cout * (Cin + Cout))))

    out = pl.pallas_call(
        functools.partial(_conv_block_ine_kernel, W=W),
        out_shape=jax.ShapeDtypeStruct((N, cout_p, S), jnp.float32),
        grid=(N // nb,),
        in_specs=[
            pl.BlockSpec((nb, cin_p, S), lambda n: (n, 0, 0)),   # nb images / step
            _full((1, S)), _full((1, S)),                        # wrap masks
            _full((cout_p, 9 * cin_p)), _full((cout_p, 1)), _full((cout_p, 1)), _full((cout_p, 1)),
            _full((cout_p, 9 * cout_p)), _full((cout_p, 1)), _full((cout_p, 1)), _full((cout_p, 1)),
        ],
        out_specs=pl.BlockSpec((nb, cout_p, S), lambda n: (n, 0, 0)),
        compiler_params=pltpu.CompilerParams(
            dimension_semantics=("parallel",),        # batch-parallel (v7x 2 TCs)
            vmem_limit_bytes=32 * 1024 * 1024),       # explicit; fits v7x 64 MiB VMEM
        cost_estimate=cost,
    )(xf, mfirst, mlast,
      _wmat(params["w1"], cin_p), _col(params["b1"]), _col(params["g1"]), _col(params["bt1"]),
      _wmat(params["w2"], cout_p), _col(params["b2"]), _col(params["g2"]), _col(params["bt2"]))

    return out[:, :Cout, :].reshape(N, Cout, H, W)


# ----------------------------------------------------------------------------- reference
def conv_block_ine_reference(x, params):
    """Pure-JAX reference matching the PyTorch module's forward semantics."""
    def circ_conv(inp, w, b):
        ip = jnp.pad(inp, ((0, 0), (0, 0), (1, 1), (1, 1)), mode="wrap")
        y = lax.conv_general_dilated(
            ip, w, window_strides=(1, 1), padding="VALID",
            dimension_numbers=("NCHW", "OIHW", "NCHW"),
            precision=lax.Precision.HIGHEST)
        return y + b[None, :, None, None]

    def inorm(y, g, b):
        mean = y.mean(axis=(2, 3), keepdims=True)
        var = y.var(axis=(2, 3), keepdims=True)
        yh = (y - mean) / jnp.sqrt(var + 1e-5)
        return yh * g[None, :, None, None] + b[None, :, None, None]

    y = jnp.maximum(circ_conv(x, params["w1"], params["b1"]), 0.0)
    y = inorm(y, params["g1"], params["bt1"])
    y = jnp.maximum(circ_conv(y, params["w2"], params["b2"]), 0.0)
    y = inorm(y, params["g2"], params["bt2"])
    return y


if __name__ == "__main__":
    N, Cin, Cout, H, W = 2, 4, 8, 16, 16
    key = jax.random.PRNGKey(0)
    ks = jax.random.split(key, 9)
    params = {
        "w1": jax.random.normal(ks[0], (Cout, Cin, 3, 3), jnp.float32) / (Cin * 9) ** 0.5,
        "b1": 0.1 * jax.random.normal(ks[1], (Cout,), jnp.float32),
        "g1": 1.0 + 0.1 * jax.random.normal(ks[2], (Cout,), jnp.float32),
        "bt1": 0.1 * jax.random.normal(ks[3], (Cout,), jnp.float32),
        "w2": jax.random.normal(ks[4], (Cout, Cout, 3, 3), jnp.float32) / (Cout * 9) ** 0.5,
        "b2": 0.1 * jax.random.normal(ks[5], (Cout,), jnp.float32),
        "g2": 1.0 + 0.1 * jax.random.normal(ks[6], (Cout,), jnp.float32),
        "bt2": 0.1 * jax.random.normal(ks[7], (Cout,), jnp.float32),
    }
    x = jax.random.normal(ks[8], (N, Cin, H, W), jnp.float32)

    out = jax.jit(conv_block_ine)(x, params)
    out = jax.block_until_ready(out)

    ref = conv_block_ine_reference(x, params)
    assert out.shape == (N, Cout, H, W), out.shape
    max_err = float(jnp.max(jnp.abs(out - ref)))
    assert max_err < 2e-4, f"max abs err = {max_err}"
    print("KERNEL_OK")
</pallas_src>

<mosaic_0001>
module attributes {stable_mosaic.version = 11 : i64} {
  func.func @_conv_block_ine_kernel(%arg0: i32, %arg1: memref<2x8x256xf32, #tpu.memory_space<vmem>>, %arg2: memref<1x256xf32, #tpu.memory_space<vmem>>, %arg3: memref<1x256xf32, #tpu.memory_space<vmem>>, %arg4: memref<8x72xf32, #tpu.memory_space<vmem>>, %arg5: memref<8x1xf32, #tpu.memory_space<vmem>>, %arg6: memref<8x1xf32, #tpu.memory_space<vmem>>, %arg7: memref<8x1xf32, #tpu.memory_space<vmem>>, %arg8: memref<8x72xf32, #tpu.memory_space<vmem>>, %arg9: memref<8x1xf32, #tpu.memory_space<vmem>>, %arg10: memref<8x1xf32, #tpu.memory_space<vmem>>, %arg11: memref<8x1xf32, #tpu.memory_space<vmem>>, %arg12: memref<2x8x256xf32, #tpu.memory_space<vmem>>) attributes {dimension_semantics = [#tpu.dimension_semantics<parallel>], iteration_bounds = array<i64: 1>, scalar_prefetch = 0 : i64, scratch_operands = 0 : i64, tpu.core_type = #tpu.core_type<tc>, window_params = [{transform_indices = @transform_0, window_bounds = array<i64: 2, 8, 256>}, {pipeline_mode = #tpu.pipeline_mode<synchronous>, transform_indices = @transform_1, window_bounds = array<i64: 1, 256>}, {pipeline_mode = #tpu.pipeline_mode<synchronous>, transform_indices = @transform_2, window_bounds = array<i64: 1, 256>}, {pipeline_mode = #tpu.pipeline_mode<synchronous>, transform_indices = @transform_3, window_bounds = array<i64: 8, 72>}, {pipeline_mode = #tpu.pipeline_mode<synchronous>, transform_indices = @transform_4, window_bounds = array<i64: 8, 1>}, {pipeline_mode = #tpu.pipeline_mode<synchronous>, transform_indices = @transform_5, window_bounds = array<i64: 8, 1>}, {pipeline_mode = #tpu.pipeline_mode<synchronous>, transform_indices = @transform_6, window_bounds = array<i64: 8, 1>}, {pipeline_mode = #tpu.pipeline_mode<synchronous>, transform_indices = @transform_7, window_bounds = array<i64: 8, 72>}, {pipeline_mode = #tpu.pipeline_mode<synchronous>, transform_indices = @transform_8, window_bounds = array<i64: 8, 1>}, {pipeline_mode = #tpu.pipeline_mode<synchronous>, transform_indices = @transform_9, window_bounds = array<i64: 8, 1>}, {pipeline_mode = #tpu.pipeline_mode<synchronous>, transform_indices = @transform_10, window_bounds = array<i64: 8, 1>}, {transform_indices = @transform_11, window_bounds = array<i64: 2, 8, 256>}]} {
    %c0 = arith.constant 0 : index
    %c0_0 = arith.constant 0 : index
    %0 = vector.load %arg4[%c0, %c0_0] : memref<8x72xf32, #tpu.memory_space<vmem>>, vector<8x72xf32>
    %c0_1 = arith.constant 0 : index
    %c0_2 = arith.constant 0 : index
    %1 = vector.load %arg5[%c0_1, %c0_2] : memref<8x1xf32, #tpu.memory_space<vmem>>, vector<8x1xf32>
    %c0_3 = arith.constant 0 : index
    %c0_4 = arith.constant 0 : index
    %2 = vector.load %arg6[%c0_3, %c0_4] : memref<8x1xf32, #tpu.memory_space<vmem>>, vector<8x1xf32>
    %c0_5 = arith.constant 0 : index
    %c0_6 = arith.constant 0 : index
    %3 = vector.load %arg7[%c0_5, %c0_6] : memref<8x1xf32, #tpu.memory_space<vmem>>, vector<8x1xf32>
    %c0_7 = arith.constant 0 : index
    %c0_8 = arith.constant 0 : index
    %4 = vector.load %arg8[%c0_7, %c0_8] : memref<8x72xf32, #tpu.memory_space<vmem>>, vector<8x72xf32>
    %c0_9 = arith.constant 0 : index
    %c0_10 = arith.constant 0 : index
    %5 = vector.load %arg9[%c0_9, %c0_10] : memref<8x1xf32, #tpu.memory_space<vmem>>, vector<8x1xf32>
    %c0_11 = arith.constant 0 : index
    %c0_12 = arith.constant 0 : index
    %6 = vector.load %arg10[%c0_11, %c0_12] : memref<8x1xf32, #tpu.memory_space<vmem>>, vector<8x1xf32>
    %c0_13 = arith.constant 0 : index
    %c0_14 = arith.constant 0 : index
    %7 = vector.load %arg11[%c0_13, %c0_14] : memref<8x1xf32, #tpu.memory_space<vmem>>, vector<8x1xf32>
    %c0_15 = arith.constant 0 : index
    %c0_16 = arith.constant 0 : index
    %8 = vector.load %arg2[%c0_15, %c0_16] : memref<1x256xf32, #tpu.memory_space<vmem>>, vector<1x256xf32>
    %c0_17 = arith.constant 0 : index
    %c0_18 = arith.constant 0 : index
    %9 = vector.load %arg3[%c0_17, %c0_18] : memref<1x256xf32, #tpu.memory_space<vmem>>, vector<1x256xf32>
    %10 = vector.shape_cast %8 : vector<1x256xf32> to vector<1x256xf32>
    %11 = vector.broadcast %10 : vector<1x256xf32> to vector<8x256xf32>
    %cst = arith.constant 0.000000e+00 : f32
    %12 = vector.broadcast %cst : f32 to vector<8x256xf32>
    %13 = arith.cmpf one, %11, %12 : vector<8x256xf32>
    %14 = vector.shape_cast %9 : vector<1x256xf32> to vector<1x256xf32>
    %15 = vector.broadcast %14 : vector<1x256xf32> to vector<8x256xf32>
    %cst_19 = arith.constant 0.000000e+00 : f32
    %16 = vector.broadcast %cst_19 : f32 to vector<8x256xf32>
    %17 = arith.cmpf one, %15, %16 : vector<8x256xf32>
    %c0_20 = arith.constant 0 : index
    %c0_21 = arith.constant 0 : index
    %c0_22 = arith.constant 0 : index
    %18 = vector.load %arg1[%c0_20, %c0_21, %c0_22] : memref<2x8x256xf32, #tpu.memory_space<vmem>>, vector<1x8x256xf32>
    %19 = vector.shape_cast %18 : vector<1x8x256xf32> to vector<8x256xf32>
    %c1_i32 = arith.constant 1 : i32
    %20 = tpu.dynamic_rotate %19 by %c1_i32 dim 1 : vector<8x256xf32>, i32 -> vector<8x256xf32>
    %c241_i32 = arith.constant 241 : i32
    %21 = tpu.dynamic_rotate %19 by %c241_i32 dim 1 : vector<8x256xf32>, i32 -> vector<8x256xf32>
    %22 = arith.select %13, %21, %20 : vector<8x256xi1>, vector<8x256xf32>
    %c16_i32 = arith.constant 16 : i32
    %23 = tpu.dynamic_rotate %22 by %c16_i32 dim 1 : vector<8x256xf32>, i32 -> vector<8x256xf32>
    %c240_i32 = arith.constant 240 : i32
    %24 = tpu.dynamic_rotate %22 by %c240_i32 dim 1 : vector<8x256xf32>, i32 -> vector<8x256xf32>
    %c16_i32_23 = arith.constant 16 : i32
    %25 = tpu.dynamic_rotate %19 by %c16_i32_23 dim 1 : vector<8x256xf32>, i32 -> vector<8x256xf32>
    %c240_i32_24 = arith.constant 240 : i32
    %26 = tpu.dynamic_rotate %19 by %c240_i32_24 dim 1 : vector<8x256xf32>, i32 -> vector<8x256xf32>
    %c255_i32 = arith.constant 255 : i32
    %27 = tpu.dynamic_rotate %19 by %c255_i32 dim 1 : vector<8x256xf32>, i32 -> vector<8x256xf32>
    %c15_i32 = arith.constant 15 : i32
    %28 = tpu.dynamic_rotate %19 by %c15_i32 dim 1 : vector<8x256xf32>, i32 -> vector<8x256xf32>
    %29 = arith.select %17, %28, %27 : vector<8x256xi1>, vector<8x256xf32>
    %c16_i32_25 = arith.constant 16 : i32
    %30 = tpu.dynamic_rotate %29 by %c16_i32_25 dim 1 : vector<8x256xf32>, i32 -> vector<8x256xf32>
    %c240_i32_26 = arith.constant 240 : i32
    %31 = tpu.dynamic_rotate %29 by %c240_i32_26 dim 1 : vector<8x256xf32>, i32 -> vector<8x256xf32>
    %32 = tpu.concatenate %23, %22, %24, %25, %19, %26, %30, %29, %31 in 0 : vector<8x256xf32>, vector<8x256xf32>, vector<8x256xf32>, vector<8x256xf32>, vector<8x256xf32>, vector<8x256xf32>, vector<8x256xf32>, vector<8x256xf32>, vector<8x256xf32> -> vector<72x256xf32>
    %cst_27 = arith.constant dense<0.000000e+00> : vector<8x256xf32>
    %33 = tpu.matmul %0, %32, %cst_27 {dimension_numbers = #tpu.dot_dimension_numbers<[1], [0], [0], [1], [0, 0, 1, 1], [], []>, precision = #tpu.contract_precision<fp32>} : vector<8x72xf32>, vector<72x256xf32>, vector<8x256xf32> -> vector<8x256xf32>
    %34 = vector.broadcast %1 : vector<8x1xf32> to vector<8x256xf32>
    %35 = arith.addf %33, %34 : vector<8x256xf32>
    %cst_28 = arith.constant 0.000000e+00 : f32
    %36 = vector.broadcast %cst_28 : f32 to vector<8x256xf32>
    %37 = arith.maximumf %35, %36 : vector<8x256xf32>
    %cst_29 = arith.constant dense<0.000000e+00> : vector<8xf32>
    %38 = vector.multi_reduction <add>, %37, %cst_29 [1] : vector<8x256xf32> to vector<8xf32>
    %39 = vector.shape_cast %38 : vector<8xf32> to vector<8x1xf32>
    %40 = arith.mulf %37, %37 : vector<8x256xf32>
    %cst_30 = arith.constant dense<0.000000e+00> : vector<8xf32>
    %41 = vector.multi_reduction <add>, %40, %cst_30 [1] : vector<8x256xf32> to vector<8xf32>
    %42 = vector.shape_cast %41 : vector<8xf32> to vector<8x1xf32>
    %cst_31 = arith.constant 3.906250e-03 : f32
    %43 = vector.broadcast %cst_31 : f32 to vector<8x1xf32>
    %44 = arith.mulf %39, %43 : vector<8x1xf32>
    %cst_32 = arith.constant 3.906250e-03 : f32
    %45 = vector.broadcast %cst_32 : f32 to vector<8x1xf32>
    %46 = arith.mulf %42, %45 : vector<8x1xf32>
    %47 = arith.mulf %44, %44 : vector<8x1xf32>
    %48 = arith.subf %46, %47 : vector<8x1xf32>
    %cst_33 = arith.constant 0.000000e+00 : f32
    %49 = vector.broadcast %cst_33 : f32 to vector<8x1xf32>
    %50 = arith.maximumf %48, %49 : vector<8x1xf32>
    %cst_34 = arith.constant 9.99999974E-6 : f32
    %51 = vector.broadcast %cst_34 : f32 to vector<8x1xf32>
    %52 = arith.addf %50, %51 : vector<8x1xf32>
    %53 = math.rsqrt %52 : vector<8x1xf32>
    %54 = arith.mulf %2, %53 : vector<8x1xf32>
    %55 = vector.broadcast %44 : vector<8x1xf32> to vector<8x256xf32>
    %56 = arith.subf %37, %55 : vector<8x256xf32>
    %57 = vector.broadcast %54 : vector<8x1xf32> to vector<8x256xf32>
    %58 = arith.mulf %56, %57 : vector<8x256xf32>
    %59 = vector.broadcast %3 : vector<8x1xf32> to vector<8x256xf32>
    %60 = arith.addf %58, %59 : vector<8x256xf32>
    %c1_i32_35 = arith.constant 1 : i32
    %61 = tpu.dynamic_rotate %60 by %c1_i32_35 dim 1 : vector<8x256xf32>, i32 -> vector<8x256xf32>
    %c241_i32_36 = arith.constant 241 : i32
    %62 = tpu.dynamic_rotate %60 by %c241_i32_36 dim 1 : vector<8x256xf32>, i32 -> vector<8x256xf32>
    %63 = arith.select %13, %62, %61 : vector<8x256xi1>, vector<8x256xf32>
    %c16_i32_37 = arith.constant 16 : i32
    %64 = tpu.dynamic_rotate %63 by %c16_i32_37 dim 1 : vector<8x256xf32>, i32 -> vector<8x256xf32>
    %c240_i32_38 = arith.constant 240 : i32
    %65 = tpu.dynamic_rotate %63 by %c240_i32_38 dim 1 : vector<8x256xf32>, i32 -> vector<8x256xf32>
    %c16_i32_39 = arith.constant 16 : i32
    %66 = tpu.dynamic_rotate %60 by %c16_i32_39 dim 1 : vector<8x256xf32>, i32 -> vector<8x256xf32>
    %c240_i32_40 = arith.constant 240 : i32
    %67 = tpu.dynamic_rotate %60 by %c240_i32_40 dim 1 : vector<8x256xf32>, i32 -> vector<8x256xf32>
    %c255_i32_41 = arith.constant 255 : i32
    %68 = tpu.dynamic_rotate %60 by %c255_i32_41 dim 1 : vector<8x256xf32>, i32 -> vector<8x256xf32>
    %c15_i32_42 = arith.constant 15 : i32
    %69 = tpu.dynamic_rotate %60 by %c15_i32_42 dim 1 : vector<8x256xf32>, i32 -> vector<8x256xf32>
    %70 = arith.select %17, %69, %68 : vector<8x256xi1>, vector<8x256xf32>
    %c16_i32_43 = arith.constant 16 : i32
    %71 = tpu.dynamic_rotate %70 by %c16_i32_43 dim 1 : vector<8x256xf32>, i32 -> vector<8x256xf32>
    %c240_i32_44 = arith.constant 240 : i32
    %72 = tpu.dynamic_rotate %70 by %c240_i32_44 dim 1 : vector<8x256xf32>, i32 -> vector<8x256xf32>
    %73 = tpu.concatenate %64, %63, %65, %66, %60, %67, %71, %70, %72 in 0 : vector<8x256xf32>, vector<8x256xf32>, vector<8x256xf32>, vector<8x256xf32>, vector<8x256xf32>, vector<8x256xf32>, vector<8x256xf32>, vector<8x256xf32>, vector<8x256xf32> -> vector<72x256xf32>
    %cst_45 = arith.constant dense<0.000000e+00> : vector<8x256xf32>
    %74 = tpu.matmul %4, %73, %cst_45 {dimension_numbers = #tpu.dot_dimension_numbers<[1], [0], [0], [1], [0, 0, 1, 1], [], []>, precision = #tpu.contract_precision<fp32>} : vector<8x72xf32>, vector<72x256xf32>, vector<8x256xf32> -> vector<8x256xf32>
    %75 = vector.broadcast %5 : vector<8x1xf32> to vector<8x256xf32>
    %76 = arith.addf %74, %75 : vector<8x256xf32>
    %cst_46 = arith.constant 0.000000e+00 : f32
    %77 = vector.broadcast %cst_46 : f32 to vector<8x256xf32>
    %78 = arith.maximumf %76, %77 : vector<8x256xf32>
    %cst_47 = arith.constant dense<0.000000e+00> : vector<8xf32>
    %79 = vector.multi_reduction <add>, %78, %cst_47 [1] : vector<8x256xf32> to vector<8xf32>
    %80 = vector.shape_cast %79 : vector<8xf32> to vector<8x1xf32>
    %81 = arith.mulf %78, %78 : vector<8x256xf32>
    %cst_48 = arith.constant dense<0.000000e+00> : vector<8xf32>
    %82 = vector.multi_reduction <add>, %81, %cst_48 [1] : vector<8x256xf32> to vector<8xf32>
    %83 = vector.shape_cast %82 : vector<8xf32> to vector<8x1xf32>
    %cst_49 = arith.constant 3.906250e-03 : f32
    %84 = vector.broadcast %cst_49 : f32 to vector<8x1xf32>
    %85 = arith.mulf %80, %84 : vector<8x1xf32>
    %cst_50 = arith.constant 3.906250e-03 : f32
    %86 = vector.broadcast %cst_50 : f32 to vector<8x1xf32>
    %87 = arith.mulf %83, %86 : vector<8x1xf32>
    %88 = arith.mulf %85, %85 : vector<8x1xf32>
    %89 = arith.subf %87, %88 : vector<8x1xf32>
    %cst_51 = arith.constant 0.000000e+00 : f32
    %90 = vector.broadcast %cst_51 : f32 to vector<8x1xf32>
    %91 = arith.maximumf %89, %90 : vector<8x1xf32>
    %cst_52 = arith.constant 9.99999974E-6 : f32
    %92 = vector.broadcast %cst_52 : f32 to vector<8x1xf32>
    %93 = arith.addf %91, %92 : vector<8x1xf32>
    %94 = math.rsqrt %93 : vector<8x1xf32>
    %95 = arith.mulf %6, %94 : vector<8x1xf32>
    %96 = vector.broadcast %85 : vector<8x1xf32> to vector<8x256xf32>
    %97 = arith.subf %78, %96 : vector<8x256xf32>
    %98 = vector.broadcast %95 : vector<8x1xf32> to vector<8x256xf32>
    %99 = arith.mulf %97, %98 : vector<8x256xf32>
    %100 = vector.broadcast %7 : vector<8x1xf32> to vector<8x256xf32>
    %101 = arith.addf %99, %100 : vector<8x256xf32>
    %c1 = arith.constant 1 : index
    %c0_53 = arith.constant 0 : index
    %c0_54 = arith.constant 0 : index
    %102 = vector.load %arg1[%c1, %c0_53, %c0_54] : memref<2x8x256xf32, #tpu.memory_space<vmem>>, vector<1x8x256xf32>
    %103 = vector.shape_cast %102 : vector<1x8x256xf32> to vector<8x256xf32>
    %c1_i32_55 = arith.constant 1 : i32
    %104 = tpu.dynamic_rotate %103 by %c1_i32_55 dim 1 : vector<8x256xf32>, i32 -> vector<8x256xf32>
    %c241_i32_56 = arith.constant 241 : i32
    %105 = tpu.dynamic_rotate %103 by %c241_i32_56 dim 1 : vector<8x256xf32>, i32 -> vector<8x256xf32>
    %106 = arith.select %13, %105, %104 : vector<8x256xi1>, vector<8x256xf32>
    %c16_i32_57 = arith.constant 16 : i32
    %107 = tpu.dynamic_rotate %106 by %c16_i32_57 dim 1 : vector<8x256xf32>, i32 -> vector<8x256xf32>
    %c240_i32_58 = arith.constant 240 : i32
    %108 = tpu.dynamic_rotate %106 by %c240_i32_58 dim 1 : vector<8x256xf32>, i32 -> vector<8x256xf32>
    %c16_i32_59 = arith.constant 16 : i32
    %109 = tpu.dynamic_rotate %103 by %c16_i32_59 dim 1 : vector<8x256xf32>, i32 -> vector<8x256xf32>
    %c240_i32_60 = arith.constant 240 : i32
    %110 = tpu.dynamic_rotate %103 by %c240_i32_60 dim 1 : vector<8x256xf32>, i32 -> vector<8x256xf32>
    %c255_i32_61 = arith.constant 255 : i32
    %111 = tpu.dynamic_rotate %103 by %c255_i32_61 dim 1 : vector<8x256xf32>, i32 -> vector<8x256xf32>
    %c15_i32_62 = arith.constant 15 : i32
    %112 = tpu.dynamic_rotate %103 by %c15_i32_62 dim 1 : vector<8x256xf32>, i32 -> vector<8x256xf32>
    %113 = arith.select %17, %112, %111 : vector<8x256xi1>, vector<8x256xf32>
    %c16_i32_63 = arith.constant 16 : i32
    %114 = tpu.dynamic_rotate %113 by %c16_i32_63 dim 1 : vector<8x256xf32>, i32 -> vector<8x256xf32>
    %c240_i32_64 = arith.constant 240 : i32
    %115 = tpu.dynamic_rotate %113 by %c240_i32_64 dim 1 : vector<8x256xf32>, i32 -> vector<8x256xf32>
    %116 = tpu.concatenate %107, %106, %108, %109, %103, %110, %114, %113, %115 in 0 : vector<8x256xf32>, vector<8x256xf32>, vector<8x256xf32>, vector<8x256xf32>, vector<8x256xf32>, vector<8x256xf32>, vector<8x256xf32>, vector<8x256xf32>, vector<8x256xf32> -> vector<72x256xf32>
    %cst_65 = arith.constant dense<0.000000e+00> : vector<8x256xf32>
    %117 = tpu.matmul %0, %116, %cst_65 {dimension_numbers = #tpu.dot_dimension_numbers<[1], [0], [0], [1], [0, 0, 1, 1], [], []>, precision = #tpu.contract_precision<fp32>} : vector<8x72xf32>, vector<72x256xf32>, vector<8x256xf32> -> vector<8x256xf32>
    %118 = vector.broadcast %1 : vector<8x1xf32> to vector<8x256xf32>
    %119 = arith.addf %117, %118 : vector<8x256xf32>
    %cst_66 = arith.constant 0.000000e+00 : f32
    %120 = vector.broadcast %cst_66 : f32 to vector<8x256xf32>
    %121 = arith.maximumf %119, %120 : vector<8x256xf32>
    %cst_67 = arith.constant dense<0.000000e+00> : vector<8xf32>
    %122 = vector.multi_reduction <add>, %121, %cst_67 [1] : vector<8x256xf32> to vector<8xf32>
    %123 = vector.shape_cast %122 : vector<8xf32> to vector<8x1xf32>
    %124 = arith.mulf %121, %121 : vector<8x256xf32>
    %cst_68 = arith.constant dense<0.000000e+00> : vector<8xf32>
    %125 = vector.multi_reduction <add>, %124, %cst_68 [1] : vector<8x256xf32> to vector<8xf32>
    %126 = vector.shape_cast %125 : vector<8xf32> to vector<8x1xf32>
    %cst_69 = arith.constant 3.906250e-03 : f32
    %127 = vector.broadcast %cst_69 : f32 to vector<8x1xf32>
    %128 = arith.mulf %123, %127 : vector<8x1xf32>
    %cst_70 = arith.constant 3.906250e-03 : f32
    %129 = vector.broadcast %cst_70 : f32 to vector<8x1xf32>
    %130 = arith.mulf %126, %129 : vector<8x1xf32>
    %131 = arith.mulf %128, %128 : vector<8x1xf32>
    %132 = arith.subf %130, %131 : vector<8x1xf32>
    %cst_71 = arith.constant 0.000000e+00 : f32
    %133 = vector.broadcast %cst_71 : f32 to vector<8x1xf32>
    %134 = arith.maximumf %132, %133 : vector<8x1xf32>
    %cst_72 = arith.constant 9.99999974E-6 : f32
    %135 = vector.broadcast %cst_72 : f32 to vector<8x1xf32>
    %136 = arith.addf %134, %135 : vector<8x1xf32>
    %137 = math.rsqrt %136 : vector<8x1xf32>
    %138 = arith.mulf %2, %137 : vector<8x1xf32>
    %139 = vector.broadcast %128 : vector<8x1xf32> to vector<8x256xf32>
    %140 = arith.subf %121, %139 : vector<8x256xf32>
    %141 = vector.broadcast %138 : vector<8x1xf32> to vector<8x256xf32>
    %142 = arith.mulf %140, %141 : vector<8x256xf32>
    %143 = vector.broadcast %3 : vector<8x1xf32> to vector<8x256xf32>
    %144 = arith.addf %142, %143 : vector<8x256xf32>
    %c1_i32_73 = arith.constant 1 : i32
    %145 = tpu.dynamic_rotate %144 by %c1_i32_73 dim 1 : vector<8x256xf32>, i32 -> vector<8x256xf32>
    %c241_i32_74 = arith.constant 241 : i32
    %146 = tpu.dynamic_rotate %144 by %c241_i32_74 dim 1 : vector<8x256xf32>, i32 -> vector<8x256xf32>
    %147 = arith.select %13, %146, %145 : vector<8x256xi1>, vector<8x256xf32>
    %c16_i32_75 = arith.constant 16 : i32
    %148 = tpu.dynamic_rotate %147 by %c16_i32_75 dim 1 : vector<8x256xf32>, i32 -> vector<8x256xf32>
    %c240_i32_76 = arith.constant 240 : i32
    %149 = tpu.dynamic_rotate %147 by %c240_i32_76 dim 1 : vector<8x256xf32>, i32 -> vector<8x256xf32>
    %c16_i32_77 = arith.constant 16 : i32
    %150 = tpu.dynamic_rotate %144 by %c16_i32_77 dim 1 : vector<8x256xf32>, i32 -> vector<8x256xf32>
    %c240_i32_78 = arith.constant 240 : i32
    %151 = tpu.dynamic_rotate %144 by %c240_i32_78 dim 1 : vector<8x256xf32>, i32 -> vector<8x256xf32>
    %c255_i32_79 = arith.constant 255 : i32
    %152 = tpu.dynamic_rotate %144 by %c255_i32_79 dim 1 : vector<8x256xf32>, i32 -> vector<8x256xf32>
    %c15_i32_80 = arith.constant 15 : i32
    %153 = tpu.dynamic_rotate %144 by %c15_i32_80 dim 1 : vector<8x256xf32>, i32 -> vector<8x256xf32>
    %154 = arith.select %17, %153, %152 : vector<8x256xi1>, vector<8x256xf32>
    %c16_i32_81 = arith.constant 16 : i32
    %155 = tpu.dynamic_rotate %154 by %c16_i32_81 dim 1 : vector<8x256xf32>, i32 -> vector<8x256xf32>
    %c240_i32_82 = arith.constant 240 : i32
    %156 = tpu.dynamic_rotate %154 by %c240_i32_82 dim 1 : vector<8x256xf32>, i32 -> vector<8x256xf32>
    %157 = tpu.concatenate %148, %147, %149, %150, %144, %151, %155, %154, %156 in 0 : vector<8x256xf32>, vector<8x256xf32>, vector<8x256xf32>, vector<8x256xf32>, vector<8x256xf32>, vector<8x256xf32>, vector<8x256xf32>, vector<8x256xf32>, vector<8x256xf32> -> vector<72x256xf32>
    %cst_83 = arith.constant dense<0.000000e+00> : vector<8x256xf32>
    %158 = tpu.matmul %4, %157, %cst_83 {dimension_numbers = #tpu.dot_dimension_numbers<[1], [0], [0], [1], [0, 0, 1, 1], [], []>, precision = #tpu.contract_precision<fp32>} : vector<8x72xf32>, vector<72x256xf32>, vector<8x256xf32> -> vector<8x256xf32>
    %159 = vector.broadcast %5 : vector<8x1xf32> to vector<8x256xf32>
    %160 = arith.addf %158, %159 : vector<8x256xf32>
    %cst_84 = arith.constant 0.000000e+00 : f32
    %161 = vector.broadcast %cst_84 : f32 to vector<8x256xf32>
    %162 = arith.maximumf %160, %161 : vector<8x256xf32>
    %cst_85 = arith.constant dense<0.000000e+00> : vector<8xf32>
    %163 = vector.multi_reduction <add>, %162, %cst_85 [1] : vector<8x256xf32> to vector<8xf32>
    %164 = vector.shape_cast %163 : vector<8xf32> to vector<8x1xf32>
    %165 = arith.mulf %162, %162 : vector<8x256xf32>
    %cst_86 = arith.constant dense<0.000000e+00> : vector<8xf32>
    %166 = vector.multi_reduction <add>, %165, %cst_86 [1] : vector<8x256xf32> to vector<8xf32>
    %167 = vector.shape_cast %166 : vector<8xf32> to vector<8x1xf32>
    %cst_87 = arith.constant 3.906250e-03 : f32
    %168 = vector.broadcast %cst_87 : f32 to vector<8x1xf32>
    %169 = arith.mulf %164, %168 : vector<8x1xf32>
    %cst_88 = arith.constant 3.906250e-03 : f32
    %170 = vector.broadcast %cst_88 : f32 to vector<8x1xf32>
    %171 = arith.mulf %167, %170 : vector<8x1xf32>
    %172 = arith.mulf %169, %169 : vector<8x1xf32>
    %173 = arith.subf %171, %172 : vector<8x1xf32>
    %cst_89 = arith.constant 0.000000e+00 : f32
    %174 = vector.broadcast %cst_89 : f32 to vector<8x1xf32>
    %175 = arith.maximumf %173, %174 : vector<8x1xf32>
    %cst_90 = arith.constant 9.99999974E-6 : f32
    %176 = vector.broadcast %cst_90 : f32 to vector<8x1xf32>
    %177 = arith.addf %175, %176 : vector<8x1xf32>
    %178 = math.rsqrt %177 : vector<8x1xf32>
    %179 = arith.mulf %6, %178 : vector<8x1xf32>
    %180 = vector.broadcast %169 : vector<8x1xf32> to vector<8x256xf32>
    %181 = arith.subf %162, %180 : vector<8x256xf32>
    %182 = vector.broadcast %179 : vector<8x1xf32> to vector<8x256xf32>
    %183 = arith.mulf %181, %182 : vector<8x256xf32>
    %184 = vector.broadcast %7 : vector<8x1xf32> to vector<8x256xf32>
    %185 = arith.addf %183, %184 : vector<8x256xf32>
    %186 = vector.shape_cast %101 : vector<8x256xf32> to vector<1x8x256xf32>
    %187 = vector.shape_cast %185 : vector<8x256xf32> to vector<1x8x256xf32>
    %188 = tpu.concatenate %186, %187 in 0 : vector<1x8x256xf32>, vector<1x8x256xf32> -> vector<2x8x256xf32>
    %c0_91 = arith.constant 0 : index
    %c0_92 = arith.constant 0 : index
    %c0_93 = arith.constant 0 : index
    %189 = vector.load %arg12[%c0_91, %c0_92, %c0_93] : memref<2x8x256xf32, #tpu.memory_space<vmem>>, vector<2x8x256xf32>
    tpu.vector_store %arg12[%c0_91, %c0_92, %c0_93], %188 {strides = array<i32>} : memref<2x8x256xf32, #tpu.memory_space<vmem>>, vector<2x8x256xf32>,
    return
  }
  func.func @transform_0(%arg0: i32) -> (i32, i32, i32) {
    %c0_i32 = arith.constant 0 : i32
    %c0_i32_0 = arith.constant 0 : i32
    %c0_i32_1 = arith.constant 0 : i32
    return %arg0, %c0_i32, %c0_i32_0 : i32, i32, i32
  }
  func.func @transform_1(%arg0: i32) -> (i32, i32) {
    %c0_i32 = arith.constant 0 : i32
    %c0_i32_0 = arith.constant 0 : i32
    %c0_i32_1 = arith.constant 0 : i32
    return %c0_i32, %c0_i32_0 : i32, i32
  }
  func.func @transform_2(%arg0: i32) -> (i32, i32) {
    %c0_i32 = arith.constant 0 : i32
    %c0_i32_0 = arith.constant 0 : i32
    %c0_i32_1 = arith.constant 0 : i32
    return %c0_i32, %c0_i32_0 : i32, i32
  }
  func.func @transform_3(%arg0: i32) -> (i32, i32) {
    %c0_i32 = arith.constant 0 : i32
    %c0_i32_0 = arith.constant 0 : i32
    %c0_i32_1 = arith.constant 0 : i32
    return %c0_i32, %c0_i32_0 : i32, i32
  }
  func.func @transform_4(%arg0: i32) -> (i32, i32) {
    %c0_i32 = arith.constant 0 : i32
    %c0_i32_0 = arith.constant 0 : i32
    %c0_i32_1 = arith.constant 0 : i32
    return %c0_i32, %c0_i32_0 : i32, i32
  }
  func.func @transform_5(%arg0: i32) -> (i32, i32) {
    %c0_i32 = arith.constant 0 : i32
    %c0_i32_0 = arith.constant 0 : i32
    %c0_i32_1 = arith.constant 0 : i32
    return %c0_i32, %c0_i32_0 : i32, i32
  }
  func.func @transform_6(%arg0: i32) -> (i32, i32) {
    %c0_i32 = arith.constant 0 : i32
    %c0_i32_0 = arith.constant 0 : i32
    %c0_i32_1 = arith.constant 0 : i32
    return %c0_i32, %c0_i32_0 : i32, i32
  }
  func.func @transform_7(%arg0: i32) -> (i32, i32) {
    %c0_i32 = arith.constant 0 : i32
    %c0_i32_0 = arith.constant 0 : i32
    %c0_i32_1 = arith.constant 0 : i32
    return %c0_i32, %c0_i32_0 : i32, i32
  }
  func.func @transform_8(%arg0: i32) -> (i32, i32) {
    %c0_i32 = arith.constant 0 : i32
    %c0_i32_0 = arith.constant 0 : i32
    %c0_i32_1 = arith.constant 0 : i32
    return %c0_i32, %c0_i32_0 : i32, i32
  }
  func.func @transform_9(%arg0: i32) -> (i32, i32) {
    %c0_i32 = arith.constant 0 : i32
    %c0_i32_0 = arith.constant 0 : i32
    %c0_i32_1 = arith.constant 0 : i32
    return %c0_i32, %c0_i32_0 : i32, i32
  }
  func.func @transform_10(%arg0: i32) -> (i32, i32) {
    %c0_i32 = arith.constant 0 : i32
    %c0_i32_0 = arith.constant 0 : i32
    %c0_i32_1 = arith.constant 0 : i32
    return %c0_i32, %c0_i32_0 : i32, i32
  }
  func.func @transform_11(%arg0: i32) -> (i32, i32, i32) {
    %c0_i32 = arith.constant 0 : i32
    %c0_i32_0 = arith.constant 0 : i32
    %c0_i32_1 = arith.constant 0 : i32
    return %arg0, %c0_i32, %c0_i32_0 : i32, i32, i32
  }
}

</mosaic_0001>

<llo_original>
// kernel: conv_block_ine.1
$region0: #{conv_block_ine.1}
  #allocation0 [shape = 'u32[]', space=smem, size = 0x4, offset = 0x4, fixed_abs, tag = 'smem constant byte address 0x4 - core index']
  #allocation1 [shape = 'u32[144,128]{1,0:T(1,128)}', space=vmem, size = 0x12000, scoped, tag = 'internal scratch']
  %s0 = inlined_call_operand.vmem [shape: f32[2,8,256], index: 0, kind: input, shape index: {}]
  %s1 = inlined_call_operand.vmem [shape: f32[1,256], index: 1, kind: input, shape index: {}]
  %s2 = inlined_call_operand.vmem [shape: f32[1,256], index: 2, kind: input, shape index: {}]
  %s3 = inlined_call_operand.vmem [shape: f32[8,72], index: 3, kind: input, shape index: {}]
  %s4 = inlined_call_operand.vmem [shape: f32[8,1], index: 4, kind: input, shape index: {}]
  %s5 = inlined_call_operand.vmem [shape: f32[8,1], index: 5, kind: input, shape index: {}]
  %s6 = inlined_call_operand.vmem [shape: f32[8,1], index: 6, kind: input, shape index: {}]
  %s7 = inlined_call_operand.vmem [shape: f32[8,72], index: 7, kind: input, shape index: {}]
  %s8 = inlined_call_operand.vmem [shape: f32[8,1], index: 8, kind: input, shape index: {}]
  %s9 = inlined_call_operand.vmem [shape: f32[8,1], index: 9, kind: input, shape index: {}]
  %s10 = inlined_call_operand.vmem [shape: f32[8,1], index: 10, kind: input, shape index: {}]
  %s11 = inlined_call_operand.vmem [shape: f32[2,8,256], index: 11, kind: output, shape index: {}]
  %s12 = sld [smem:[#allocation0]]
  $region54: #{conv_block_ine.1} parent=0
    _
  %s14 = ssub.s32 1, %s12
  %s15 = scalar_select 0, %s14, %s12
  // Predicated region
  $region2: #{conv_block_ine.1} parent=0 // pred_check
    _
  $region3: #{conv_block_ine.1} parent=0 // pred_check_branch
    %17 = sbr.rel (0) target = $region5
  $region4: #{conv_block_ine.1} parent=0 // pred_region
    _
  $region5: #{conv_block_ine.1} parent=0 // pred_fallthru
    _
  // Predicated region
  $region6: #{conv_block_ine.1} parent=0 // pred_check
    _
  $region7: #{conv_block_ine.1} parent=0 // pred_check_branch
    %19 = sbr.rel (0) target = $region9
  $region8: #{conv_block_ine.1} parent=0 // pred_region
    _
  $region9: #{conv_block_ine.1} parent=0 // pred_fallthru
    _
  // Predicated region
  $region10: #{conv_block_ine.1} parent=0 // pred_check
    _
  $region11: #{conv_block_ine.1} parent=0 // pred_check_branch
    %21 = sbr.rel (0) target = $region13
  $region12: #{conv_block_ine.1} parent=0 // pred_region
    _
  $region13: #{conv_block_ine.1} parent=0 // pred_fallthru
    _
  // Predicated region
  $region14: #{conv_block_ine.1} parent=0 // pred_check
    _
  $region15: #{conv_block_ine.1} parent=0 // pred_check_branch
    %23 = sbr.rel (0) target = $region17
  $region16: #{conv_block_ine.1} parent=0 // pred_region
    _
  $region17: #{conv_block_ine.1} parent=0 // pred_fallthru
    _
  // Predicated region
  $region18: #{conv_block_ine.1} parent=0 // pred_check
    _
  $region19: #{conv_block_ine.1} parent=0 // pred_check_branch
    %25 = sbr.rel (0) target = $region21
  $region20: #{conv_block_ine.1} parent=0 // pred_region
    _
  $region21: #{conv_block_ine.1} parent=0 // pred_fallthru
    _
  // Predicated region
  $region22: #{conv_block_ine.1} parent=0 // pred_check
    _
  $region23: #{conv_block_ine.1} parent=0 // pred_check_branch
    %27 = sbr.rel (0) target = $region25
  $region24: #{conv_block_ine.1} parent=0 // pred_region
    _
  $region25: #{conv_block_ine.1} parent=0 // pred_fallthru
    _
  // Predicated region
  $region26: #{conv_block_ine.1} parent=0 // pred_check
    _
  $region27: #{conv_block_ine.1} parent=0 // pred_check_branch
    %29 = sbr.rel (0) target = $region29
  $region28: #{conv_block_ine.1} parent=0 // pred_region
    _
  $region29: #{conv_block_ine.1} parent=0 // pred_fallthru
    _
  // Predicated region
  $region30: #{conv_block_ine.1} parent=0 // pred_check
    _
  $region31: #{conv_block_ine.1} parent=0 // pred_check_branch
    %31 = sbr.rel (0) target = $region33
  $region32: #{conv_block_ine.1} parent=0 // pred_region
    _
  $region33: #{conv_block_ine.1} parent=0 // pred_fallthru
    _
  // Predicated region
  $region34: #{conv_block_ine.1} parent=0 // pred_check
    _
  $region35: #{conv_block_ine.1} parent=0 // pred_check_branch
    %33 = sbr.rel (0) target = $region37
  $region36: #{conv_block_ine.1} parent=0 // pred_region
    _
  $region37: #{conv_block_ine.1} parent=0 // pred_fallthru
    _
  // Predicated region
  $region38: #{conv_block_ine.1} parent=0 // pred_check
    _
  $region39: #{conv_block_ine.1} parent=0 // pred_check_branch
    %35 = sbr.rel (0) target = $region41
  $region40: #{conv_block_ine.1} parent=0 // pred_region
    _
  $region41: #{conv_block_ine.1} parent=0 // pred_fallthru
    _
  // Predicated region
  $region42: #{conv_block_ine.1} parent=0 // pred_check
    _
  $region43: #{conv_block_ine.1} parent=0 // pred_check_branch
    %37 = sbr.rel (0) target = $region45
  $region44: #{conv_block_ine.1} parent=0 // pred_region
    _
  $region45: #{conv_block_ine.1} parent=0 // pred_fallthru
    _
  %v38 = vld [vmem:[%s3] sm:$0xff]
  %v39 = vld [vmem:[%s4] sm:$0xff]
  %v40 = vld [vmem:[%s5] sm:$0xff]
  %v41 = vld [vmem:[%s6] sm:$0xff]
  %v42 = vld [vmem:[%s7] sm:$0xff]
  %v43 = vld [vmem:[%s8] sm:$0xff]
  %v44 = vld [vmem:[%s9] sm:$0xff]
  %v45 = vld [vmem:[%s10] sm:$0xff]
  %v46 = vld [vmem:[%s1] sm:$0x3]
  %v47 = vld [vmem:[%s2] sm:$0x3]
  %v49 = vlaneseq
  %v50 = vshrl.u32 %v49, 7
  %v51 = vsub.s32 0, %v50
  %v52 = vrot.slane %v46, %v51
  %v53 = vlaneseq
  %v54 = vshrl.u32 %v53, 7
  %v55 = vsub.s32 1, %v54
  %v56 = vrot.slane %v46, %v55
  %vm59 = vcmp.ne.f32.partialorder %v52, 0.0
  %vm60 = vcmp.ne.f32.partialorder %v56, 0.0
  %v62 = vlaneseq
  %v63 = vshrl.u32 %v62, 7
  %v64 = vsub.s32 0, %v63
  %v65 = vrot.slane %v47, %v64
  %v66 = vlaneseq
  %v67 = vshrl.u32 %v66, 7
  %v68 = vsub.s32 1, %v67
  %v69 = vrot.slane %v47, %v68
  %vm72 = vcmp.ne.f32.partialorder %v65, 0.0
  %vm73 = vcmp.ne.f32.partialorder %v69, 0.0
  %v74 = vld [vmem:[%s0] sm:$0xff]
  %v75 = vld [vmem:[%s0 + $0x8] sm:$0xff]
  %76 = vrot.lane.b32.xlu0 %v74, 1
  %v77 = vpop.permute.xlu0 %76
  %78 = vrot.lane.b32.xlu0 %v75, 1
  %v79 = vpop.permute.xlu0 %78
  %v80 = vlaneseq
  %v81 = vand.u32 %v80, 127
  %vm82 = vcmp.lt.s32.totalorder %v81, 1
  %v83 = vsel %vm82, %v77, %v79
  %v84 = vsel %vm82, %v79, %v77
  %85 = vrot.lane.b32.xlu0 %v74, 113
  %v86 = vpop.permute.xlu0 %85
  %87 = vrot.lane.b32.xlu0 %v75, 113
  %v88 = vpop.permute.xlu0 %87
  %vm89 = vcmp.lt.s32.totalorder %v81, 113
  %v90 = vsel %vm89, %v86, %v88
  %v91 = vsel %vm89, %v88, %v86
  %v92 = vsel %vm59, %v90, %v84
  %v93 = vsel %vm60, %v91, %v83
  %94 = vrot.lane.b32.xlu0 %v92, 16
  %v95 = vpop.permute.xlu0 %94
  %96 = vrot.lane.b32.xlu0 %v93, 16
  %v97 = vpop.permute.xlu0 %96
  %vm98 = vcmp.lt.s32.totalorder %v81, 16
  %v99 = vsel %vm98, %v95, %v97
  %v100 = vsel %vm98, %v97, %v95
  %101 = vrot.lane.b32.xlu0 %v92, 112
  %v102 = vpop.permute.xlu0 %101
  %103 = vrot.lane.b32.xlu0 %v93, 112
  %v104 = vpop.permute.xlu0 %103
  %vm105 = vcmp.lt.s32.totalorder %v81, 112
  %v106 = vsel %vm105, %v102, %v104
  %v107 = vsel %vm105, %v104, %v102
  %108 = vrot.lane.b32.xlu0 %v74, 16
  %v109 = vpop.permute.xlu0 %108
  %110 = vrot.lane.b32.xlu0 %v75, 16
  %v111 = vpop.permute.xlu0 %110
  %v112 = vsel %vm98, %v109, %v111
  %v113 = vsel %vm98, %v111, %v109
  %114 = vrot.lane.b32.xlu0 %v74, 112
  %v115 = vpop.permute.xlu0 %114
  %116 = vrot.lane.b32.xlu0 %v75, 112
  %v117 = vpop.permute.xlu0 %116
  %v118 = vsel %vm105, %v115, %v117
  %v119 = vsel %vm105, %v117, %v115
  %120 = vrot.lane.b32.xlu0 %v74, 127
  %v121 = vpop.permute.xlu0 %120
  %122 = vrot.lane.b32.xlu0 %v75, 127
  %v123 = vpop.permute.xlu0 %122
  %vm124 = vcmp.lt.s32.totalorder %v81, 127
  %v125 = vsel %vm124, %v121, %v123
  %v126 = vsel %vm124, %v123, %v121
  %127 = vrot.lane.b32.xlu0 %v74, 15
  %v128 = vpop.permute.xlu0 %127
  %129 = vrot.lane.b32.xlu0 %v75, 15
  %v130 = vpop.permute.xlu0 %129
  %vm131 = vcmp.lt.s32.totalorder %v81, 15
  %v132 = vsel %vm131, %v128, %v130
  %v133 = vsel %vm131, %v130, %v128
  %v134 = vsel %vm72, %v133, %v125
  %v135 = vsel %vm73, %v132, %v126
  %136 = vrot.lane.b32.xlu0 %v134, 16
  %v137 = vpop.permute.xlu0 %136
  %138 = vrot.lane.b32.xlu0 %v135, 16
  %v139 = vpop.permute.xlu0 %138
  %v140 = vsel %vm98, %v137, %v139
  %v141 = vsel %vm98, %v139, %v137
  %142 = vrot.lane.b32.xlu0 %v134, 112
  %v143 = vpop.permute.xlu0 %142
  %144 = vrot.lane.b32.xlu0 %v135, 112
  %v145 = vpop.permute.xlu0 %144
  %v146 = vsel %vm105, %v143, %v145
  %v147 = vsel %vm105, %v145, %v143
  %149 = vset.pattern.permute.xlu0 0
  %150 = vperm.xlu0 %149, %v39
  %v151 = vpop.permute.xlu0 %150
  %vm153 = vcmask 588800
  %v155 = vsel %vm153, %v38, 0
  %157 = vmatprep.subr.mxu0 0.0
  %158 = vmatpush1.msra.mxu0 0.0
  %159 = vmatprep.subr.mxu0 0.0
  %160 = vmatpush1.msra.mxu0 0.0
  %161 = vmatprep.subr.mxu0 0.0
  %162 = vmatpush1.msra.mxu0 0.0
  %163 = vmatprep.subr.mxu0 0.0
  %164 = vmatpush1.msra.mxu0 0.0
  %165 = vmatprep.subr.mxu0 0.0
  %166 = vmatpush1.msra.mxu0 0.0
  %167 = vmatprep.subr.mxu0 0.0
  %168 = vmatpush1.msra.mxu0 0.0
  %169 = vmatprep.subr.mxu0 0.0
  %170 = vmatpush1.msra.mxu0 0.0
  %v171 = vand.u32 %v147, 4294901760
  %172 = vmatprep.subr.mxu0 %v171
  %v173 = vand.u32 %v146, 4294901760
  %174 = vmatpush1.msra.mxu0 %v173
  %v175 = vand.u32 %v135, 4294901760
  %176 = vmatprep.subr.mxu0 %v175
  %v177 = vand.u32 %v134, 4294901760
  %178 = vmatpush1.msra.mxu0 %v177
  %v179 = vand.u32 %v140, 4294901760
  %180 = vmatprep.subr.mxu0 %v179
  %v181 = vand.u32 %v141, 4294901760
  %182 = vmatpush1.msra.mxu0 %v181
  %v183 = vand.u32 %v119, 4294901760
  %184 = vmatprep.subr.mxu0 %v183
  %v185 = vand.u32 %v118, 4294901760
  %186 = vmatpush1.msra.mxu0 %v185
  %v187 = vand.u32 %v75, 4294901760
  %188 = vmatprep.subr.mxu0 %v187
  %v189 = vand.u32 %v74, 4294901760
  %190 = vmatpush1.msra.mxu0 %v189
  %v191 = vand.u32 %v112, 4294901760
  %192 = vmatprep.subr.mxu0 %v191
  %v193 = vand.u32 %v113, 4294901760
  %194 = vmatpush1.msra.mxu0 %v193
  %v195 = vand.u32 %v107, 4294901760
  %196 = vmatprep.subr.mxu0 %v195
  %v197 = vand.u32 %v106, 4294901760
  %198 = vmatpush1.msra.mxu0 %v197
  %v199 = vand.u32 %v93, 4294901760
  %200 = vmatprep.subr.mxu0 %v199
  %v201 = vand.u32 %v92, 4294901760
  %202 = vmatpush1.msra.mxu0 %v201
  %v203 = vand.u32 %v99, 4294901760
  %204 = vmatprep.subr.mxu0 %v203
  %v205 = vand.u32 %v100, 4294901760
  %206 = vmatpush1.msra.mxu0 %v205
  %207 = vmatprep.subr.mxu0 0.0
  %208 = vmatpush2.msra.mxu0 0.0
  %209 = vmatprep.subr.mxu0 0.0
  %210 = vmatpush2.msra.mxu0 0.0
  %211 = vmatprep.subr.mxu0 0.0
  %212 = vmatpush2.msra.mxu0 0.0
  %213 = vmatprep.subr.mxu0 0.0
  %214 = vmatpush2.msra.mxu0 0.0
  %215 = vmatprep.subr.mxu0 0.0
  %216 = vmatpush2.msra.mxu0 0.0
  %217 = vmatprep.subr.mxu0 0.0
  %218 = vmatpush2.msra.mxu0 0.0
  %219 = vmatprep.subr.mxu0 0.0
  %220 = vmatpush2.msra.mxu0 0.0
  %221 = vmatprep.subr.mxu0 0.0
  %222 = vmatpush2.msra.mxu0 0.0
  %223 = vmatprep.subr.mxu0 0.0
  %224 = vmatpush2.msra.mxu0 0.0
  %225 = vmatprep.subr.mxu0 0.0
  %226 = vmatpush2.msra.mxu0 0.0
  %227 = vmatprep.subr.mxu0 0.0
  %228 = vmatpush2.msra.mxu0 0.0
  %229 = vmatprep.subr.mxu0 0.0
  %230 = vmatpush2.msra.mxu0 0.0
  %231 = vmatprep.subr.mxu0 0.0
  %232 = vmatpush2.msra.mxu0 0.0
  %233 = vmatprep.subr.mxu0 0.0
  %234 = vmatpush2.msra.mxu0 0.0
  %235 = vmatprep.subr.mxu0 0.0
  %236 = vmatpush2.msra.mxu0 0.0
  %237 = vmatprep.subr.mxu0 0.0
  %238 = vmatpush2.msra.mxu0 0.0
  %239 = vmatprep.mubr.f32.mxu0 0.0
  %v240 = vand.u32 %v155, 4294901760
  %v241 = vsub.f32 %v155, %v240
  %v242 = vand.u32 %v241, 4294901760
  %v243 = vsub.f32 %v241, %v242
  %v244 = vand.u32 %v243, 4294901760
  %245 = vmatmul.mubr.f32.gmra.mxu0 %v244
  %v246 = vpop.f32.mrf.mxu0
  %v247 = vadd.f32 %v151, %v246
  %v248 = vpop.f32.mrf.mxu0
  %v249 = vadd.f32 %v151, %v248
  %250 = vdwg.mxu0
  %251 = vmatprep.subr.mxu0 0.0
  %252 = vmatpush1.msra.mxu0 0.0
  %253 = vmatprep.subr.mxu0 0.0
  %254 = vmatpush1.msra.mxu0 0.0
  %255 = vmatprep.subr.mxu0 0.0
  %256 = vmatpush1.msra.mxu0 0.0
  %257 = vmatprep.subr.mxu0 0.0
  %258 = vmatpush1.msra.mxu0 0.0
  %259 = vmatprep.subr.mxu0 0.0
  %260 = vmatpush1.msra.mxu0 0.0
  %261 = vmatprep.subr.mxu0 0.0
  %262 = vmatpush1.msra.mxu0 0.0
  %263 = vmatprep.subr.mxu0 0.0
  %264 = vmatpush1.msra.mxu0 0.0
  %v265 = vand.u32 %v147, 4294901760
  %v266 = vsub.f32 %v147, %v265
  %v267 = vand.u32 %v266, 4294901760
  %v268 = vsub.f32 %v266, %v267
  %v269 = vand.u32 %v268, 4294901760
  %270 = vmatprep.subr.mxu0 %v269
  %v271 = vand.u32 %v146, 4294901760
  %v272 = vsub.f32 %v146, %v271
  %v273 = vand.u32 %v272, 4294901760
  %v274 = vsub.f32 %v272, %v273
  %v275 = vand.u32 %v274, 4294901760
  %276 = vmatpush1.msra.mxu0 %v275
  %v277 = vand.u32 %v135, 4294901760
  %v278 = vsub.f32 %v135, %v277
  %v279 = vand.u32 %v278, 4294901760
  %v280 = vsub.f32 %v278, %v279
  %v281 = vand.u32 %v280, 4294901760
  %282 = vmatprep.subr.mxu0 %v281
  %v283 = vand.u32 %v134, 4294901760
  %v284 = vsub.f32 %v134, %v283
  %v285 = vand.u32 %v284, 4294901760
  %v286 = vsub.f32 %v284, %v285
  %v287 = vand.u32 %v286, 4294901760
  %288 = vmatpush1.msra.mxu0 %v287
  %v289 = vand.u32 %v140, 4294901760
  %v290 = vsub.f32 %v140, %v289
  %v291 = vand.u32 %v290, 4294901760
  %v292 = vsub.f32 %v290, %v291
  %v293 = vand.u32 %v292, 4294901760
  %294 = vmatprep.subr.mxu0 %v293
  %v295 = vand.u32 %v141, 4294901760
  %v296 = vsub.f32 %v141, %v295
  %v297 = vand.u32 %v296, 4294901760
  %v298 = vsub.f32 %v296, %v297
  %v299 = vand.u32 %v298, 4294901760
  %300 = vmatpush1.msra.mxu0 %v299
  %v301 = vand.u32 %v119, 4294901760
  %v302 = vsub.f32 %v119, %v301
  %v303 = vand.u32 %v302, 4294901760
  %v304 = vsub.f32 %v302, %v303
  %v305 = vand.u32 %v304, 4294901760
  %306 = vmatprep.subr.mxu0 %v305
  %v307 = vand.u32 %v118, 4294901760
  %v308 = vsub.f32 %v118, %v307
  %v309 = vand.u32 %v308, 4294901760
  %v310 = vsub.f32 %v308, %v309
  %v311 = vand.u32 %v310, 4294901760
  %312 = vmatpush1.msra.mxu0 %v311
  %v313 = vand.u32 %v75, 4294901760
  %v314 = vsub.f32 %v75, %v313
  %v315 = vand.u32 %v314, 4294901760
  %v316 = vsub.f32 %v314, %v315
  %v317 = vand.u32 %v316, 4294901760
  %318 = vmatprep.subr.mxu0 %v317
  %v319 = vand.u32 %v74, 4294901760
  %v320 = vsub.f32 %v74, %v319
  %v321 = vand.u32 %v320, 4294901760
  %v322 = vsub.f32 %v320, %v321
  %v323 = vand.u32 %v322, 4294901760
  %324 = vmatpush1.msra.mxu0 %v323
  %v325 = vand.u32 %v112, 4294901760
  %v326 = vsub.f32 %v112, %v325
  %v327 = vand.u32 %v326, 4294901760
  %v328 = vsub.f32 %v326, %v327
  %v329 = vand.u32 %v328, 4294901760
  %330 = vmatprep.subr.mxu0 %v329
  %v331 = vand.u32 %v113, 4294901760
  %v332 = vsub.f32 %v113, %v331
  %v333 = vand.u32 %v332, 4294901760
  %v334 = vsub.f32 %v332, %v333
  %v335 = vand.u32 %v334, 4294901760
  %336 = vmatpush1.msra.mxu0 %v335
  %v337 = vand.u32 %v107, 4294901760
  %v338 = vsub.f32 %v107, %v337
  %v339 = vand.u32 %v338, 4294901760
  %v340 = vsub.f32 %v338, %v339
  %v341 = vand.u32 %v340, 4294901760
  %342 = vmatprep.subr.mxu0 %v341
  %v343 = vand.u32 %v106, 4294901760
  %v344 = vsub.f32 %v106, %v343
  %v345 = vand.u32 %v344, 4294901760
  %v346 = vsub.f32 %v344, %v345
  %v347 = vand.u32 %v346, 4294901760
  %348 = vmatpush1.msra.mxu0 %v347
  %v349 = vand.u32 %v93, 4294901760
  %v350 = vsub.f32 %v93, %v349
  %v351 = vand.u32 %v350, 4294901760
  %v352 = vsub.f32 %v350, %v351
  %v353 = vand.u32 %v352, 4294901760
  %354 = vmatprep.subr.mxu0 %v353
  %v355 = vand.u32 %v92, 4294901760
  %v356 = vsub.f32 %v92, %v355
  %v357 = vand.u32 %v356, 4294901760
  %v358 = vsub.f32 %v356, %v357
  %v359 = vand.u32 %v358, 4294901760
  %360 = vmatpush1.msra.mxu0 %v359
  %v361 = vand.u32 %v99, 4294901760
  %v362 = vsub.f32 %v99, %v361
  %v363 = vand.u32 %v362, 4294901760
  %v364 = vsub.f32 %v362, %v363
  %v365 = vand.u32 %v364, 4294901760
  %366 = vmatprep.subr.mxu0 %v365
  %v367 = vand.u32 %v100, 4294901760
  %v368 = vsub.f32 %v100, %v367
  %v369 = vand.u32 %v368, 4294901760
  %v370 = vsub.f32 %v368, %v369
  %v371 = vand.u32 %v370, 4294901760
  %372 = vmatpush1.msra.mxu0 %v371
  %373 = vmatprep.subr.mxu0 0.0
  %374 = vmatpush2.msra.mxu0 0.0
  %375 = vmatprep.subr.mxu0 0.0
  %376 = vmatpush2.msra.mxu0 0.0
  %377 = vmatprep.subr.mxu0 0.0
  %378 = vmatpush2.msra.mxu0 0.0
  %379 = vmatprep.subr.mxu0 0.0
  %380 = vmatpush2.msra.mxu0 0.0
  %381 = vmatprep.subr.mxu0 0.0
  %382 = vmatpush2.msra.mxu0 0.0
  %383 = vmatprep.subr.mxu0 0.0
  %384 = vmatpush2.msra.mxu0 0.0
  %385 = vmatprep.subr.mxu0 0.0
  %386 = vmatpush2.msra.mxu0 0.0
  %387 = vmatprep.subr.mxu0 0.0
  %388 = vmatpush2.msra.mxu0 0.0
  %389 = vmatprep.subr.mxu0 0.0
  %390 = vmatpush2.msra.mxu0 0.0
  %391 = vmatprep.subr.mxu0 0.0
  %392 = vmatpush2.msra.mxu0 0.0
  %393 = vmatprep.subr.mxu0 0.0
  %394 = vmatpush2.msra.mxu0 0.0
  %395 = vmatprep.subr.mxu0 0.0
  %396 = vmatpush2.msra.mxu0 0.0
  %397 = vmatprep.subr.mxu0 0.0
  %398 = vmatpush2.msra.mxu0 0.0
  %399 = vmatprep.subr.mxu0 0.0
  %400 = vmatpush2.msra.mxu0 0.0
  %401 = vmatprep.subr.mxu0 0.0
  %402 = vmatpush2.msra.mxu0 0.0
  %403 = vmatprep.subr.mxu0 0.0
  %404 = vmatpush2.msra.mxu0 0.0
  %405 = vmatprep.mubr.f32.mxu0 0.0
  %v406 = vand.u32 %v155, 4294901760
  %407 = vmatmul.mubr.f32.gmra.mxu0 %v406
  %v408 = vpop.f32.mrf.mxu0
  %v409 = vadd.f32 %v247, %v408
  %v410 = vpop.f32.mrf.mxu0
  %v411 = vadd.f32 %v249, %v410
  %412 = vdwg.mxu0
  %413 = vmatprep.subr.mxu0 0.0
  %414 = vmatpush1.msra.mxu0 0.0
  %415 = vmatprep.subr.mxu0 0.0
  %416 = vmatpush1.msra.mxu0 0.0
  %417 = vmatprep.subr.mxu0 0.0
  %418 = vmatpush1.msra.mxu0 0.0
  %419 = vmatprep.subr.mxu0 0.0
  %420 = vmatpush1.msra.mxu0 0.0
  %421 = vmatprep.subr.mxu0 0.0
  %422 = vmatpush1.msra.mxu0 0.0
  %423 = vmatprep.subr.mxu0 0.0
  %424 = vmatpush1.msra.mxu0 0.0
  %425 = vmatprep.subr.mxu0 0.0
  %426 = vmatpush1.msra.mxu0 0.0
  %v427 = vand.u32 %v147, 4294901760
  %v428 = vsub.f32 %v147, %v427
  %429 = vmatprep.subr.mxu0 %v428
  %v430 = vand.u32 %v146, 4294901760
  %v431 = vsub.f32 %v146, %v430
  %432 = vmatpush1.msra.mxu0 %v431
  %v433 = vand.u32 %v135, 4294901760
  %v434 = vsub.f32 %v135, %v433
  %435 = vmatprep.subr.mxu0 %v434
  %v436 = vand.u32 %v134, 4294901760
  %v437 = vsub.f32 %v134, %v436
  %438 = vmatpush1.msra.mxu0 %v437
  %v439 = vand.u32 %v140, 4294901760
  %v440 = vsub.f32 %v140, %v439
  %441 = vmatprep.subr.mxu0 %v440
  %v442 = vand.u32 %v141, 4294901760
  %v443 = vsub.f32 %v141, %v442
  %444 = vmatpush1.msra.mxu0 %v443
  %v445 = vand.u32 %v119, 4294901760
  %v446 = vsub.f32 %v119, %v445
  %447 = vmatprep.subr.mxu0 %v446
  %v448 = vand.u32 %v118, 4294901760
  %v449 = vsub.f32 %v118, %v448
  %450 = vmatpush1.msra.mxu0 %v449
  %v451 = vand.u32 %v75, 4294901760
  %v452 = vsub.f32 %v75, %v451
  %453 = vmatprep.subr.mxu0 %v452
  %v454 = vand.u32 %v74, 4294901760
  %v455 = vsub.f32 %v74, %v454
  %456 = vmatpush1.msra.mxu0 %v455
  %v457 = vand.u32 %v112, 4294901760
  %v458 = vsub.f32 %v112, %v457
  %459 = vmatprep.subr.mxu0 %v458
  %v460 = vand.u32 %v113, 4294901760
  %v461 = vsub.f32 %v113, %v460
  %462 = vmatpush1.msra.mxu0 %v461
  %v463 = vand.u32 %v107, 4294901760
  %v464 = vsub.f32 %v107, %v463
  %465 = vmatprep.subr.mxu0 %v464
  %v466 = vand.u32 %v106, 4294901760
  %v467 = vsub.f32 %v106, %v466
  %468 = vmatpush1.msra.mxu0 %v467
  %v469 = vand.u32 %v93, 4294901760
  %v470 = vsub.f32 %v93, %v469
  %471 = vmatprep.subr.mxu0 %v470
  %v472 = vand.u32 %v92, 4294901760
  %v473 = vsub.f32 %v92, %v472
  %474 = vmatpush1.msra.mxu0 %v473
  %v475 = vand.u32 %v99, 4294901760
  %v476 = vsub.f32 %v99, %v475
  %477 = vmatprep.subr.mxu0 %v476
  %v478 = vand.u32 %v100, 4294901760
  %v479 = vsub.f32 %v100, %v478
  %480 = vmatpush1.msra.mxu0 %v479
  %481 = vmatprep.subr.mxu0 0.0
  %482 = vmatpush2.msra.mxu0 0.0
  %483 = vmatprep.subr.mxu0 0.0
  %484 = vmatpush2.msra.mxu0 0.0
  %485 = vmatprep.subr.mxu0 0.0
  %486 = vmatpush2.msra.mxu0 0.0
  %487 = vmatprep.subr.mxu0 0.0
  %488 = vmatpush2.msra.mxu0 0.0
  %489 = vmatprep.subr.mxu0 0.0
  %490 = vmatpush2.msra.mxu0 0.0
  %491 = vmatprep.subr.mxu0 0.0
  %492 = vmatpush2.msra.mxu0 0.0
  %493 = vmatprep.subr.mxu0 0.0
  %494 = vmatpush2.msra.mxu0 0.0
  %495 = vmatprep.subr.mxu0 0.0
  %496 = vmatpush2.msra.mxu0 0.0
  %497 = vmatprep.subr.mxu0 0.0
  %498 = vmatpush2.msra.mxu0 0.0
  %499 = vmatprep.subr.mxu0 0.0
  %500 = vmatpush2.msra.mxu0 0.0
  %501 = vmatprep.subr.mxu0 0.0
  %502 = vmatpush2.msra.mxu0 0.0
  %503 = vmatprep.subr.mxu0 0.0
  %504 = vmatpush2.msra.mxu0 0.0
  %505 = vmatprep.subr.mxu0 0.0
  %506 = vmatpush2.msra.mxu0 0.0
  %507 = vmatprep.subr.mxu0 0.0
  %508 = vmatpush2.msra.mxu0 0.0
  %509 = vmatprep.subr.mxu0 0.0
  %510 = vmatpush2.msra.mxu0 0.0
  %511 = vmatprep.subr.mxu0 0.0
  %512 = vmatpush2.msra.mxu0 0.0
  %513 = vmatprep.mubr.f32.mxu0 0.0
  %v514 = vand.u32 %v155, 4294901760
  %v515 = vsub.f32 %v155, %v514
  %516 = vmatmul.mubr.f32.gmra.mxu0 %v515
  %v517 = vpop.f32.mrf.mxu0
  %v518 = vadd.f32 %v409, %v517
  %v519 = vpop.f32.mrf.mxu0
  %v520 = vadd.f32 %v411, %v519
  %521 = vdwg.mxu0
  %522 = vmatprep.subr.mxu0 0.0
  %523 = vmatpush1.msra.mxu0 0.0
  %524 = vmatprep.subr.mxu0 0.0
  %525 = vmatpush1.msra.mxu0 0.0
  %526 = vmatprep.subr.mxu0 0.0
  %527 = vmatpush1.msra.mxu0 0.0
  %528 = vmatprep.subr.mxu0 0.0
  %529 = vmatpush1.msra.mxu0 0.0
  %530 = vmatprep.subr.mxu0 0.0
  %531 = vmatpush1.msra.mxu0 0.0
  %532 = vmatprep.subr.mxu0 0.0
  %533 = vmatpush1.msra.mxu0 0.0
  %534 = vmatprep.subr.mxu0 0.0
  %535 = vmatpush1.msra.mxu0 0.0
  %v536 = vand.u32 %v147, 4294901760
  %537 = vmatprep.subr.mxu0 %v536
  %v538 = vand.u32 %v146, 4294901760
  %539 = vmatpush1.msra.mxu0 %v538
  %v540 = vand.u32 %v135, 4294901760
  %541 = vmatprep.subr.mxu0 %v540
  %v542 = vand.u32 %v134, 4294901760
  %543 = vmatpush1.msra.mxu0 %v542
  %v544 = vand.u32 %v140, 4294901760
  %545 = vmatprep.subr.mxu0 %v544
  %v546 = vand.u32 %v141, 4294901760
  %547 = vmatpush1.msra.mxu0 %v546
  %v548 = vand.u32 %v119, 4294901760
  %549 = vmatprep.subr.mxu0 %v548
  %v550 = vand.u32 %v118, 4294901760
  %551 = vmatpush1.msra.mxu0 %v550
  %v552 = vand.u32 %v75, 4294901760
  %553 = vmatprep.subr.mxu0 %v552
  %v554 = vand.u32 %v74, 4294901760
  %555 = vmatpush1.msra.mxu0 %v554
  %v556 = vand.u32 %v112, 4294901760
  %557 = vmatprep.subr.mxu0 %v556
  %v558 = vand.u32 %v113, 4294901760
  %559 = vmatpush1.msra.mxu0 %v558
  %v560 = vand.u32 %v107, 4294901760
  %561 = vmatprep.subr.mxu0 %v560
  %v562 = vand.u32 %v106, 4294901760
  %563 = vmatpush1.msra.mxu0 %v562
  %v564 = vand.u32 %v93, 4294901760
  %565 = vmatprep.subr.mxu0 %v564
  %v566 = vand.u32 %v92, 4294901760
  %567 = vmatpush1.msra.mxu0 %v566
  %v568 = vand.u32 %v99, 4294901760
  %569 = vmatprep.subr.mxu0 %v568
  %v570 = vand.u32 %v100, 4294901760
  %571 = vmatpush1.msra.mxu0 %v570
  %572 = vmatprep.subr.mxu0 0.0
  %573 = vmatpush2.msra.mxu0 0.0
  %574 = vmatprep.subr.mxu0 0.0
  %575 = vmatpush2.msra.mxu0 0.0
  %576 = vmatprep.subr.mxu0 0.0
  %577 = vmatpush2.msra.mxu0 0.0
  %578 = vmatprep.subr.mxu0 0.0
  %579 = vmatpush2.msra.mxu0 0.0
  %580 = vmatprep.subr.mxu0 0.0
  %581 = vmatpush2.msra.mxu0 0.0
  %582 = vmatprep.subr.mxu0 0.0
  %583 = vmatpush2.msra.mxu0 0.0
  %584 = vmatprep.subr.mxu0 0.0
  %585 = vmatpush2.msra.mxu0 0.0
  %586 = vmatprep.subr.mxu0 0.0
  %587 = vmatpush2.msra.mxu0 0.0
  %588 = vmatprep.subr.mxu0 0.0
  %589 = vmatpush2.msra.mxu0 0.0
  %590 = vmatprep.subr.mxu0 0.0
  %591 = vmatpush2.msra.mxu0 0.0
  %592 = vmatprep.subr.mxu0 0.0
  %593 = vmatpush2.msra.mxu0 0.0
  %594 = vmatprep.subr.mxu0 0.0
  %595 = vmatpush2.msra.mxu0 0.0
  %596 = vmatprep.subr.mxu0 0.0
  %597 = vmatpush2.msra.mxu0 0.0
  %598 = vmatprep.subr.mxu0 0.0
  %599 = vmatpush2.msra.mxu0 0.0
  %600 = vmatprep.subr.mxu0 0.0
  %601 = vmatpush2.msra.mxu0 0.0
  %602 = vmatprep.subr.mxu0 0.0
  %603 = vmatpush2.msra.mxu0 0.0
  %604 = vmatprep.mubr.f32.mxu0 0.0
  %v605 = vand.u32 %v155, 4294901760
  %v606 = vsub.f32 %v155, %v605
  %v607 = vand.u32 %v606, 4294901760
  %608 = vmatmul.mubr.f32.gmra.mxu0 %v607
  %v609 = vpop.f32.mrf.mxu0
  %v610 = vadd.f32 %v518, %v609
  %v611 = vpop.f32.mrf.mxu0
  %v612 = vadd.f32 %v520, %v611
  %613 = vdwg.mxu0
  %614 = vmatprep.subr.mxu0 0.0
  %615 = vmatpush1.msra.mxu0 0.0
  %616 = vmatprep.subr.mxu0 0.0
  %617 = vmatpush1.msra.mxu0 0.0
  %618 = vmatprep.subr.mxu0 0.0
  %619 = vmatpush1.msra.mxu0 0.0
  %620 = vmatprep.subr.mxu0 0.0
  %621 = vmatpush1.msra.mxu0 0.0
  %622 = vmatprep.subr.mxu0 0.0
  %623 = vmatpush1.msra.mxu0 0.0
  %624 = vmatprep.subr.mxu0 0.0
  %625 = vmatpush1.msra.mxu0 0.0
  %626 = vmatprep.subr.mxu0 0.0
  %627 = vmatpush1.msra.mxu0 0.0
  %v628 = vand.u32 %v147, 4294901760
  %v629 = vsub.f32 %v147, %v628
  %v630 = vand.u32 %v629, 4294901760
  %631 = vmatprep.subr.mxu0 %v630
  %v632 = vand.u32 %v146, 4294901760
  %v633 = vsub.f32 %v146, %v632
  %v634 = vand.u32 %v633, 4294901760
  %635 = vmatpush1.msra.mxu0 %v634
  %v636 = vand.u32 %v135, 4294901760
  %v637 = vsub.f32 %v135, %v636
  %v638 = vand.u32 %v637, 4294901760
  %639 = vmatprep.subr.mxu0 %v638
  %v640 = vand.u32 %v134, 4294901760
  %v641 = vsub.f32 %v134, %v640
  %v642 = vand.u32 %v641, 4294901760
  %643 = vmatpush1.msra.mxu0 %v642
  %v644 = vand.u32 %v140, 4294901760
  %v645 = vsub.f32 %v140, %v644
  %v646 = vand.u32 %v645, 4294901760
  %647 = vmatprep.subr.mxu0 %v646
  %v648 = vand.u32 %v141, 4294901760
  %v649 = vsub.f32 %v141, %v648
  %v650 = vand.u32 %v649, 4294901760
  %651 = vmatpush1.msra.mxu0 %v650
  %v652 = vand.u32 %v119, 4294901760
  %v653 = vsub.f32 %v119, %v652
  %v654 = vand.u32 %v653, 4294901760
  %655 = vmatprep.subr.mxu0 %v654
  %v656 = vand.u32 %v118, 4294901760
  %v657 = vsub.f32 %v118, %v656
  %v658 = vand.u32 %v657, 4294901760
  %659 = vmatpush1.msra.mxu0 %v658
  %v660 = vand.u32 %v75, 4294901760
  %v661 = vsub.f32 %v75, %v660
  %v662 = vand.u32 %v661, 4294901760
  %663 = vmatprep.subr.mxu0 %v662
  %v664 = vand.u32 %v74, 4294901760
  %v665 = vsub.f32 %v74, %v664
  %v666 = vand.u32 %v665, 4294901760
  %667 = vmatpush1.msra.mxu0 %v666
  %v668 = vand.u32 %v112, 4294901760
  %v669 = vsub.f32 %v112, %v668
  %v670 = vand.u32 %v669, 4294901760
  %671 = vmatprep.subr.mxu0 %v670
  %v672 = vand.u32 %v113, 4294901760
  %v673 = vsub.f32 %v113, %v672
  %v674 = vand.u32 %v673, 4294901760
  %675 = vmatpush1.msra.mxu0 %v674
  %v676 = vand.u32 %v107, 4294901760
  %v677 = vsub.f32 %v107, %v676
  %v678 = vand.u32 %v677, 4294901760
  %679 = vmatprep.subr.mxu0 %v678
  %v680 = vand.u32 %v106, 4294901760
  %v681 = vsub.f32 %v106, %v680
  %v682 = vand.u32 %v681, 4294901760
  %683 = vmatpush1.msra.mxu0 %v682
  %v684 = vand.u32 %v93, 4294901760
  %v685 = vsub.f32 %v93, %v684
  %v686 = vand.u32 %v685, 4294901760
  %687 = vmatprep.subr.mxu0 %v686
  %v688 = vand.u32 %v92, 4294901760
  %v689 = vsub.f32 %v92, %v688
  %v690 = vand.u32 %v689, 4294901760
  %691 = vmatpush1.msra.mxu0 %v690
  %v692 = vand.u32 %v99, 4294901760
  %v693 = vsub.f32 %v99, %v692
  %v694 = vand.u32 %v693, 4294901760
  %695 = vmatprep.subr.mxu0 %v694
  %v696 = vand.u32 %v100, 4294901760
  %v697 = vsub.f32 %v100, %v696
  %v698 = vand.u32 %v697, 4294901760
  %699 = vmatpush1.msra.mxu0 %v698
  %700 = vmatprep.subr.mxu0 0.0
  %701 = vmatpush2.msra.mxu0 0.0
  %702 = vmatprep.subr.mxu0 0.0
  %703 = vmatpush2.msra.mxu0 0.0
  %704 = vmatprep.subr.mxu0 0.0
  %705 = vmatpush2.msra.mxu0 0.0
  %706 = vmatprep.subr.mxu0 0.0
  %707 = vmatpush2.msra.mxu0 0.0
  %708 = vmatprep.subr.mxu0 0.0
  %709 = vmatpush2.msra.mxu0 0.0
  %710 = vmatprep.subr.mxu0 0.0
  %711 = vmatpush2.msra.mxu0 0.0
  %712 = vmatprep.subr.mxu0 0.0
  %713 = vmatpush2.msra.mxu0 0.0
  %714 = vmatprep.subr.mxu0 0.0
  %715 = vmatpush2.msra.mxu0 0.0
  %716 = vmatprep.subr.mxu0 0.0
  %717 = vmatpush2.msra.mxu0 0.0
  %718 = vmatprep.subr.mxu0 0.0
  %719 = vmatpush2.msra.mxu0 0.0
  %720 = vmatprep.subr.mxu0 0.0
  %721 = vmatpush2.msra.mxu0 0.0
  %722 = vmatprep.subr.mxu0 0.0
  %723 = vmatpush2.msra.mxu0 0.0
  %724 = vmatprep.subr.mxu0 0.0
  %725 = vmatpush2.msra.mxu0 0.0
  %726 = vmatprep.subr.mxu0 0.0
  %727 = vmatpush2.msra.mxu0 0.0
  %728 = vmatprep.subr.mxu0 0.0
  %729 = vmatpush2.msra.mxu0 0.0
  %730 = vmatprep.subr.mxu0 0.0
  %731 = vmatpush2.msra.mxu0 0.0
  %732 = vmatprep.mubr.f32.mxu0 0.0
  %v733 = vand.u32 %v155, 4294901760
  %734 = vmatmul.mubr.f32.gmra.mxu0 %v733
  %v735 = vpop.f32.mrf.mxu0
  %v736 = vadd.f32 %v610, %v735
  %v737 = vpop.f32.mrf.mxu0
  %v738 = vadd.f32 %v612, %v737
  %739 = vdwg.mxu0
  %740 = vmatprep.subr.mxu0 0.0
  %741 = vmatpush1.msra.mxu0 0.0
  %742 = vmatprep.subr.mxu0 0.0
  %743 = vmatpush1.msra.mxu0 0.0
  %744 = vmatprep.subr.mxu0 0.0
  %745 = vmatpush1.msra.mxu0 0.0
  %746 = vmatprep.subr.mxu0 0.0
  %747 = vmatpush1.msra.mxu0 0.0
  %748 = vmatprep.subr.mxu0 0.0
  %749 = vmatpush1.msra.mxu0 0.0
  %750 = vmatprep.subr.mxu0 0.0
  %751 = vmatpush1.msra.mxu0 0.0
  %752 = vmatprep.subr.mxu0 0.0
  %753 = vmatpush1.msra.mxu0 0.0
  %v754 = vand.u32 %v147, 4294901760
  %755 = vmatprep.subr.mxu0 %v754
  %v756 = vand.u32 %v146, 4294901760
  %757 = vmatpush1.msra.mxu0 %v756
  %v758 = vand.u32 %v135, 4294901760
  %759 = vmatprep.subr.mxu0 %v758
  %v760 = vand.u32 %v134, 4294901760
  %761 = vmatpush1.msra.mxu0 %v760
  %v762 = vand.u32 %v140, 4294901760
  %763 = vmatprep.subr.mxu0 %v762
  %v764 = vand.u32 %v141, 4294901760
  %765 = vmatpush1.msra.mxu0 %v764
  %v766 = vand.u32 %v119, 4294901760
  %767 = vmatprep.subr.mxu0 %v766
  %v768 = vand.u32 %v118, 4294901760
  %769 = vmatpush1.msra.mxu0 %v768
  %v770 = vand.u32 %v75, 4294901760
  %771 = vmatprep.subr.mxu0 %v770
  %v772 = vand.u32 %v74, 4294901760
  %773 = vmatpush1.msra.mxu0 %v772
  %v774 = vand.u32 %v112, 4294901760
  %775 = vmatprep.subr.mxu0 %v774
  %v776 = vand.u32 %v113, 4294901760
  %777 = vmatpush1.msra.mxu0 %v776
  %v778 = vand.u32 %v107, 4294901760
  %779 = vmatprep.subr.mxu0 %v778
  %v780 = vand.u32 %v106, 4294901760
  %781 = vmatpush1.msra.mxu0 %v780
  %v782 = vand.u32 %v93, 4294901760
  %783 = vmatprep.subr.mxu0 %v782
  %v784 = vand.u32 %v92, 4294901760
  %785 = vmatpush1.msra.mxu0 %v784
  %v786 = vand.u32 %v99, 4294901760
  %787 = vmatprep.subr.mxu0 %v786
  %v788 = vand.u32 %v100, 4294901760
  %789 = vmatpush1.msra.mxu0 %v788
  %790 = vmatprep.subr.mxu0 0.0
  %791 = vmatpush2.msra.mxu0 0.0
  %792 = vmatprep.subr.mxu0 0.0
  %793 = vmatpush2.msra.mxu0 0.0
  %794 = vmatprep.subr.mxu0 0.0
  %795 = vmatpush2.msra.mxu0 0.0
  %796 = vmatprep.subr.mxu0 0.0
  %797 = vmatpush2.msra.mxu0 0.0
  %798 = vmatprep.subr.mxu0 0.0
  %799 = vmatpush2.msra.mxu0 0.0
  %800 = vmatprep.subr.mxu0 0.0
  %801 = vmatpush2.msra.mxu0 0.0
  %802 = vmatprep.subr.mxu0 0.0
  %803 = vmatpush2.msra.mxu0 0.0
  %804 = vmatprep.subr.mxu0 0.0
  %805 = vmatpush2.msra.mxu0 0.0
  %806 = vmatprep.subr.mxu0 0.0
  %807 = vmatpush2.msra.mxu0 0.0
  %808 = vmatprep.subr.mxu0 0.0
  %809 = vmatpush2.msra.mxu0 0.0
  %810 = vmatprep.subr.mxu0 0.0
  %811 = vmatpush2.msra.mxu0 0.0
  %812 = vmatprep.subr.mxu0 0.0
  %813 = vmatpush2.msra.mxu0 0.0
  %814 = vmatprep.subr.mxu0 0.0
  %815 = vmatpush2.msra.mxu0 0.0
  %816 = vmatprep.subr.mxu0 0.0
  %817 = vmatpush2.msra.mxu0 0.0
  %818 = vmatprep.subr.mxu0 0.0
  %819 = vmatpush2.msra.mxu0 0.0
  %820 = vmatprep.subr.mxu0 0.0
  %821 = vmatpush2.msra.mxu0 0.0
  %822 = vmatprep.mubr.f32.mxu0 0.0
  %v823 = vand.u32 %v155, 4294901760
  %824 = vmatmul.mubr.f32.gmra.mxu0 %v823
  %v825 = vpop.f32.mrf.mxu0
  %v826 = vadd.f32 %v736, %v825
  %v827 = vpop.f32.mrf.mxu0
  %v828 = vadd.f32 %v738, %v827
  %829 = vdwg.mxu0
  %v830 = vmax.f32 %v826, 0.0
  %v831 = vmax.f32 %v828, 0.0
  %v832 = vadd.f32 %v830, %v831
  %833 = vadd.xlane.f32.xlu0 %v832
  %v834 = vpop.xlane.xlu0 %833
  %v835 = vmul.f32 %v830, %v830
  %v836 = vmul.f32 %v831, %v831
  %v837 = vadd.f32 %v835, %v836
  %838 = vadd.xlane.f32.xlu0 %v837
  %v839 = vpop.xlane.xlu0 %838
  %v840 = vmul.f32 %v834, 0.00390625
  %v841 = vmul.f32 %v839, 0.00390625
  %v842 = vmul.f32 %v840, %v840
  %v843 = vsub.f32 %v841, %v842
  %v844 = vmax.f32 %v843, 0.0
  %v845 = vadd.f32 %v844, 1e-05
  %v846 = vrsqrt.pop %v845
  %v847 = vmul.f32 %v40, %v846
  %v848 = vsub.f32 %v830, %v840
  %v849 = vsub.f32 %v831, %v840
  %851 = vset.pattern.permute.xlu0 0
  %852 = vperm.xlu0 %851, %v847
  %v853 = vpop.permute.xlu0 %852
  %v855 = vmul.f32 %v848, %v853
  %v856 = vmul.f32 %v849, %v853
  %858 = vset.pattern.permute.xlu0 0
  %859 = vperm.xlu0 %858, %v41
  %v860 = vpop.permute.xlu0 %859
  %v862 = vadd.f32 %v855, %v860
  %v863 = vadd.f32 %v856, %v860
  %864 = vrot.lane.b32.xlu0 %v862, 1
  %v865 = vpop.permute.xlu0 %864
  %866 = vrot.lane.b32.xlu0 %v863, 1
  %v867 = vpop.permute.xlu0 %866
  %v868 = vsel %vm82, %v865, %v867
  %v869 = vsel %vm82, %v867, %v865
  %870 = vrot.lane.b32.xlu0 %v862, 113
  %v871 = vpop.permute.xlu0 %870
  %872 = vrot.lane.b32.xlu0 %v863, 113
  %v873 = vpop.permute.xlu0 %872
  %v874 = vsel %vm89, %v871, %v873
  %v875 = vsel %vm89, %v873, %v871
  %v876 = vsel %vm59, %v874, %v869
  %v877 = vsel %vm60, %v875, %v868
  %878 = vrot.lane.b32.xlu0 %v876, 16
  %v879 = vpop.permute.xlu0 %878
  %880 = vrot.lane.b32.xlu0 %v877, 16
  %v881 = vpop.permute.xlu0 %880
  %v882 = vsel %vm98, %v879, %v881
  %v883 = vsel %vm98, %v881, %v879
  %884 = vrot.lane.b32.xlu0 %v876, 112
  %v885 = vpop.permute.xlu0 %884
  %886 = vrot.lane.b32.xlu0 %v877, 112
  %v887 = vpop.permute.xlu0 %886
  %v888 = vsel %vm105, %v885, %v887
  %v889 = vsel %vm105, %v887, %v885
  %890 = vrot.lane.b32.xlu0 %v862, 16
  %v891 = vpop.permute.xlu0 %890
  %892 = vrot.lane.b32.xlu0 %v863, 16
  %v893 = vpop.permute.xlu0 %892
  %v894 = vsel %vm98, %v891, %v893
  %v895 = vsel %vm98, %v893, %v891
  %896 = vrot.lane.b32.xlu0 %v862, 112
  %v897 = vpop.permute.xlu0 %896
  %898 = vrot.lane.b32.xlu0 %v863, 112
  %v899 = vpop.permute.xlu0 %898
  %v900 = vsel %vm105, %v897, %v899
  %v901 = vsel %vm105, %v899, %v897
  %902 = vrot.lane.b32.xlu0 %v862, 127
  %v903 = vpop.permute.xlu0 %902
  %904 = vrot.lane.b32.xlu0 %v863, 127
  %v905 = vpop.permute.xlu0 %904
  %v906 = vsel %vm124, %v903, %v905
  %v907 = vsel %vm124, %v905, %v903
  %908 = vrot.lane.b32.xlu0 %v862, 15
  %v909 = vpop.permute.xlu0 %908
  %910 = vrot.lane.b32.xlu0 %v863, 15
  %v911 = vpop.permute.xlu0 %910
  %v912 = vsel %vm131, %v909, %v911
  %v913 = vsel %vm131, %v911, %v909
  %v914 = vsel %vm72, %v913, %v906
  %v915 = vsel %vm73, %v912, %v907
  %916 = vrot.lane.b32.xlu0 %v914, 16
  %v917 = vpop.permute.xlu0 %916
  %918 = vrot.lane.b32.xlu0 %v915, 16
  %v919 = vpop.permute.xlu0 %918
  %v920 = vsel %vm98, %v917, %v919
  %v921 = vsel %vm98, %v919, %v917
  %922 = vrot.lane.b32.xlu0 %v914, 112
  %v923 = vpop.permute.xlu0 %922
  %924 = vrot.lane.b32.xlu0 %v915, 112
  %v925 = vpop.permute.xlu0 %924
  %v926 = vsel %vm105, %v923, %v925
  %v927 = vsel %vm105, %v925, %v923
  %929 = vset.pattern.permute.xlu0 0
  %930 = vperm.xlu0 %929, %v43
  %v931 = vpop.permute.xlu0 %930
  %v934 = vsel %vm153, %v42, 0
  %936 = vmatprep.subr.mxu0 0.0
  %937 = vmatpush1.msra.mxu0 0.0
  %938 = vmatprep.subr.mxu0 0.0
  %939 = vmatpush1.msra.mxu0 0.0
  %940 = vmatprep.subr.mxu0 0.0
  %941 = vmatpush1.msra.mxu0 0.0
  %942 = vmatprep.subr.mxu0 0.0
  %943 = vmatpush1.msra.mxu0 0.0
  %944 = vmatprep.subr.mxu0 0.0
  %945 = vmatpush1.msra.mxu0 0.0
  %946 = vmatprep.subr.mxu0 0.0
  %947 = vmatpush1.msra.mxu0 0.0
  %948 = vmatprep.subr.mxu0 0.0
  %949 = vmatpush1.msra.mxu0 0.0
  %v950 = vand.u32 %v927, 4294901760
  %951 = vmatprep.subr.mxu0 %v950
  %v952 = vand.u32 %v926, 4294901760
  %953 = vmatpush1.msra.mxu0 %v952
  %v954 = vand.u32 %v915, 4294901760
  %955 = vmatprep.subr.mxu0 %v954
  %v956 = vand.u32 %v914, 4294901760
  %957 = vmatpush1.msra.mxu0 %v956
  %v958 = vand.u32 %v920, 4294901760
  %959 = vmatprep.subr.mxu0 %v958
  %v960 = vand.u32 %v921, 4294901760
  %961 = vmatpush1.msra.mxu0 %v960
  %v962 = vand.u32 %v901, 4294901760
  %963 = vmatprep.subr.mxu0 %v962
  %v964 = vand.u32 %v900, 4294901760
  %965 = vmatpush1.msra.mxu0 %v964
  %v966 = vand.u32 %v863, 4294901760
  %967 = vmatprep.subr.mxu0 %v966
  %v968 = vand.u32 %v862, 4294901760
  %969 = vmatpush1.msra.mxu0 %v968
  %v970 = vand.u32 %v894, 4294901760
  %971 = vmatprep.subr.mxu0 %v970
  %v972 = vand.u32 %v895, 4294901760
  %973 = vmatpush1.msra.mxu0 %v972
  %v974 = vand.u32 %v889, 4294901760
  %975 = vmatprep.subr.mxu0 %v974
  %v976 = vand.u32 %v888, 4294901760
  %977 = vmatpush1.msra.mxu0 %v976
  %v978 = vand.u32 %v877, 4294901760
  %979 = vmatprep.subr.mxu0 %v978
  %v980 = vand.u32 %v876, 4294901760
  %981 = vmatpush1.msra.mxu0 %v980
  %v982 = vand.u32 %v882, 4294901760
  %983 = vmatprep.subr.mxu0 %v982
  %v984 = vand.u32 %v883, 4294901760
  %985 = vmatpush1.msra.mxu0 %v984
  %986 = vmatprep.subr.mxu0 0.0
  %987 = vmatpush2.msra.mxu0 0.0
  %988 = vmatprep.subr.mxu0 0.0
  %989 = vmatpush2.msra.mxu0 0.0
  %990 = vmatprep.subr.mxu0 0.0
  %991 = vmatpush2.msra.mxu0 0.0
  %992 = vmatprep.subr.mxu0 0.0
  %993 = vmatpush2.msra.mxu0 0.0
  %994 = vmatprep.subr.mxu0 0.0
  %995 = vmatpush2.msra.mxu0 0.0
  %996 = vmatprep.subr.mxu0 0.0
  %997 = vmatpush2.msra.mxu0 0.0
  %998 = vmatprep.subr.mxu0 0.0
  %999 = vmatpush2.msra.mxu0 0.0
  %1000 = vmatprep.subr.mxu0 0.0
  %1001 = vmatpush2.msra.mxu0 0.0
  %1002 = vmatprep.subr.mxu0 0.0
  %1003 = vmatpush2.msra.mxu0 0.0
  %1004 = vmatprep.subr.mxu0 0.0
  %1005 = vmatpush2.msra.mxu0 0.0
  %1006 = vmatprep.subr.mxu0 0.0
  %1007 = vmatpush2.msra.mxu0 0.0
  %1008 = vmatprep.subr.mxu0 0.0
  %1009 = vmatpush2.msra.mxu0 0.0
  %1010 = vmatprep.subr.mxu0 0.0
  %1011 = vmatpush2.msra.mxu0 0.0
  %1012 = vmatprep.subr.mxu0 0.0
  %1013 = vmatpush2.msra.mxu0 0.0
  %1014 = vmatprep.subr.mxu0 0.0
  %1015 = vmatpush2.msra.mxu0 0.0
  %1016 = vmatprep.subr.mxu0 0.0
  %1017 = vmatpush2.msra.mxu0 0.0
  %1018 = vmatprep.mubr.f32.mxu0 0.0
  %v1019 = vand.u32 %v934, 4294901760
  %v1020 = vsub.f32 %v934, %v1019
  %v1021 = vand.u32 %v1020, 4294901760
  %v1022 = vsub.f32 %v1020, %v1021
  %v1023 = vand.u32 %v1022, 4294901760
  %1024 = vmatmul.mubr.f32.gmra.mxu0 %v1023
  %v1025 = vpop.f32.mrf.mxu0
  %v1026 = vadd.f32 %v931, %v1025
  %v1027 = vpop.f32.mrf.mxu0
  %v1028 = vadd.f32 %v931, %v1027
  %1029 = vdwg.mxu0
  %1030 = vmatprep.subr.mxu0 0.0
  %1031 = vmatpush1.msra.mxu0 0.0
  %1032 = vmatprep.subr.mxu0 0.0
  %1033 = vmatpush1.msra.mxu0 0.0
  %1034 = vmatprep.subr.mxu0 0.0
  %1035 = vmatpush1.msra.mxu0 0.0
  %1036 = vmatprep.subr.mxu0 0.0
  %1037 = vmatpush1.msra.mxu0 0.0
  %1038 = vmatprep.subr.mxu0 0.0
  %1039 = vmatpush1.msra.mxu0 0.0
  %1040 = vmatprep.subr.mxu0 0.0
  %1041 = vmatpush1.msra.mxu0 0.0
  %1042 = vmatprep.subr.mxu0 0.0
  %1043 = vmatpush1.msra.mxu0 0.0
  %v1044 = vand.u32 %v927, 4294901760
  %v1045 = vsub.f32 %v927, %v1044
  %v1046 = vand.u32 %v1045, 4294901760
  %v1047 = vsub.f32 %v1045, %v1046
  %v1048 = vand.u32 %v1047, 4294901760
  %1049 = vmatprep.subr.mxu0 %v1048
  %v1050 = vand.u32 %v926, 4294901760
  %v1051 = vsub.f32 %v926, %v1050
  %v1052 = vand.u32 %v1051, 4294901760
  %v1053 = vsub.f32 %v1051, %v1052
  %v1054 = vand.u32 %v1053, 4294901760
  %1055 = vmatpush1.msra.mxu0 %v1054
  %v1056 = vand.u32 %v915, 4294901760
  %v1057 = vsub.f32 %v915, %v1056
  %v1058 = vand.u32 %v1057, 4294901760
  %v1059 = vsub.f32 %v1057, %v1058
  %v1060 = vand.u32 %v1059, 4294901760
  %1061 = vmatprep.subr.mxu0 %v1060
  %v1062 = vand.u32 %v914, 4294901760
  %v1063 = vsub.f32 %v914, %v1062
  %v1064 = vand.u32 %v1063, 4294901760
  %v1065 = vsub.f32 %v1063, %v1064
  %v1066 = vand.u32 %v1065, 4294901760
  %1067 = vmatpush1.msra.mxu0 %v1066
  %v1068 = vand.u32 %v920, 4294901760
  %v1069 = vsub.f32 %v920, %v1068
  %v1070 = vand.u32 %v1069, 4294901760
  %v1071 = vsub.f32 %v1069, %v1070
  %v1072 = vand.u32 %v1071, 4294901760
  %1073 = vmatprep.subr.mxu0 %v1072
  %v1074 = vand.u32 %v921, 4294901760
  %v1075 = vsub.f32 %v921, %v1074
  %v1076 = vand.u32 %v1075, 4294901760
  %v1077 = vsub.f32 %v1075, %v1076
  %v1078 = vand.u32 %v1077, 4294901760
  %1079 = vmatpush1.msra.mxu0 %v1078
  %v1080 = vand.u32 %v901, 4294901760
  %v1081 = vsub.f32 %v901, %v1080
  %v1082 = vand.u32 %v1081, 4294901760
  %v1083 = vsub.f32 %v1081, %v1082
  %v1084 = vand.u32 %v1083, 4294901760
  %1085 = vmatprep.subr.mxu0 %v1084
  %v1086 = vand.u32 %v900, 4294901760
  %v1087 = vsub.f32 %v900, %v1086
  %v1088 = vand.u32 %v1087, 4294901760
  %v1089 = vsub.f32 %v1087, %v1088
  %v1090 = vand.u32 %v1089, 4294901760
  %1091 = vmatpush1.msra.mxu0 %v1090
  %v1092 = vand.u32 %v863, 4294901760
  %v1093 = vsub.f32 %v863, %v1092
  %v1094 = vand.u32 %v1093, 4294901760
  %v1095 = vsub.f32 %v1093, %v1094
  %v1096 = vand.u32 %v1095, 4294901760
  %1097 = vmatprep.subr.mxu0 %v1096
  %v1098 = vand.u32 %v862, 4294901760
  %v1099 = vsub.f32 %v862, %v1098
  %v1100 = vand.u32 %v1099, 4294901760
  %v1101 = vsub.f32 %v1099, %v1100
  %v1102 = vand.u32 %v1101, 4294901760
  %1103 = vmatpush1.msra.mxu0 %v1102
  %v1104 = vand.u32 %v894, 4294901760
  %v1105 = vsub.f32 %v894, %v1104
  %v1106 = vand.u32 %v1105, 4294901760
  %v1107 = vsub.f32 %v1105, %v1106
  %v1108 = vand.u32 %v1107, 4294901760
  %1109 = vmatprep.subr.mxu0 %v1108
  %v1110 = vand.u32 %v895, 4294901760
  %v1111 = vsub.f32 %v895, %v1110
  %v1112 = vand.u32 %v1111, 4294901760
  %v1113 = vsub.f32 %v1111, %v1112
  %v1114 = vand.u32 %v1113, 4294901760
  %1115 = vmatpush1.msra.mxu0 %v1114
  %v1116 = vand.u32 %v889, 4294901760
  %v1117 = vsub.f32 %v889, %v1116
  %v1118 = vand.u32 %v1117, 4294901760
  %v1119 = vsub.f32 %v1117, %v1118
  %v1120 = vand.u32 %v1119, 4294901760
  %1121 = vmatprep.subr.mxu0 %v1120
  %v1122 = vand.u32 %v888, 4294901760
  %v1123 = vsub.f32 %v888, %v1122
  %v1124 = vand.u32 %v1123, 4294901760
  %v1125 = vsub.f32 %v1123, %v1124
  %v1126 = vand.u32 %v1125, 4294901760
  %1127 = vmatpush1.msra.mxu0 %v1126
  %v1128 = vand.u32 %v877, 4294901760
  %v1129 = vsub.f32 %v877, %v1128
  %v1130 = vand.u32 %v1129, 4294901760
  %v1131 = vsub.f32 %v1129, %v1130
  %v1132 = vand.u32 %v1131, 4294901760
  %1133 = vmatprep.subr.mxu0 %v1132
  %v1134 = vand.u32 %v876, 4294901760
  %v1135 = vsub.f32 %v876, %v1134
  %v1136 = vand.u32 %v1135, 4294901760
  %v1137 = vsub.f32 %v1135, %v1136
  %v1138 = vand.u32 %v1137, 4294901760
  %1139 = vmatpush1.msra.mxu0 %v1138
  %v1140 = vand.u32 %v882, 4294901760
  %v1141 = vsub.f32 %v882, %v1140
  %v1142 = vand.u32 %v1141, 4294901760
  %v1143 = vsub.f32 %v1141, %v1142
  %v1144 = vand.u32 %v1143, 4294901760
  %1145 = vmatprep.subr.mxu0 %v1144
  %v1146 = vand.u32 %v883, 4294901760
  %v1147 = vsub.f32 %v883, %v1146
  %v1148 = vand.u32 %v1147, 4294901760
  %v1149 = vsub.f32 %v1147, %v1148
  %v1150 = vand.u32 %v1149, 4294901760
  %1151 = vmatpush1.msra.mxu0 %v1150
  %1152 = vmatprep.subr.mxu0 0.0
  %1153 = vmatpush2.msra.mxu0 0.0
  %1154 = vmatprep.subr.mxu0 0.0
  %1155 = vmatpush2.msra.mxu0 0.0
  %1156 = vmatprep.subr.mxu0 0.0
  %1157 = vmatpush2.msra.mxu0 0.0
  %1158 = vmatprep.subr.mxu0 0.0
  %1159 = vmatpush2.msra.mxu0 0.0
  %1160 = vmatprep.subr.mxu0 0.0
  %1161 = vmatpush2.msra.mxu0 0.0
  %1162 = vmatprep.subr.mxu0 0.0
  %1163 = vmatpush2.msra.mxu0 0.0
  %1164 = vmatprep.subr.mxu0 0.0
  %1165 = vmatpush2.msra.mxu0 0.0
  %1166 = vmatprep.subr.mxu0 0.0
  %1167 = vmatpush2.msra.mxu0 0.0
  %1168 = vmatprep.subr.mxu0 0.0
  %1169 = vmatpush2.msra.mxu0 0.0
  %1170 = vmatprep.subr.mxu0 0.0
  %1171 = vmatpush2.msra.mxu0 0.0
  %1172 = vmatprep.subr.mxu0 0.0
  %1173 = vmatpush2.msra.mxu0 0.0
  %1174 = vmatprep.subr.mxu0 0.0
  %1175 = vmatpush2.msra.mxu0 0.0
  %1176 = vmatprep.subr.mxu0 0.0
  %1177 = vmatpush2.msra.mxu0 0.0
  %1178 = vmatprep.subr.mxu0 0.0
  %1179 = vmatpush2.msra.mxu0 0.0
  %1180 = vmatprep.subr.mxu0 0.0
  %1181 = vmatpush2.msra.mxu0 0.0
  %1182 = vmatprep.subr.mxu0 0.0
  %1183 = vmatpush2.msra.mxu0 0.0
  %1184 = vmatprep.mubr.f32.mxu0 0.0
  %v1185 = vand.u32 %v934, 4294901760
  %1186 = vmatmul.mubr.f32.gmra.mxu0 %v1185
  %v1187 = vpop.f32.mrf.mxu0
  %v1188 = vadd.f32 %v1026, %v1187
  %v1189 = vpop.f32.mrf.mxu0
  %v1190 = vadd.f32 %v1028, %v1189
  %1191 = vdwg.mxu0
  %1192 = vmatprep.subr.mxu0 0.0
  %1193 = vmatpush1.msra.mxu0 0.0
  %1194 = vmatprep.subr.mxu0 0.0
  %1195 = vmatpush1.msra.mxu0 0.0
  %1196 = vmatprep.subr.mxu0 0.0
  %1197 = vmatpush1.msra.mxu0 0.0
  %1198 = vmatprep.subr.mxu0 0.0
  %1199 = vmatpush1.msra.mxu0 0.0
  %1200 = vmatprep.subr.mxu0 0.0
  %1201 = vmatpush1.msra.mxu0 0.0
  %1202 = vmatprep.subr.mxu0 0.0
  %1203 = vmatpush1.msra.mxu0 0.0
  %1204 = vmatprep.subr.mxu0 0.0
  %1205 = vmatpush1.msra.mxu0 0.0
  %v1206 = vand.u32 %v927, 4294901760
  %v1207 = vsub.f32 %v927, %v1206
  %1208 = vmatprep.subr.mxu0 %v1207
  %v1209 = vand.u32 %v926, 4294901760
  %v1210 = vsub.f32 %v926, %v1209
  %1211 = vmatpush1.msra.mxu0 %v1210
  %v1212 = vand.u32 %v915, 4294901760
  %v1213 = vsub.f32 %v915, %v1212
  %1214 = vmatprep.subr.mxu0 %v1213
  %v1215 = vand.u32 %v914, 4294901760
  %v1216 = vsub.f32 %v914, %v1215
  %1217 = vmatpush1.msra.mxu0 %v1216
  %v1218 = vand.u32 %v920, 4294901760
  %v1219 = vsub.f32 %v920, %v1218
  %1220 = vmatprep.subr.mxu0 %v1219
  %v1221 = vand.u32 %v921, 4294901760
  %v1222 = vsub.f32 %v921, %v1221
  %1223 = vmatpush1.msra.mxu0 %v1222
  %v1224 = vand.u32 %v901, 4294901760
  %v1225 = vsub.f32 %v901, %v1224
  %1226 = vmatprep.subr.mxu0 %v1225
  %v1227 = vand.u32 %v900, 4294901760
  %v1228 = vsub.f32 %v900, %v1227
  %1229 = vmatpush1.msra.mxu0 %v1228
  %v1230 = vand.u32 %v863, 4294901760
  %v1231 = vsub.f32 %v863, %v1230
  %1232 = vmatprep.subr.mxu0 %v1231
  %v1233 = vand.u32 %v862, 4294901760
  %v1234 = vsub.f32 %v862, %v1233
  %1235 = vmatpush1.msra.mxu0 %v1234
  %v1236 = vand.u32 %v894, 4294901760
  %v1237 = vsub.f32 %v894, %v1236
  %1238 = vmatprep.subr.mxu0 %v1237
  %v1239 = vand.u32 %v895, 4294901760
  %v1240 = vsub.f32 %v895, %v1239
  %1241 = vmatpush1.msra.mxu0 %v1240
  %v1242 = vand.u32 %v889, 4294901760
  %v1243 = vsub.f32 %v889, %v1242
  %1244 = vmatprep.subr.mxu0 %v1243
  %v1245 = vand.u32 %v888, 4294901760
  %v1246 = vsub.f32 %v888, %v1245
  %1247 = vmatpush1.msra.mxu0 %v1246
  %v1248 = vand.u32 %v877, 4294901760
  %v1249 = vsub.f32 %v877, %v1248
  %1250 = vmatprep.subr.mxu0 %v1249
  %v1251 = vand.u32 %v876, 4294901760
  %v1252 = vsub.f32 %v876, %v1251
  %1253 = vmatpush1.msra.mxu0 %v1252
  %v1254 = vand.u32 %v882, 4294901760
  %v1255 = vsub.f32 %v882, %v1254
  %1256 = vmatprep.subr.mxu0 %v1255
  %v1257 = vand.u32 %v883, 4294901760
  %v1258 = vsub.f32 %v883, %v1257
  %1259 = vmatpush1.msra.mxu0 %v1258
  %1260 = vmatprep.subr.mxu0 0.0
  %1261 = vmatpush2.msra.mxu0 0.0
  %1262 = vmatprep.subr.mxu0 0.0
  %1263 = vmatpush2.msra.mxu0 0.0
  %1264 = vmatprep.subr.mxu0 0.0
  %1265 = vmatpush2.msra.mxu0 0.0
  %1266 = vmatprep.subr.mxu0 0.0
  %1267 = vmatpush2.msra.mxu0 0.0
  %1268 = vmatprep.subr.mxu0 0.0
  %1269 = vmatpush2.msra.mxu0 0.0
  %1270 = vmatprep.subr.mxu0 0.0
  %1271 = vmatpush2.msra.mxu0 0.0
  %1272 = vmatprep.subr.mxu0 0.0
  %1273 = vmatpush2.msra.mxu0 0.0
  %1274 = vmatprep.subr.mxu0 0.0
  %1275 = vmatpush2.msra.mxu0 0.0
  %1276 = vmatprep.subr.mxu0 0.0
  %1277 = vmatpush2.msra.mxu0 0.0
  %1278 = vmatprep.subr.mxu0 0.0
  %1279 = vmatpush2.msra.mxu0 0.0
  %1280 = vmatprep.subr.mxu0 0.0
  %1281 = vmatpush2.msra.mxu0 0.0
  %1282 = vmatprep.subr.mxu0 0.0
  %1283 = vmatpush2.msra.mxu0 0.0
  %1284 = vmatprep.subr.mxu0 0.0
  %1285 = vmatpush2.msra.mxu0 0.0
  %1286 = vmatprep.subr.mxu0 0.0
  %1287 = vmatpush2.msra.mxu0 0.0
  %1288 = vmatprep.subr.mxu0 0.0
  %1289 = vmatpush2.msra.mxu0 0.0
  %1290 = vmatprep.subr.mxu0 0.0
  %1291 = vmatpush2.msra.mxu0 0.0
  %1292 = vmatprep.mubr.f32.mxu0 0.0
  %v1293 = vand.u32 %v934, 4294901760
  %v1294 = vsub.f32 %v934, %v1293
  %1295 = vmatmul.mubr.f32.gmra.mxu0 %v1294
  %v1296 = vpop.f32.mrf.mxu0
  %v1297 = vadd.f32 %v1188, %v1296
  %v1298 = vpop.f32.mrf.mxu0
  %v1299 = vadd.f32 %v1190, %v1298
  %1300 = vdwg.mxu0
  %1301 = vmatprep.subr.mxu0 0.0
  %1302 = vmatpush1.msra.mxu0 0.0
  %1303 = vmatprep.subr.mxu0 0.0
  %1304 = vmatpush1.msra.mxu0 0.0
  %1305 = vmatprep.subr.mxu0 0.0
  %1306 = vmatpush1.msra.mxu0 0.0
  %1307 = vmatprep.subr.mxu0 0.0
  %1308 = vmatpush1.msra.mxu0 0.0
  %1309 = vmatprep.subr.mxu0 0.0
  %1310 = vmatpush1.msra.mxu0 0.0
  %1311 = vmatprep.subr.mxu0 0.0
  %1312 = vmatpush1.msra.mxu0 0.0
  %1313 = vmatprep.subr.mxu0 0.0
  %1314 = vmatpush1.msra.mxu0 0.0
  %v1315 = vand.u32 %v927, 4294901760
  %1316 = vmatprep.subr.mxu0 %v1315
  %v1317 = vand.u32 %v926, 4294901760
  %1318 = vmatpush1.msra.mxu0 %v1317
  %v1319 = vand.u32 %v915, 4294901760
  %1320 = vmatprep.subr.mxu0 %v1319
  %v1321 = vand.u32 %v914, 4294901760
  %1322 = vmatpush1.msra.mxu0 %v1321
  %v1323 = vand.u32 %v920, 4294901760
  %1324 = vmatprep.subr.mxu0 %v1323
  %v1325 = vand.u32 %v921, 4294901760
  %1326 = vmatpush1.msra.mxu0 %v1325
  %v1327 = vand.u32 %v901, 4294901760
  %1328 = vmatprep.subr.mxu0 %v1327
  %v1329 = vand.u32 %v900, 4294901760
  %1330 = vmatpush1.msra.mxu0 %v1329
  %v1331 = vand.u32 %v863, 4294901760
  %1332 = vmatprep.subr.mxu0 %v1331
  %v1333 = vand.u32 %v862, 4294901760
  %1334 = vmatpush1.msra.mxu0 %v1333
  %v1335 = vand.u32 %v894, 4294901760
  %1336 = vmatprep.subr.mxu0 %v1335
  %v1337 = vand.u32 %v895, 4294901760
  %1338 = vmatpush1.msra.mxu0 %v1337
  %v1339 = vand.u32 %v889, 4294901760
  %1340 = vmatprep.subr.mxu0 %v1339
  %v1341 = vand.u32 %v888, 4294901760
  %1342 = vmatpush1.msra.mxu0 %v1341
  %v1343 = vand.u32 %v877, 4294901760
  %1344 = vmatprep.subr.mxu0 %v1343
  %v1345 = vand.u32 %v876, 4294901760
  %1346 = vmatpush1.msra.mxu0 %v1345
  %v1347 = vand.u32 %v882, 4294901760
  %1348 = vmatprep.subr.mxu0 %v1347
  %v1349 = vand.u32 %v883, 4294901760
  %1350 = vmatpush1.msra.mxu0 %v1349
  %1351 = vmatprep.subr.mxu0 0.0
  %1352 = vmatpush2.msra.mxu0 0.0
  %1353 = vmatprep.subr.mxu0 0.0
  %1354 = vmatpush2.msra.mxu0 0.0
  %1355 = vmatprep.subr.mxu0 0.0
  %1356 = vmatpush2.msra.mxu0 0.0
  %1357 = vmatprep.subr.mxu0 0.0
  %1358 = vmatpush2.msra.mxu0 0.0
  %1359 = vmatprep.subr.mxu0 0.0
  %1360 = vmatpush2.msra.mxu0 0.0
  %1361 = vmatprep.subr.mxu0 0.0
  %1362 = vmatpush2.msra.mxu0 0.0
  %1363 = vmatprep.subr.mxu0 0.0
  %1364 = vmatpush2.msra.mxu0 0.0
  %1365 = vmatprep.subr.mxu0 0.0
  %1366 = vmatpush2.msra.mxu0 0.0
  %1367 = vmatprep.subr.mxu0 0.0
  %1368 = vmatpush2.msra.mxu0 0.0
  %1369 = vmatprep.subr.mxu0 0.0
  %1370 = vmatpush2.msra.mxu0 0.0
  %1371 = vmatprep.subr.mxu0 0.0
  %1372 = vmatpush2.msra.mxu0 0.0
  %1373 = vmatprep.subr.mxu0 0.0
  %1374 = vmatpush2.msra.mxu0 0.0
  %1375 = vmatprep.subr.mxu0 0.0
  %1376 = vmatpush2.msra.mxu0 0.0
  %1377 = vmatprep.subr.mxu0 0.0
  %1378 = vmatpush2.msra.mxu0 0.0
  %1379 = vmatprep.subr.mxu0 0.0
  %1380 = vmatpush2.msra.mxu0 0.0
  %1381 = vmatprep.subr.mxu0 0.0
  %1382 = vmatpush2.msra.mxu0 0.0
  %1383 = vmatprep.mubr.f32.mxu0 0.0
  %v1384 = vand.u32 %v934, 4294901760
  %v1385 = vsub.f32 %v934, %v1384
  %v1386 = vand.u32 %v1385, 4294901760
  %1387 = vmatmul.mubr.f32.gmra.mxu0 %v1386
  %v1388 = vpop.f32.mrf.mxu0
  %v1389 = vadd.f32 %v1297, %v1388
  %v1390 = vpop.f32.mrf.mxu0
  %v1391 = vadd.f32 %v1299, %v1390
  %1392 = vdwg.mxu0
  %1393 = vmatprep.subr.mxu0 0.0
  %1394 = vmatpush1.msra.mxu0 0.0
  %1395 = vmatprep.subr.mxu0 0.0
  %1396 = vmatpush1.msra.mxu0 0.0
  %1397 = vmatprep.subr.mxu0 0.0
  %1398 = vmatpush1.msra.mxu0 0.0
  %1399 = vmatprep.subr.mxu0 0.0
  %1400 = vmatpush1.msra.mxu0 0.0
  %1401 = vmatprep.subr.mxu0 0.0
  %1402 = vmatpush1.msra.mxu0 0.0
  %1403 = vmatprep.subr.mxu0 0.0
  %1404 = vmatpush1.msra.mxu0 0.0
  %1405 = vmatprep.subr.mxu0 0.0
  %1406 = vmatpush1.msra.mxu0 0.0
  %v1407 = vand.u32 %v927, 4294901760
  %v1408 = vsub.f32 %v927, %v1407
  %v1409 = vand.u32 %v1408, 4294901760
  %1410 = vmatprep.subr.mxu0 %v1409
  %v1411 = vand.u32 %v926, 4294901760
  %v1412 = vsub.f32 %v926, %v1411
  %v1413 = vand.u32 %v1412, 4294901760
  %1414 = vmatpush1.msra.mxu0 %v1413
  %v1415 = vand.u32 %v915, 4294901760
  %v1416 = vsub.f32 %v915, %v1415
  %v1417 = vand.u32 %v1416, 4294901760
  %1418 = vmatprep.subr.mxu0 %v1417
  %v1419 = vand.u32 %v914, 4294901760
  %v1420 = vsub.f32 %v914, %v1419
  %v1421 = vand.u32 %v1420, 4294901760
  %1422 = vmatpush1.msra.mxu0 %v1421
  %v1423 = vand.u32 %v920, 4294901760
  %v1424 = vsub.f32 %v920, %v1423
  %v1425 = vand.u32 %v1424, 4294901760
  %1426 = vmatprep.subr.mxu0 %v1425
  %v1427 = vand.u32 %v921, 4294901760
  %v1428 = vsub.f32 %v921, %v1427
  %v1429 = vand.u32 %v1428, 4294901760
  %1430 = vmatpush1.msra.mxu0 %v1429
  %v1431 = vand.u32 %v901, 4294901760
  %v1432 = vsub.f32 %v901, %v1431
  %v1433 = vand.u32 %v1432, 4294901760
  %1434 = vmatprep.subr.mxu0 %v1433
  %v1435 = vand.u32 %v900, 4294901760
  %v1436 = vsub.f32 %v900, %v1435
  %v1437 = vand.u32 %v1436, 4294901760
  %1438 = vmatpush1.msra.mxu0 %v1437
  %v1439 = vand.u32 %v863, 4294901760
  %v1440 = vsub.f32 %v863, %v1439
  %v1441 = vand.u32 %v1440, 4294901760
  %1442 = vmatprep.subr.mxu0 %v1441
  %v1443 = vand.u32 %v862, 4294901760
  %v1444 = vsub.f32 %v862, %v1443
  %v1445 = vand.u32 %v1444, 4294901760
  %1446 = vmatpush1.msra.mxu0 %v1445
  %v1447 = vand.u32 %v894, 4294901760
  %v1448 = vsub.f32 %v894, %v1447
  %v1449 = vand.u32 %v1448, 4294901760
  %1450 = vmatprep.subr.mxu0 %v1449
  %v1451 = vand.u32 %v895, 4294901760
  %v1452 = vsub.f32 %v895, %v1451
  %v1453 = vand.u32 %v1452, 4294901760
  %1454 = vmatpush1.msra.mxu0 %v1453
  %v1455 = vand.u32 %v889, 4294901760
  %v1456 = vsub.f32 %v889, %v1455
  %v1457 = vand.u32 %v1456, 4294901760
  %1458 = vmatprep.subr.mxu0 %v1457
  %v1459 = vand.u32 %v888, 4294901760
  %v1460 = vsub.f32 %v888, %v1459
  %v1461 = vand.u32 %v1460, 4294901760
  %1462 = vmatpush1.msra.mxu0 %v1461
  %v1463 = vand.u32 %v877, 4294901760
  %v1464 = vsub.f32 %v877, %v1463
  %v1465 = vand.u32 %v1464, 4294901760
  %1466 = vmatprep.subr.mxu0 %v1465
  %v1467 = vand.u32 %v876, 4294901760
  %v1468 = vsub.f32 %v876, %v1467
  %v1469 = vand.u32 %v1468, 4294901760
  %1470 = vmatpush1.msra.mxu0 %v1469
  %v1471 = vand.u32 %v882, 4294901760
  %v1472 = vsub.f32 %v882, %v1471
  %v1473 = vand.u32 %v1472, 4294901760
  %1474 = vmatprep.subr.mxu0 %v1473
  %v1475 = vand.u32 %v883, 4294901760
  %v1476 = vsub.f32 %v883, %v1475
  %v1477 = vand.u32 %v1476, 4294901760
  %1478 = vmatpush1.msra.mxu0 %v1477
  %1479 = vmatprep.subr.mxu0 0.0
  %1480 = vmatpush2.msra.mxu0 0.0
  %1481 = vmatprep.subr.mxu0 0.0
  %1482 = vmatpush2.msra.mxu0 0.0
  %1483 = vmatprep.subr.mxu0 0.0
  %1484 = vmatpush2.msra.mxu0 0.0
  %1485 = vmatprep.subr.mxu0 0.0
  %1486 = vmatpush2.msra.mxu0 0.0
  %1487 = vmatprep.subr.mxu0 0.0
  %1488 = vmatpush2.msra.mxu0 0.0
  %1489 = vmatprep.subr.mxu0 0.0
  %1490 = vmatpush2.msra.mxu0 0.0
  %1491 = vmatprep.subr.mxu0 0.0
  %1492 = vmatpush2.msra.mxu0 0.0
  %1493 = vmatprep.subr.mxu0 0.0
  %1494 = vmatpush2.msra.mxu0 0.0
  %1495 = vmatprep.subr.mxu0 0.0
  %1496 = vmatpush2.msra.mxu0 0.0
  %1497 = vmatprep.subr.mxu0 0.0
  %1498 = vmatpush2.msra.mxu0 0.0
  %1499 = vmatprep.subr.mxu0 0.0
  %1500 = vmatpush2.msra.mxu0 0.0
  %1501 = vmatprep.subr.mxu0 0.0
  %1502 = vmatpush2.msra.mxu0 0.0
  %1503 = vmatprep.subr.mxu0 0.0
  %1504 = vmatpush2.msra.mxu0 0.0
  %1505 = vmatprep.subr.mxu0 0.0
  %1506 = vmatpush2.msra.mxu0 0.0
  %1507 = vmatprep.subr.mxu0 0.0
  %1508 = vmatpush2.msra.mxu0 0.0
  %1509 = vmatprep.subr.mxu0 0.0
  %1510 = vmatpush2.msra.mxu0 0.0
  %1511 = vmatprep.mubr.f32.mxu0 0.0
  %v1512 = vand.u32 %v934, 4294901760
  %1513 = vmatmul.mubr.f32.gmra.mxu0 %v1512
  %v1514 = vpop.f32.mrf.mxu0
  %v1515 = vadd.f32 %v1389, %v1514
  %v1516 = vpop.f32.mrf.mxu0
  %v1517 = vadd.f32 %v1391, %v1516
  %1518 = vdwg.mxu0
  %1519 = vmatprep.subr.mxu0 0.0
  %1520 = vmatpush1.msra.mxu0 0.0
  %1521 = vmatprep.subr.mxu0 0.0
  %1522 = vmatpush1.msra.mxu0 0.0
  %1523 = vmatprep.subr.mxu0 0.0
  %1524 = vmatpush1.msra.mxu0 0.0
  %1525 = vmatprep.subr.mxu0 0.0
  %1526 = vmatpush1.msra.mxu0 0.0
  %1527 = vmatprep.subr.mxu0 0.0
  %1528 = vmatpush1.msra.mxu0 0.0
  %1529 = vmatprep.subr.mxu0 0.0
  %1530 = vmatpush1.msra.mxu0 0.0
  %1531 = vmatprep.subr.mxu0 0.0
  %1532 = vmatpush1.msra.mxu0 0.0
  %v1533 = vand.u32 %v927, 4294901760
  %1534 = vmatprep.subr.mxu0 %v1533
  %v1535 = vand.u32 %v926, 4294901760
  %1536 = vmatpush1.msra.mxu0 %v1535
  %v1537 = vand.u32 %v915, 4294901760
  %1538 = vmatprep.subr.mxu0 %v1537
  %v1539 = vand.u32 %v914, 4294901760
  %1540 = vmatpush1.msra.mxu0 %v1539
  %v1541 = vand.u32 %v920, 4294901760
  %1542 = vmatprep.subr.mxu0 %v1541
  %v1543 = vand.u32 %v921, 4294901760
  %1544 = vmatpush1.msra.mxu0 %v1543
  %v1545 = vand.u32 %v901, 4294901760
  %1546 = vmatprep.subr.mxu0 %v1545
  %v1547 = vand.u32 %v900, 4294901760
  %1548 = vmatpush1.msra.mxu0 %v1547
  %v1549 = vand.u32 %v863, 4294901760
  %1550 = vmatprep.subr.mxu0 %v1549
  %v1551 = vand.u32 %v862, 4294901760
  %1552 = vmatpush1.msra.mxu0 %v1551
  %v1553 = vand.u32 %v894, 4294901760
  %1554 = vmatprep.subr.mxu0 %v1553
  %v1555 = vand.u32 %v895, 4294901760
  %1556 = vmatpush1.msra.mxu0 %v1555
  %v1557 = vand.u32 %v889, 4294901760
  %1558 = vmatprep.subr.mxu0 %v1557
  %v1559 = vand.u32 %v888, 4294901760
  %1560 = vmatpush1.msra.mxu0 %v1559
  %v1561 = vand.u32 %v877, 4294901760
  %1562 = vmatprep.subr.mxu0 %v1561
  %v1563 = vand.u32 %v876, 4294901760
  %1564 = vmatpush1.msra.mxu0 %v1563
  %v1565 = vand.u32 %v882, 4294901760
  %1566 = vmatprep.subr.mxu0 %v1565
  %v1567 = vand.u32 %v883, 4294901760
  %1568 = vmatpush1.msra.mxu0 %v1567
  %1569 = vmatprep.subr.mxu0 0.0
  %1570 = vmatpush2.msra.mxu0 0.0
  %1571 = vmatprep.subr.mxu0 0.0
  %1572 = vmatpush2.msra.mxu0 0.0
  %1573 = vmatprep.subr.mxu0 0.0
  %1574 = vmatpush2.msra.mxu0 0.0
  %1575 = vmatprep.subr.mxu0 0.0
  %1576 = vmatpush2.msra.mxu0 0.0
  %1577 = vmatprep.subr.mxu0 0.0
  %1578 = vmatpush2.msra.mxu0 0.0
  %1579 = vmatprep.subr.mxu0 0.0
  %1580 = vmatpush2.msra.mxu0 0.0
  %1581 = vmatprep.subr.mxu0 0.0
  %1582 = vmatpush2.msra.mxu0 0.0
  %1583 = vmatprep.subr.mxu0 0.0
  %1584 = vmatpush2.msra.mxu0 0.0
  %1585 = vmatprep.subr.mxu0 0.0
  %1586 = vmatpush2.msra.mxu0 0.0
  %1587 = vmatprep.subr.mxu0 0.0
  %1588 = vmatpush2.msra.mxu0 0.0
  %1589 = vmatprep.subr.mxu0 0.0
  %1590 = vmatpush2.msra.mxu0 0.0
  %1591 = vmatprep.subr.mxu0 0.0
  %1592 = vmatpush2.msra.mxu0 0.0
  %1593 = vmatprep.subr.mxu0 0.0
  %1594 = vmatpush2.msra.mxu0 0.0
  %1595 = vmatprep.subr.mxu0 0.0
  %1596 = vmatpush2.msra.mxu0 0.0
  %1597 = vmatprep.subr.mxu0 0.0
  %1598 = vmatpush2.msra.mxu0 0.0
  %1599 = vmatprep.subr.mxu0 0.0
  %1600 = vmatpush2.msra.mxu0 0.0
  %1601 = vmatprep.mubr.f32.mxu0 0.0
  %v1602 = vand.u32 %v934, 4294901760
  %1603 = vmatmul.mubr.f32.gmra.mxu0 %v1602
  %v1604 = vpop.f32.mrf.mxu0
  %v1605 = vadd.f32 %v1515, %v1604
  %v1606 = vpop.f32.mrf.mxu0
  %v1607 = vadd.f32 %v1517, %v1606
  %1608 = vdwg.mxu0
  %v1609 = vmax.f32 %v1605, 0.0
  %v1610 = vmax.f32 %v1607, 0.0
  %v1611 = vadd.f32 %v1609, %v1610
  %1612 = vadd.xlane.f32.xlu0 %v1611
  %v1613 = vpop.xlane.xlu0 %1612
  %v1614 = vmul.f32 %v1609, %v1609
  %v1615 = vmul.f32 %v1610, %v1610
  %v1616 = vadd.f32 %v1614, %v1615
  %1617 = vadd.xlane.f32.xlu0 %v1616
  %v1618 = vpop.xlane.xlu0 %1617
  %v1619 = vmul.f32 %v1613, 0.00390625
  %v1620 = vmul.f32 %v1618, 0.00390625
  %v1621 = vmul.f32 %v1619, %v1619
  %v1622 = vsub.f32 %v1620, %v1621
  %v1623 = vmax.f32 %v1622, 0.0
  %v1624 = vadd.f32 %v1623, 1e-05
  %v1625 = vrsqrt.pop %v1624
  %v1626 = vmul.f32 %v44, %v1625
  %v1627 = vsub.f32 %v1609, %v1619
  %v1628 = vsub.f32 %v1610, %v1619
  %1630 = vset.pattern.permute.xlu0 0
  %1631 = vperm.xlu0 %1630, %v1626
  %v1632 = vpop.permute.xlu0 %1631
  %v1634 = vmul.f32 %v1627, %v1632
  %v1635 = vmul.f32 %v1628, %v1632
  %1637 = vset.pattern.permute.xlu0 0
  %1638 = vperm.xlu0 %1637, %v45
  %v1639 = vpop.permute.xlu0 %1638
  %v1641 = vadd.f32 %v1634, %v1639
  %v1642 = vadd.f32 %v1635, %v1639
  %s1643 = scalar_lea.vmem %s0, 16
  %v1644 = vld [vmem:[%s1643] sm:$0xff]
  %v1645 = vld [vmem:[%s1643 + $0x8] sm:$0xff]
  %1646 = vrot.lane.b32.xlu0 %v1644, 1
  %v1647 = vpop.permute.xlu0 %1646
  %1648 = vrot.lane.b32.xlu0 %v1645, 1
  %v1649 = vpop.permute.xlu0 %1648
  %v1650 = vsel %vm82, %v1647, %v1649
  %v1651 = vsel %vm82, %v1649, %v1647
  %1652 = vrot.lane.b32.xlu0 %v1644, 113
  %v1653 = vpop.permute.xlu0 %1652
  %1654 = vrot.lane.b32.xlu0 %v1645, 113
  %v1655 = vpop.permute.xlu0 %1654
  %v1656 = vsel %vm89, %v1653, %v1655
  %v1657 = vsel %vm89, %v1655, %v1653
  %v1658 = vsel %vm59, %v1656, %v1651
  %v1659 = vsel %vm60, %v1657, %v1650
  %1660 = vrot.lane.b32.xlu0 %v1658, 16
  %v1661 = vpop.permute.xlu0 %1660
  %1662 = vrot.lane.b32.xlu0 %v1659, 16
  %v1663 = vpop.permute.xlu0 %1662
  %v1664 = vsel %vm98, %v1661, %v1663
  %v1665 = vsel %vm98, %v1663, %v1661
  %1666 = vrot.lane.b32.xlu0 %v1658, 112
  %v1667 = vpop.permute.xlu0 %1666
  %1668 = vrot.lane.b32.xlu0 %v1659, 112
  %v1669 = vpop.permute.xlu0 %1668
  %v1670 = vsel %vm105, %v1667, %v1669
  %v1671 = vsel %vm105, %v1669, %v1667
  %1672 = vrot.lane.b32.xlu0 %v1644, 16
  %v1673 = vpop.permute.xlu0 %1672
  %1674 = vrot.lane.b32.xlu0 %v1645, 16
  %v1675 = vpop.permute.xlu0 %1674
  %v1676 = vsel %vm98, %v1673, %v1675
  %v1677 = vsel %vm98, %v1675, %v1673
  %1678 = vrot.lane.b32.xlu0 %v1644, 112
  %v1679 = vpop.permute.xlu0 %1678
  %1680 = vrot.lane.b32.xlu0 %v1645, 112
  %v1681 = vpop.permute.xlu0 %1680
  %v1682 = vsel %vm105, %v1679, %v1681
  %v1683 = vsel %vm105, %v1681, %v1679
  %1684 = vrot.lane.b32.xlu0 %v1644, 127
  %v1685 = vpop.permute.xlu0 %1684
  %1686 = vrot.lane.b32.xlu0 %v1645, 127
  %v1687 = vpop.permute.xlu0 %1686
  %v1688 = vsel %vm124, %v1685, %v1687
  %v1689 = vsel %vm124, %v1687, %v1685
  %1690 = vrot.lane.b32.xlu0 %v1644, 15
  %v1691 = vpop.permute.xlu0 %1690
  %1692 = vrot.lane.b32.xlu0 %v1645, 15
  %v1693 = vpop.permute.xlu0 %1692
  %v1694 = vsel %vm131, %v1691, %v1693
  %v1695 = vsel %vm131, %v1693, %v1691
  %v1696 = vsel %vm72, %v1695, %v1688
  %v1697 = vsel %vm73, %v1694, %v1689
  %1698 = vrot.lane.b32.xlu0 %v1696, 16
  %v1699 = vpop.permute.xlu0 %1698
  %1700 = vrot.lane.b32.xlu0 %v1697, 16
  %v1701 = vpop.permute.xlu0 %1700
  %v1702 = vsel %vm98, %v1699, %v1701
  %v1703 = vsel %vm98, %v1701, %v1699
  %1704 = vrot.lane.b32.xlu0 %v1696, 112
  %v1705 = vpop.permute.xlu0 %1704
  %1706 = vrot.lane.b32.xlu0 %v1697, 112
  %v1707 = vpop.permute.xlu0 %1706
  %v1708 = vsel %vm105, %v1705, %v1707
  %v1709 = vsel %vm105, %v1707, %v1705
  %1710 = vmatprep.subr.mxu0 0.0
  %1711 = vmatpush1.msra.mxu0 0.0
  %1712 = vmatprep.subr.mxu0 0.0
  %1713 = vmatpush1.msra.mxu0 0.0
  %1714 = vmatprep.subr.mxu0 0.0
  %1715 = vmatpush1.msra.mxu0 0.0
  %1716 = vmatprep.subr.mxu0 0.0
  %1717 = vmatpush1.msra.mxu0 0.0
  %1718 = vmatprep.subr.mxu0 0.0
  %1719 = vmatpush1.msra.mxu0 0.0
  %1720 = vmatprep.subr.mxu0 0.0
  %1721 = vmatpush1.msra.mxu0 0.0
  %1722 = vmatprep.subr.mxu0 0.0
  %1723 = vmatpush1.msra.mxu0 0.0
  %v1724 = vand.u32 %v1709, 4294901760
  %1725 = vmatprep.subr.mxu0 %v1724
  %v1726 = vand.u32 %v1708, 4294901760
  %1727 = vmatpush1.msra.mxu0 %v1726
  %v1728 = vand.u32 %v1697, 4294901760
  %1729 = vmatprep.subr.mxu0 %v1728
  %v1730 = vand.u32 %v1696, 4294901760
  %1731 = vmatpush1.msra.mxu0 %v1730
  %v1732 = vand.u32 %v1702, 4294901760
  %1733 = vmatprep.subr.mxu0 %v1732
  %v1734 = vand.u32 %v1703, 4294901760
  %1735 = vmatpush1.msra.mxu0 %v1734
  %v1736 = vand.u32 %v1683, 4294901760
  %1737 = vmatprep.subr.mxu0 %v1736
  %v1738 = vand.u32 %v1682, 4294901760
  %1739 = vmatpush1.msra.mxu0 %v1738
  %v1740 = vand.u32 %v1645, 4294901760
  %1741 = vmatprep.subr.mxu0 %v1740
  %v1742 = vand.u32 %v1644, 4294901760
  %1743 = vmatpush1.msra.mxu0 %v1742
  %v1744 = vand.u32 %v1676, 4294901760
  %1745 = vmatprep.subr.mxu0 %v1744
  %v1746 = vand.u32 %v1677, 4294901760
  %1747 = vmatpush1.msra.mxu0 %v1746
  %v1748 = vand.u32 %v1671, 4294901760
  %1749 = vmatprep.subr.mxu0 %v1748
  %v1750 = vand.u32 %v1670, 4294901760
  %1751 = vmatpush1.msra.mxu0 %v1750
  %v1752 = vand.u32 %v1659, 4294901760
  %1753 = vmatprep.subr.mxu0 %v1752
  %v1754 = vand.u32 %v1658, 4294901760
  %1755 = vmatpush1.msra.mxu0 %v1754
  %v1756 = vand.u32 %v1664, 4294901760
  %1757 = vmatprep.subr.mxu0 %v1756
  %v1758 = vand.u32 %v1665, 4294901760
  %1759 = vmatpush1.msra.mxu0 %v1758
  %1760 = vmatprep.subr.mxu0 0.0
  %1761 = vmatpush2.msra.mxu0 0.0
  %1762 = vmatprep.subr.mxu0 0.0
  %1763 = vmatpush2.msra.mxu0 0.0
  %1764 = vmatprep.subr.mxu0 0.0
  %1765 = vmatpush2.msra.mxu0 0.0
  %1766 = vmatprep.subr.mxu0 0.0
  %1767 = vmatpush2.msra.mxu0 0.0
  %1768 = vmatprep.subr.mxu0 0.0
  %1769 = vmatpush2.msra.mxu0 0.0
  %1770 = vmatprep.subr.mxu0 0.0
  %1771 = vmatpush2.msra.mxu0 0.0
  %1772 = vmatprep.subr.mxu0 0.0
  %1773 = vmatpush2.msra.mxu0 0.0
  %1774 = vmatprep.subr.mxu0 0.0
  %1775 = vmatpush2.msra.mxu0 0.0
  %1776 = vmatprep.subr.mxu0 0.0
  %1777 = vmatpush2.msra.mxu0 0.0
  %1778 = vmatprep.subr.mxu0 0.0
  %1779 = vmatpush2.msra.mxu0 0.0
  %1780 = vmatprep.subr.mxu0 0.0
  %1781 = vmatpush2.msra.mxu0 0.0
  %1782 = vmatprep.subr.mxu0 0.0
  %1783 = vmatpush2.msra.mxu0 0.0
  %1784 = vmatprep.subr.mxu0 0.0
  %1785 = vmatpush2.msra.mxu0 0.0
  %1786 = vmatprep.subr.mxu0 0.0
  %1787 = vmatpush2.msra.mxu0 0.0
  %1788 = vmatprep.subr.mxu0 0.0
  %1789 = vmatpush2.msra.mxu0 0.0
  %1790 = vmatprep.subr.mxu0 0.0
  %1791 = vmatpush2.msra.mxu0 0.0
  %1792 = vmatprep.mubr.f32.mxu0 0.0
  %v1793 = vand.u32 %v155, 4294901760
  %v1794 = vsub.f32 %v155, %v1793
  %v1795 = vand.u32 %v1794, 4294901760
  %v1796 = vsub.f32 %v1794, %v1795
  %v1797 = vand.u32 %v1796, 4294901760
  %1798 = vmatmul.mubr.f32.gmra.mxu0 %v1797
  %v1799 = vpop.f32.mrf.mxu0
  %v1800 = vadd.f32 %v151, %v1799
  %v1801 = vpop.f32.mrf.mxu0
  %v1802 = vadd.f32 %v151, %v1801
  %1803 = vdwg.mxu0
  %1804 = vmatprep.subr.mxu0 0.0
  %1805 = vmatpush1.msra.mxu0 0.0
  %1806 = vmatprep.subr.mxu0 0.0
  %1807 = vmatpush1.msra.mxu0 0.0
  %1808 = vmatprep.subr.mxu0 0.0
  %1809 = vmatpush1.msra.mxu0 0.0
  %1810 = vmatprep.subr.mxu0 0.0
  %1811 = vmatpush1.msra.mxu0 0.0
  %1812 = vmatprep.subr.mxu0 0.0
  %1813 = vmatpush1.msra.mxu0 0.0
  %1814 = vmatprep.subr.mxu0 0.0
  %1815 = vmatpush1.msra.mxu0 0.0
  %1816 = vmatprep.subr.mxu0 0.0
  %1817 = vmatpush1.msra.mxu0 0.0
  %v1818 = vand.u32 %v1709, 4294901760
  %v1819 = vsub.f32 %v1709, %v1818
  %v1820 = vand.u32 %v1819, 4294901760
  %v1821 = vsub.f32 %v1819, %v1820
  %v1822 = vand.u32 %v1821, 4294901760
  %1823 = vmatprep.subr.mxu0 %v1822
  %v1824 = vand.u32 %v1708, 4294901760
  %v1825 = vsub.f32 %v1708, %v1824
  %v1826 = vand.u32 %v1825, 4294901760
  %v1827 = vsub.f32 %v1825, %v1826
  %v1828 = vand.u32 %v1827, 4294901760
  %1829 = vmatpush1.msra.mxu0 %v1828
  %v1830 = vand.u32 %v1697, 4294901760
  %v1831 = vsub.f32 %v1697, %v1830
  %v1832 = vand.u32 %v1831, 4294901760
  %v1833 = vsub.f32 %v1831, %v1832
  %v1834 = vand.u32 %v1833, 4294901760
  %1835 = vmatprep.subr.mxu0 %v1834
  %v1836 = vand.u32 %v1696, 4294901760
  %v1837 = vsub.f32 %v1696, %v1836
  %v1838 = vand.u32 %v1837, 4294901760
  %v1839 = vsub.f32 %v1837, %v1838
  %v1840 = vand.u32 %v1839, 4294901760
  %1841 = vmatpush1.msra.mxu0 %v1840
  %v1842 = vand.u32 %v1702, 4294901760
  %v1843 = vsub.f32 %v1702, %v1842
  %v1844 = vand.u32 %v1843, 4294901760
  %v1845 = vsub.f32 %v1843, %v1844
  %v1846 = vand.u32 %v1845, 4294901760
  %1847 = vmatprep.subr.mxu0 %v1846
  %v1848 = vand.u32 %v1703, 4294901760
  %v1849 = vsub.f32 %v1703, %v1848
  %v1850 = vand.u32 %v1849, 4294901760
  %v1851 = vsub.f32 %v1849, %v1850
  %v1852 = vand.u32 %v1851, 4294901760
  %1853 = vmatpush1.msra.mxu0 %v1852
  %v1854 = vand.u32 %v1683, 4294901760
  %v1855 = vsub.f32 %v1683, %v1854
  %v1856 = vand.u32 %v1855, 4294901760
  %v1857 = vsub.f32 %v1855, %v1856
  %v1858 = vand.u32 %v1857, 4294901760
  %1859 = vmatprep.subr.mxu0 %v1858
  %v1860 = vand.u32 %v1682, 4294901760
  %v1861 = vsub.f32 %v1682, %v1860
  %v1862 = vand.u32 %v1861, 4294901760
  %v1863 = vsub.f32 %v1861, %v1862
  %v1864 = vand.u32 %v1863, 4294901760
  %1865 = vmatpush1.msra.mxu0 %v1864
  %v1866 = vand.u32 %v1645, 4294901760
  %v1867 = vsub.f32 %v1645, %v1866
  %v1868 = vand.u32 %v1867, 4294901760
  %v1869 = vsub.f32 %v1867, %v1868
  %v1870 = vand.u32 %v1869, 4294901760
  %1871 = vmatprep.subr.mxu0 %v1870
  %v1872 = vand.u32 %v1644, 4294901760
  %v1873 = vsub.f32 %v1644, %v1872
  %v1874 = vand.u32 %v1873, 4294901760
  %v1875 = vsub.f32 %v1873, %v1874
  %v1876 = vand.u32 %v1875, 4294901760
  %1877 = vmatpush1.msra.mxu0 %v1876
  %v1878 = vand.u32 %v1676, 4294901760
  %v1879 = vsub.f32 %v1676, %v1878
  %v1880 = vand.u32 %v1879, 4294901760
  %v1881 = vsub.f32 %v1879, %v1880
  %v1882 = vand.u32 %v1881, 4294901760
  %1883 = vmatprep.subr.mxu0 %v1882
  %v1884 = vand.u32 %v1677, 4294901760
  %v1885 = vsub.f32 %v1677, %v1884
  %v1886 = vand.u32 %v1885, 4294901760
  %v1887 = vsub.f32 %v1885, %v1886
  %v1888 = vand.u32 %v1887, 4294901760
  %1889 = vmatpush1.msra.mxu0 %v1888
  %v1890 = vand.u32 %v1671, 4294901760
  %v1891 = vsub.f32 %v1671, %v1890
  %v1892 = vand.u32 %v1891, 4294901760
  %v1893 = vsub.f32 %v1891, %v1892
  %v1894 = vand.u32 %v1893, 4294901760
  %1895 = vmatprep.subr.mxu0 %v1894
  %v1896 = vand.u32 %v1670, 4294901760
  %v1897 = vsub.f32 %v1670, %v1896
  %v1898 = vand.u32 %v1897, 4294901760
  %v1899 = vsub.f32 %v1897, %v1898
  %v1900 = vand.u32 %v1899, 4294901760
  %1901 = vmatpush1.msra.mxu0 %v1900
  %v1902 = vand.u32 %v1659, 4294901760
  %v1903 = vsub.f32 %v1659, %v1902
  %v1904 = vand.u32 %v1903, 4294901760
  %v1905 = vsub.f32 %v1903, %v1904
  %v1906 = vand.u32 %v1905, 4294901760
  %1907 = vmatprep.subr.mxu0 %v1906
  %v1908 = vand.u32 %v1658, 4294901760
  %v1909 = vsub.f32 %v1658, %v1908
  %v1910 = vand.u32 %v1909, 4294901760
  %v1911 = vsub.f32 %v1909, %v1910
  %v1912 = vand.u32 %v1911, 4294901760
  %1913 = vmatpush1.msra.mxu0 %v1912
  %v1914 = vand.u32 %v1664, 4294901760
  %v1915 = vsub.f32 %v1664, %v1914
  %v1916 = vand.u32 %v1915, 4294901760
  %v1917 = vsub.f32 %v1915, %v1916
  %v1918 = vand.u32 %v1917, 4294901760
  %1919 = vmatprep.subr.mxu0 %v1918
  %v1920 = vand.u32 %v1665, 4294901760
  %v1921 = vsub.f32 %v1665, %v1920
  %v1922 = vand.u32 %v1921, 4294901760
  %v1923 = vsub.f32 %v1921, %v1922
  %v1924 = vand.u32 %v1923, 4294901760
  %1925 = vmatpush1.msra.mxu0 %v1924
  %1926 = vmatprep.subr.mxu0 0.0
  %1927 = vmatpush2.msra.mxu0 0.0
  %1928 = vmatprep.subr.mxu0 0.0
  %1929 = vmatpush2.msra.mxu0 0.0
  %1930 = vmatprep.subr.mxu0 0.0
  %1931 = vmatpush2.msra.mxu0 0.0
  %1932 = vmatprep.subr.mxu0 0.0
  %1933 = vmatpush2.msra.mxu0 0.0
  %1934 = vmatprep.subr.mxu0 0.0
  %1935 = vmatpush2.msra.mxu0 0.0
  %1936 = vmatprep.subr.mxu0 0.0
  %1937 = vmatpush2.msra.mxu0 0.0
  %1938 = vmatprep.subr.mxu0 0.0
  %1939 = vmatpush2.msra.mxu0 0.0
  %1940 = vmatprep.subr.mxu0 0.0
  %1941 = vmatpush2.msra.mxu0 0.0
  %1942 = vmatprep.subr.mxu0 0.0
  %1943 = vmatpush2.msra.mxu0 0.0
  %1944 = vmatprep.subr.mxu0 0.0
  %1945 = vmatpush2.msra.mxu0 0.0
  %1946 = vmatprep.subr.mxu0 0.0
  %1947 = vmatpush2.msra.mxu0 0.0
  %1948 = vmatprep.subr.mxu0 0.0
  %1949 = vmatpush2.msra.mxu0 0.0
  %1950 = vmatprep.subr.mxu0 0.0
  %1951 = vmatpush2.msra.mxu0 0.0
  %1952 = vmatprep.subr.mxu0 0.0
  %1953 = vmatpush2.msra.mxu0 0.0
  %1954 = vmatprep.subr.mxu0 0.0
  %1955 = vmatpush2.msra.mxu0 0.0
  %1956 = vmatprep.subr.mxu0 0.0
  %1957 = vmatpush2.msra.mxu0 0.0
  %1958 = vmatprep.mubr.f32.mxu0 0.0
  %v1959 = vand.u32 %v155, 4294901760
  %1960 = vmatmul.mubr.f32.gmra.mxu0 %v1959
  %v1961 = vpop.f32.mrf.mxu0
  %v1962 = vadd.f32 %v1800, %v1961
  %v1963 = vpop.f32.mrf.mxu0
  %v1964 = vadd.f32 %v1802, %v1963
  %1965 = vdwg.mxu0
  %1966 = vmatprep.subr.mxu0 0.0
  %1967 = vmatpush1.msra.mxu0 0.0
  %1968 = vmatprep.subr.mxu0 0.0
  %1969 = vmatpush1.msra.mxu0 0.0
  %1970 = vmatprep.subr.mxu0 0.0
  %1971 = vmatpush1.msra.mxu0 0.0
  %1972 = vmatprep.subr.mxu0 0.0
  %1973 = vmatpush1.msra.mxu0 0.0
  %1974 = vmatprep.subr.mxu0 0.0
  %1975 = vmatpush1.msra.mxu0 0.0
  %1976 = vmatprep.subr.mxu0 0.0
  %1977 = vmatpush1.msra.mxu0 0.0
  %1978 = vmatprep.subr.mxu0 0.0
  %1979 = vmatpush1.msra.mxu0 0.0
  %v1980 = vand.u32 %v1709, 4294901760
  %v1981 = vsub.f32 %v1709, %v1980
  %1982 = vmatprep.subr.mxu0 %v1981
  %v1983 = vand.u32 %v1708, 4294901760
  %v1984 = vsub.f32 %v1708, %v1983
  %1985 = vmatpush1.msra.mxu0 %v1984
  %v1986 = vand.u32 %v1697, 4294901760
  %v1987 = vsub.f32 %v1697, %v1986
  %1988 = vmatprep.subr.mxu0 %v1987
  %v1989 = vand.u32 %v1696, 4294901760
  %v1990 = vsub.f32 %v1696, %v1989
  %1991 = vmatpush1.msra.mxu0 %v1990
  %v1992 = vand.u32 %v1702, 4294901760
  %v1993 = vsub.f32 %v1702, %v1992
  %1994 = vmatprep.subr.mxu0 %v1993
  %v1995 = vand.u32 %v1703, 4294901760
  %v1996 = vsub.f32 %v1703, %v1995
  %1997 = vmatpush1.msra.mxu0 %v1996
  %v1998 = vand.u32 %v1683, 4294901760
  %v1999 = vsub.f32 %v1683, %v1998
  %2000 = vmatprep.subr.mxu0 %v1999
  %v2001 = vand.u32 %v1682, 4294901760
  %v2002 = vsub.f32 %v1682, %v2001
  %2003 = vmatpush1.msra.mxu0 %v2002
  %v2004 = vand.u32 %v1645, 4294901760
  %v2005 = vsub.f32 %v1645, %v2004
  %2006 = vmatprep.subr.mxu0 %v2005
  %v2007 = vand.u32 %v1644, 4294901760
  %v2008 = vsub.f32 %v1644, %v2007
  %2009 = vmatpush1.msra.mxu0 %v2008
  %v2010 = vand.u32 %v1676, 4294901760
  %v2011 = vsub.f32 %v1676, %v2010
  %2012 = vmatprep.subr.mxu0 %v2011
  %v2013 = vand.u32 %v1677, 4294901760
  %v2014 = vsub.f32 %v1677, %v2013
  %2015 = vmatpush1.msra.mxu0 %v2014
  %v2016 = vand.u32 %v1671, 4294901760
  %v2017 = vsub.f32 %v1671, %v2016
  %2018 = vmatprep.subr.mxu0 %v2017
  %v2019 = vand.u32 %v1670, 4294901760
  %v2020 = vsub.f32 %v1670, %v2019
  %2021 = vmatpush1.msra.mxu0 %v2020
  %v2022 = vand.u32 %v1659, 4294901760
  %v2023 = vsub.f32 %v1659, %v2022
  %2024 = vmatprep.subr.mxu0 %v2023
  %v2025 = vand.u32 %v1658, 4294901760
  %v2026 = vsub.f32 %v1658, %v2025
  %2027 = vmatpush1.msra.mxu0 %v2026
  %v2028 = vand.u32 %v1664, 4294901760
  %v2029 = vsub.f32 %v1664, %v2028
  %2030 = vmatprep.subr.mxu0 %v2029
  %v2031 = vand.u32 %v1665, 4294901760
  %v2032 = vsub.f32 %v1665, %v2031
  %2033 = vmatpush1.msra.mxu0 %v2032
  %2034 = vmatprep.subr.mxu0 0.0
  %2035 = vmatpush2.msra.mxu0 0.0
  %2036 = vmatprep.subr.mxu0 0.0
  %2037 = vmatpush2.msra.mxu0 0.0
  %2038 = vmatprep.subr.mxu0 0.0
  %2039 = vmatpush2.msra.mxu0 0.0
  %2040 = vmatprep.subr.mxu0 0.0
  %2041 = vmatpush2.msra.mxu0 0.0
  %2042 = vmatprep.subr.mxu0 0.0
  %2043 = vmatpush2.msra.mxu0 0.0
  %2044 = vmatprep.subr.mxu0 0.0
  %2045 = vmatpush2.msra.mxu0 0.0
  %2046 = vmatprep.subr.mxu0 0.0
  %2047 = vmatpush2.msra.mxu0 0.0
  %2048 = vmatprep.subr.mxu0 0.0
  %2049 = vmatpush2.msra.mxu0 0.0
  %2050 = vmatprep.subr.mxu0 0.0
  %2051 = vmatpush2.msra.mxu0 0.0
  %2052 = vmatprep.subr.mxu0 0.0
  %2053 = vmatpush2.msra.mxu0 0.0
  %2054 = vmatprep.subr.mxu0 0.0
  %2055 = vmatpush2.msra.mxu0 0.0
  %2056 = vmatprep.subr.mxu0 0.0
  %2057 = vmatpush2.msra.mxu0 0.0
  %2058 = vmatprep.subr.mxu0 0.0
  %2059 = vmatpush2.msra.mxu0 0.0
  %2060 = vmatprep.subr.mxu0 0.0
  %2061 = vmatpush2.msra.mxu0 0.0
  %2062 = vmatprep.subr.mxu0 0.0
  %2063 = vmatpush2.msra.mxu0 0.0
  %2064 = vmatprep.subr.mxu0 0.0
  %2065 = vmatpush2.msra.mxu0 0.0
  %2066 = vmatprep.mubr.f32.mxu0 0.0
  %v2067 = vand.u32 %v155, 4294901760
  %v2068 = vsub.f32 %v155, %v2067
  %2069 = vmatmul.mubr.f32.gmra.mxu0 %v2068
  %v2070 = vpop.f32.mrf.mxu0
  %v2071 = vadd.f32 %v1962, %v2070
  %v2072 = vpop.f32.mrf.mxu0
  %v2073 = vadd.f32 %v1964, %v2072
  %2074 = vdwg.mxu0
  %2075 = vmatprep.subr.mxu0 0.0
  %2076 = vmatpush1.msra.mxu0 0.0
  %2077 = vmatprep.subr.mxu0 0.0
  %2078 = vmatpush1.msra.mxu0 0.0
  %2079 = vmatprep.subr.mxu0 0.0
  %2080 = vmatpush1.msra.mxu0 0.0
  %2081 = vmatprep.subr.mxu0 0.0
  %2082 = vmatpush1.msra.mxu0 0.0
  %2083 = vmatprep.subr.mxu0 0.0
  %2084 = vmatpush1.msra.mxu0 0.0
  %2085 = vmatprep.subr.mxu0 0.0
  %2086 = vmatpush1.msra.mxu0 0.0
  %2087 = vmatprep.subr.mxu0 0.0
  %2088 = vmatpush1.msra.mxu0 0.0
  %v2089 = vand.u32 %v1709, 4294901760
  %2090 = vmatprep.subr.mxu0 %v2089
  %v2091 = vand.u32 %v1708, 4294901760
  %2092 = vmatpush1.msra.mxu0 %v2091
  %v2093 = vand.u32 %v1697, 4294901760
  %2094 = vmatprep.subr.mxu0 %v2093
  %v2095 = vand.u32 %v1696, 4294901760
  %2096 = vmatpush1.msra.mxu0 %v2095
  %v2097 = vand.u32 %v1702, 4294901760
  %2098 = vmatprep.subr.mxu0 %v2097
  %v2099 = vand.u32 %v1703, 4294901760
  %2100 = vmatpush1.msra.mxu0 %v2099
  %v2101 = vand.u32 %v1683, 4294901760
  %2102 = vmatprep.subr.mxu0 %v2101
  %v2103 = vand.u32 %v1682, 4294901760
  %2104 = vmatpush1.msra.mxu0 %v2103
  %v2105 = vand.u32 %v1645, 4294901760
  %2106 = vmatprep.subr.mxu0 %v2105
  %v2107 = vand.u32 %v1644, 4294901760
  %2108 = vmatpush1.msra.mxu0 %v2107
  %v2109 = vand.u32 %v1676, 4294901760
  %2110 = vmatprep.subr.mxu0 %v2109
  %v2111 = vand.u32 %v1677, 4294901760
  %2112 = vmatpush1.msra.mxu0 %v2111
  %v2113 = vand.u32 %v1671, 4294901760
  %2114 = vmatprep.subr.mxu0 %v2113
  %v2115 = vand.u32 %v1670, 4294901760
  %2116 = vmatpush1.msra.mxu0 %v2115
  %v2117 = vand.u32 %v1659, 4294901760
  %2118 = vmatprep.subr.mxu0 %v2117
  %v2119 = vand.u32 %v1658, 4294901760
  %2120 = vmatpush1.msra.mxu0 %v2119
  %v2121 = vand.u32 %v1664, 4294901760
  %2122 = vmatprep.subr.mxu0 %v2121
  %v2123 = vand.u32 %v1665, 4294901760
  %2124 = vmatpush1.msra.mxu0 %v2123
  %2125 = vmatprep.subr.mxu0 0.0
  %2126 = vmatpush2.msra.mxu0 0.0
  %2127 = vmatprep.subr.mxu0 0.0
  %2128 = vmatpush2.msra.mxu0 0.0
  %2129 = vmatprep.subr.mxu0 0.0
  %2130 = vmatpush2.msra.mxu0 0.0
  %2131 = vmatprep.subr.mxu0 0.0
  %2132 = vmatpush2.msra.mxu0 0.0
  %2133 = vmatprep.subr.mxu0 0.0
  %2134 = vmatpush2.msra.mxu0 0.0
  %2135 = vmatprep.subr.mxu0 0.0
  %2136 = vmatpush2.msra.mxu0 0.0
  %2137 = vmatprep.subr.mxu0 0.0
  %2138 = vmatpush2.msra.mxu0 0.0
  %2139 = vmatprep.subr.mxu0 0.0
  %2140 = vmatpush2.msra.mxu0 0.0
  %2141 = vmatprep.subr.mxu0 0.0
  %2142 = vmatpush2.msra.mxu0 0.0
  %2143 = vmatprep.subr.mxu0 0.0
  %2144 = vmatpush2.msra.mxu0 0.0
  %2145 = vmatprep.subr.mxu0 0.0
  %2146 = vmatpush2.msra.mxu0 0.0
  %2147 = vmatprep.subr.mxu0 0.0
  %2148 = vmatpush2.msra.mxu0 0.0
  %2149 = vmatprep.subr.mxu0 0.0
  %2150 = vmatpush2.msra.mxu0 0.0
  %2151 = vmatprep.subr.mxu0 0.0
  %2152 = vmatpush2.msra.mxu0 0.0
  %2153 = vmatprep.subr.mxu0 0.0
  %2154 = vmatpush2.msra.mxu0 0.0
  %2155 = vmatprep.subr.mxu0 0.0
  %2156 = vmatpush2.msra.mxu0 0.0
  %2157 = vmatprep.mubr.f32.mxu0 0.0
  %v2158 = vand.u32 %v155, 4294901760
  %v2159 = vsub.f32 %v155, %v2158
  %v2160 = vand.u32 %v2159, 4294901760
  %2161 = vmatmul.mubr.f32.gmra.mxu0 %v2160
  %v2162 = vpop.f32.mrf.mxu0
  %v2163 = vadd.f32 %v2071, %v2162
  %v2164 = vpop.f32.mrf.mxu0
  %v2165 = vadd.f32 %v2073, %v2164
  %2166 = vdwg.mxu0
  %2167 = vmatprep.subr.mxu0 0.0
  %2168 = vmatpush1.msra.mxu0 0.0
  %2169 = vmatprep.subr.mxu0 0.0
  %2170 = vmatpush1.msra.mxu0 0.0
  %2171 = vmatprep.subr.mxu0 0.0
  %2172 = vmatpush1.msra.mxu0 0.0
  %2173 = vmatprep.subr.mxu0 0.0
  %2174 = vmatpush1.msra.mxu0 0.0
  %2175 = vmatprep.subr.mxu0 0.0
  %2176 = vmatpush1.msra.mxu0 0.0
  %2177 = vmatprep.subr.mxu0 0.0
  %2178 = vmatpush1.msra.mxu0 0.0
  %2179 = vmatprep.subr.mxu0 0.0
  %2180 = vmatpush1.msra.mxu0 0.0
  %v2181 = vand.u32 %v1709, 4294901760
  %v2182 = vsub.f32 %v1709, %v2181
  %v2183 = vand.u32 %v2182, 4294901760
  %2184 = vmatprep.subr.mxu0 %v2183
  %v2185 = vand.u32 %v1708, 4294901760
  %v2186 = vsub.f32 %v1708, %v2185
  %v2187 = vand.u32 %v2186, 4294901760
  %2188 = vmatpush1.msra.mxu0 %v2187
  %v2189 = vand.u32 %v1697, 4294901760
  %v2190 = vsub.f32 %v1697, %v2189
  %v2191 = vand.u32 %v2190, 4294901760
  %2192 = vmatprep.subr.mxu0 %v2191
  %v2193 = vand.u32 %v1696, 4294901760
  %v2194 = vsub.f32 %v1696, %v2193
  %v2195 = vand.u32 %v2194, 4294901760
  %2196 = vmatpush1.msra.mxu0 %v2195
  %v2197 = vand.u32 %v1702, 4294901760
  %v2198 = vsub.f32 %v1702, %v2197
  %v2199 = vand.u32 %v2198, 4294901760
  %2200 = vmatprep.subr.mxu0 %v2199
  %v2201 = vand.u32 %v1703, 4294901760
  %v2202 = vsub.f32 %v1703, %v2201
  %v2203 = vand.u32 %v2202, 4294901760
  %2204 = vmatpush1.msra.mxu0 %v2203
  %v2205 = vand.u32 %v1683, 4294901760
  %v2206 = vsub.f32 %v1683, %v2205
  %v2207 = vand.u32 %v2206, 4294901760
  %2208 = vmatprep.subr.mxu0 %v2207
  %v2209 = vand.u32 %v1682, 4294901760
  %v2210 = vsub.f32 %v1682, %v2209
  %v2211 = vand.u32 %v2210, 4294901760
  %2212 = vmatpush1.msra.mxu0 %v2211
  %v2213 = vand.u32 %v1645, 4294901760
  %v2214 = vsub.f32 %v1645, %v2213
  %v2215 = vand.u32 %v2214, 4294901760
  %2216 = vmatprep.subr.mxu0 %v2215
  %v2217 = vand.u32 %v1644, 4294901760
  %v2218 = vsub.f32 %v1644, %v2217
  %v2219 = vand.u32 %v2218, 4294901760
  %2220 = vmatpush1.msra.mxu0 %v2219
  %v2221 = vand.u32 %v1676, 4294901760
  %v2222 = vsub.f32 %v1676, %v2221
  %v2223 = vand.u32 %v2222, 4294901760
  %2224 = vmatprep.subr.mxu0 %v2223
  %v2225 = vand.u32 %v1677, 4294901760
  %v2226 = vsub.f32 %v1677, %v2225
  %v2227 = vand.u32 %v2226, 4294901760
  %2228 = vmatpush1.msra.mxu0 %v2227
  %v2229 = vand.u32 %v1671, 4294901760
  %v2230 = vsub.f32 %v1671, %v2229
  %v2231 = vand.u32 %v2230, 4294901760
  %2232 = vmatprep.subr.mxu0 %v2231
  %v2233 = vand.u32 %v1670, 4294901760
  %v2234 = vsub.f32 %v1670, %v2233
  %v2235 = vand.u32 %v2234, 4294901760
  %2236 = vmatpush1.msra.mxu0 %v2235
  %v2237 = vand.u32 %v1659, 4294901760
  %v2238 = vsub.f32 %v1659, %v2237
  %v2239 = vand.u32 %v2238, 4294901760
  %2240 = vmatprep.subr.mxu0 %v2239
  %v2241 = vand.u32 %v1658, 4294901760
  %v2242 = vsub.f32 %v1658, %v2241
  %v2243 = vand.u32 %v2242, 4294901760
  %2244 = vmatpush1.msra.mxu0 %v2243
  %v2245 = vand.u32 %v1664, 4294901760
  %v2246 = vsub.f32 %v1664, %v2245
  %v2247 = vand.u32 %v2246, 4294901760
  %2248 = vmatprep.subr.mxu0 %v2247
  %v2249 = vand.u32 %v1665, 4294901760
  %v2250 = vsub.f32 %v1665, %v2249
  %v2251 = vand.u32 %v2250, 4294901760
  %2252 = vmatpush1.msra.mxu0 %v2251
  %2253 = vmatprep.subr.mxu0 0.0
  %2254 = vmatpush2.msra.mxu0 0.0
  %2255 = vmatprep.subr.mxu0 0.0
  %2256 = vmatpush2.msra.mxu0 0.0
  %2257 = vmatprep.subr.mxu0 0.0
  %2258 = vmatpush2.msra.mxu0 0.0
  %2259 = vmatprep.subr.mxu0 0.0
  %2260 = vmatpush2.msra.mxu0 0.0
  %2261 = vmatprep.subr.mxu0 0.0
  %2262 = vmatpush2.msra.mxu0 0.0
  %2263 = vmatprep.subr.mxu0 0.0
  %2264 = vmatpush2.msra.mxu0 0.0
  %2265 = vmatprep.subr.mxu0 0.0
  %2266 = vmatpush2.msra.mxu0 0.0
  %2267 = vmatprep.subr.mxu0 0.0
  %2268 = vmatpush2.msra.mxu0 0.0
  %2269 = vmatprep.subr.mxu0 0.0
  %2270 = vmatpush2.msra.mxu0 0.0
  %2271 = vmatprep.subr.mxu0 0.0
  %2272 = vmatpush2.msra.mxu0 0.0
  %2273 = vmatprep.subr.mxu0 0.0
  %2274 = vmatpush2.msra.mxu0 0.0
  %2275 = vmatprep.subr.mxu0 0.0
  %2276 = vmatpush2.msra.mxu0 0.0
  %2277 = vmatprep.subr.mxu0 0.0
  %2278 = vmatpush2.msra.mxu0 0.0
  %2279 = vmatprep.subr.mxu0 0.0
  %2280 = vmatpush2.msra.mxu0 0.0
  %2281 = vmatprep.subr.mxu0 0.0
  %2282 = vmatpush2.msra.mxu0 0.0
  %2283 = vmatprep.subr.mxu0 0.0
  %2284 = vmatpush2.msra.mxu0 0.0
  %2285 = vmatprep.mubr.f32.mxu0 0.0
  %v2286 = vand.u32 %v155, 4294901760
  %2287 = vmatmul.mubr.f32.gmra.mxu0 %v2286
  %v2288 = vpop.f32.mrf.mxu0
  %v2289 = vadd.f32 %v2163, %v2288
  %v2290 = vpop.f32.mrf.mxu0
  %v2291 = vadd.f32 %v2165, %v2290
  %2292 = vdwg.mxu0
  %2293 = vmatprep.subr.mxu0 0.0
  %2294 = vmatpush1.msra.mxu0 0.0
  %2295 = vmatprep.subr.mxu0 0.0
  %2296 = vmatpush1.msra.mxu0 0.0
  %2297 = vmatprep.subr.mxu0 0.0
  %2298 = vmatpush1.msra.mxu0 0.0
  %2299 = vmatprep.subr.mxu0 0.0
  %2300 = vmatpush1.msra.mxu0 0.0
  %2301 = vmatprep.subr.mxu0 0.0
  %2302 = vmatpush1.msra.mxu0 0.0
  %2303 = vmatprep.subr.mxu0 0.0
  %2304 = vmatpush1.msra.mxu0 0.0
  %2305 = vmatprep.subr.mxu0 0.0
  %2306 = vmatpush1.msra.mxu0 0.0
  %v2307 = vand.u32 %v1709, 4294901760
  %2308 = vmatprep.subr.mxu0 %v2307
  %v2309 = vand.u32 %v1708, 4294901760
  %2310 = vmatpush1.msra.mxu0 %v2309
  %v2311 = vand.u32 %v1697, 4294901760
  %2312 = vmatprep.subr.mxu0 %v2311
  %v2313 = vand.u32 %v1696, 4294901760
  %2314 = vmatpush1.msra.mxu0 %v2313
  %v2315 = vand.u32 %v1702, 4294901760
  %2316 = vmatprep.subr.mxu0 %v2315
  %v2317 = vand.u32 %v1703, 4294901760
  %2318 = vmatpush1.msra.mxu0 %v2317
  %v2319 = vand.u32 %v1683, 4294901760
  %2320 = vmatprep.subr.mxu0 %v2319
  %v2321 = vand.u32 %v1682, 4294901760
  %2322 = vmatpush1.msra.mxu0 %v2321
  %v2323 = vand.u32 %v1645, 4294901760
  %2324 = vmatprep.subr.mxu0 %v2323
  %v2325 = vand.u32 %v1644, 4294901760
  %2326 = vmatpush1.msra.mxu0 %v2325
  %v2327 = vand.u32 %v1676, 4294901760
  %2328 = vmatprep.subr.mxu0 %v2327
  %v2329 = vand.u32 %v1677, 4294901760
  %2330 = vmatpush1.msra.mxu0 %v2329
  %v2331 = vand.u32 %v1671, 4294901760
  %2332 = vmatprep.subr.mxu0 %v2331
  %v2333 = vand.u32 %v1670, 4294901760
  %2334 = vmatpush1.msra.mxu0 %v2333
  %v2335 = vand.u32 %v1659, 4294901760
  %2336 = vmatprep.subr.mxu0 %v2335
  %v2337 = vand.u32 %v1658, 4294901760
  %2338 = vmatpush1.msra.mxu0 %v2337
  %v2339 = vand.u32 %v1664, 4294901760
  %2340 = vmatprep.subr.mxu0 %v2339
  %v2341 = vand.u32 %v1665, 4294901760
  %2342 = vmatpush1.msra.mxu0 %v2341
  %2343 = vmatprep.subr.mxu0 0.0
  %2344 = vmatpush2.msra.mxu0 0.0
  %2345 = vmatprep.subr.mxu0 0.0
  %2346 = vmatpush2.msra.mxu0 0.0
  %2347 = vmatprep.subr.mxu0 0.0
  %2348 = vmatpush2.msra.mxu0 0.0
  %2349 = vmatprep.subr.mxu0 0.0
  %2350 = vmatpush2.msra.mxu0 0.0
  %2351 = vmatprep.subr.mxu0 0.0
  %2352 = vmatpush2.msra.mxu0 0.0
  %2353 = vmatprep.subr.mxu0 0.0
  %2354 = vmatpush2.msra.mxu0 0.0
  %2355 = vmatprep.subr.mxu0 0.0
  %2356 = vmatpush2.msra.mxu0 0.0
  %2357 = vmatprep.subr.mxu0 0.0
  %2358 = vmatpush2.msra.mxu0 0.0
  %2359 = vmatprep.subr.mxu0 0.0
  %2360 = vmatpush2.msra.mxu0 0.0
  %2361 = vmatprep.subr.mxu0 0.0
  %2362 = vmatpush2.msra.mxu0 0.0
  %2363 = vmatprep.subr.mxu0 0.0
  %2364 = vmatpush2.msra.mxu0 0.0
  %2365 = vmatprep.subr.mxu0 0.0
  %2366 = vmatpush2.msra.mxu0 0.0
  %2367 = vmatprep.subr.mxu0 0.0
  %2368 = vmatpush2.msra.mxu0 0.0
  %2369 = vmatprep.subr.mxu0 0.0
  %2370 = vmatpush2.msra.mxu0 0.0
  %2371 = vmatprep.subr.mxu0 0.0
  %2372 = vmatpush2.msra.mxu0 0.0
  %2373 = vmatprep.subr.mxu0 0.0
  %2374 = vmatpush2.msra.mxu0 0.0
  %2375 = vmatprep.mubr.f32.mxu0 0.0
  %v2376 = vand.u32 %v155, 4294901760
  %2377 = vmatmul.mubr.f32.gmra.mxu0 %v2376
  %v2378 = vpop.f32.mrf.mxu0
  %v2379 = vadd.f32 %v2289, %v2378
  %v2380 = vpop.f32.mrf.mxu0
  %v2381 = vadd.f32 %v2291, %v2380
  %2382 = vdwg.mxu0
  %v2383 = vmax.f32 %v2379, 0.0
  %v2384 = vmax.f32 %v2381, 0.0
  %v2385 = vadd.f32 %v2383, %v2384
  %2386 = vadd.xlane.f32.xlu0 %v2385
  %v2387 = vpop.xlane.xlu0 %2386
  %v2388 = vmul.f32 %v2383, %v2383
  %v2389 = vmul.f32 %v2384, %v2384
  %v2390 = vadd.f32 %v2388, %v2389
  %2391 = vadd.xlane.f32.xlu0 %v2390
  %v2392 = vpop.xlane.xlu0 %2391
  %v2393 = vmul.f32 %v2387, 0.00390625
  %v2394 = vmul.f32 %v2392, 0.00390625
  %v2395 = vmul.f32 %v2393, %v2393
  %v2396 = vsub.f32 %v2394, %v2395
  %v2397 = vmax.f32 %v2396, 0.0
  %v2398 = vadd.f32 %v2397, 1e-05
  %v2399 = vrsqrt.pop %v2398
  %v2400 = vmul.f32 %v40, %v2399
  %v2401 = vsub.f32 %v2383, %v2393
  %v2402 = vsub.f32 %v2384, %v2393
  %2404 = vset.pattern.permute.xlu0 0
  %2405 = vperm.xlu0 %2404, %v2400
  %v2406 = vpop.permute.xlu0 %2405
  %v2408 = vmul.f32 %v2401, %v2406
  %v2409 = vmul.f32 %v2402, %v2406
  %v2410 = vadd.f32 %v2408, %v860
  %v2411 = vadd.f32 %v2409, %v860
  %2412 = vrot.lane.b32.xlu0 %v2410, 1
  %v2413 = vpop.permute.xlu0 %2412
  %2414 = vrot.lane.b32.xlu0 %v2411, 1
  %v2415 = vpop.permute.xlu0 %2414
  %v2416 = vsel %vm82, %v2413, %v2415
  %v2417 = vsel %vm82, %v2415, %v2413
  %2418 = vrot.lane.b32.xlu0 %v2410, 113
  %v2419 = vpop.permute.xlu0 %2418
  %2420 = vrot.lane.b32.xlu0 %v2411, 113
  %v2421 = vpop.permute.xlu0 %2420
  %v2422 = vsel %vm89, %v2419, %v2421
  %v2423 = vsel %vm89, %v2421, %v2419
  %v2424 = vsel %vm59, %v2422, %v2417
  %v2425 = vsel %vm60, %v2423, %v2416
  %2426 = vrot.lane.b32.xlu0 %v2424, 16
  %v2427 = vpop.permute.xlu0 %2426
  %2428 = vrot.lane.b32.xlu0 %v2425, 16
  %v2429 = vpop.permute.xlu0 %2428
  %v2430 = vsel %vm98, %v2427, %v2429
  %v2431 = vsel %vm98, %v2429, %v2427
  %2432 = vrot.lane.b32.xlu0 %v2424, 112
  %v2433 = vpop.permute.xlu0 %2432
  %2434 = vrot.lane.b32.xlu0 %v2425, 112
  %v2435 = vpop.permute.xlu0 %2434
  %v2436 = vsel %vm105, %v2433, %v2435
  %v2437 = vsel %vm105, %v2435, %v2433
  %2438 = vrot.lane.b32.xlu0 %v2410, 16
  %v2439 = vpop.permute.xlu0 %2438
  %2440 = vrot.lane.b32.xlu0 %v2411, 16
  %v2441 = vpop.permute.xlu0 %2440
  %v2442 = vsel %vm98, %v2439, %v2441
  %v2443 = vsel %vm98, %v2441, %v2439
  %2444 = vrot.lane.b32.xlu0 %v2410, 112
  %v2445 = vpop.permute.xlu0 %2444
  %2446 = vrot.lane.b32.xlu0 %v2411, 112
  %v2447 = vpop.permute.xlu0 %2446
  %v2448 = vsel %vm105, %v2445, %v2447
  %v2449 = vsel %vm105, %v2447, %v2445
  %2450 = vrot.lane.b32.xlu0 %v2410, 127
  %v2451 = vpop.permute.xlu0 %2450
  %2452 = vrot.lane.b32.xlu0 %v2411, 127
  %v2453 = vpop.permute.xlu0 %2452
  %v2454 = vsel %vm124, %v2451, %v2453
  %v2455 = vsel %vm124, %v2453, %v2451
  %2456 = vrot.lane.b32.xlu0 %v2410, 15
  %v2457 = vpop.permute.xlu0 %2456
  %2458 = vrot.lane.b32.xlu0 %v2411, 15
  %v2459 = vpop.permute.xlu0 %2458
  %v2460 = vsel %vm131, %v2457, %v2459
  %v2461 = vsel %vm131, %v2459, %v2457
  %v2462 = vsel %vm72, %v2461, %v2454
  %v2463 = vsel %vm73, %v2460, %v2455
  %2464 = vrot.lane.b32.xlu0 %v2462, 16
  %v2465 = vpop.permute.xlu0 %2464
  %2466 = vrot.lane.b32.xlu0 %v2463, 16
  %v2467 = vpop.permute.xlu0 %2466
  %v2468 = vsel %vm98, %v2465, %v2467
  %v2469 = vsel %vm98, %v2467, %v2465
  %2470 = vrot.lane.b32.xlu0 %v2462, 112
  %v2471 = vpop.permute.xlu0 %2470
  %2472 = vrot.lane.b32.xlu0 %v2463, 112
  %v2473 = vpop.permute.xlu0 %2472
  %v2474 = vsel %vm105, %v2471, %v2473
  %v2475 = vsel %vm105, %v2473, %v2471
  %2476 = vmatprep.subr.mxu0 0.0
  %2477 = vmatpush1.msra.mxu0 0.0
  %2478 = vmatprep.subr.mxu0 0.0
  %2479 = vmatpush1.msra.mxu0 0.0
  %2480 = vmatprep.subr.mxu0 0.0
  %2481 = vmatpush1.msra.mxu0 0.0
  %2482 = vmatprep.subr.mxu0 0.0
  %2483 = vmatpush1.msra.mxu0 0.0
  %2484 = vmatprep.subr.mxu0 0.0
  %2485 = vmatpush1.msra.mxu0 0.0
  %2486 = vmatprep.subr.mxu0 0.0
  %2487 = vmatpush1.msra.mxu0 0.0
  %2488 = vmatprep.subr.mxu0 0.0
  %2489 = vmatpush1.msra.mxu0 0.0
  %v2490 = vand.u32 %v2475, 4294901760
  %2491 = vmatprep.subr.mxu0 %v2490
  %v2492 = vand.u32 %v2474, 4294901760
  %2493 = vmatpush1.msra.mxu0 %v2492
  %v2494 = vand.u32 %v2463, 4294901760
  %2495 = vmatprep.subr.mxu0 %v2494
  %v2496 = vand.u32 %v2462, 4294901760
  %2497 = vmatpush1.msra.mxu0 %v2496
  %v2498 = vand.u32 %v2468, 4294901760
  %2499 = vmatprep.subr.mxu0 %v2498
  %v2500 = vand.u32 %v2469, 4294901760
  %2501 = vmatpush1.msra.mxu0 %v2500
  %v2502 = vand.u32 %v2449, 4294901760
  %2503 = vmatprep.subr.mxu0 %v2502
  %v2504 = vand.u32 %v2448, 4294901760
  %2505 = vmatpush1.msra.mxu0 %v2504
  %v2506 = vand.u32 %v2411, 4294901760
  %2507 = vmatprep.subr.mxu0 %v2506
  %v2508 = vand.u32 %v2410, 4294901760
  %2509 = vmatpush1.msra.mxu0 %v2508
  %v2510 = vand.u32 %v2442, 4294901760
  %2511 = vmatprep.subr.mxu0 %v2510
  %v2512 = vand.u32 %v2443, 4294901760
  %2513 = vmatpush1.msra.mxu0 %v2512
  %v2514 = vand.u32 %v2437, 4294901760
  %2515 = vmatprep.subr.mxu0 %v2514
  %v2516 = vand.u32 %v2436, 4294901760
  %2517 = vmatpush1.msra.mxu0 %v2516
  %v2518 = vand.u32 %v2425, 4294901760
  %2519 = vmatprep.subr.mxu0 %v2518
  %v2520 = vand.u32 %v2424, 4294901760
  %2521 = vmatpush1.msra.mxu0 %v2520
  %v2522 = vand.u32 %v2430, 4294901760
  %2523 = vmatprep.subr.mxu0 %v2522
  %v2524 = vand.u32 %v2431, 4294901760
  %2525 = vmatpush1.msra.mxu0 %v2524
  %2526 = vmatprep.subr.mxu0 0.0
  %2527 = vmatpush2.msra.mxu0 0.0
  %2528 = vmatprep.subr.mxu0 0.0
  %2529 = vmatpush2.msra.mxu0 0.0
  %2530 = vmatprep.subr.mxu0 0.0
  %2531 = vmatpush2.msra.mxu0 0.0
  %2532 = vmatprep.subr.mxu0 0.0
  %2533 = vmatpush2.msra.mxu0 0.0
  %2534 = vmatprep.subr.mxu0 0.0
  %2535 = vmatpush2.msra.mxu0 0.0
  %2536 = vmatprep.subr.mxu0 0.0
  %2537 = vmatpush2.msra.mxu0 0.0
  %2538 = vmatprep.subr.mxu0 0.0
  %2539 = vmatpush2.msra.mxu0 0.0
  %2540 = vmatprep.subr.mxu0 0.0
  %2541 = vmatpush2.msra.mxu0 0.0
  %2542 = vmatprep.subr.mxu0 0.0
  %2543 = vmatpush2.msra.mxu0 0.0
  %2544 = vmatprep.subr.mxu0 0.0
  %2545 = vmatpush2.msra.mxu0 0.0
  %2546 = vmatprep.subr.mxu0 0.0
  %2547 = vmatpush2.msra.mxu0 0.0
  %2548 = vmatprep.subr.mxu0 0.0
  %2549 = vmatpush2.msra.mxu0 0.0
  %2550 = vmatprep.subr.mxu0 0.0
  %2551 = vmatpush2.msra.mxu0 0.0
  %2552 = vmatprep.subr.mxu0 0.0
  %2553 = vmatpush2.msra.mxu0 0.0
  %2554 = vmatprep.subr.mxu0 0.0
  %2555 = vmatpush2.msra.mxu0 0.0
  %2556 = vmatprep.subr.mxu0 0.0
  %2557 = vmatpush2.msra.mxu0 0.0
  %2558 = vmatprep.mubr.f32.mxu0 0.0
  %v2559 = vand.u32 %v934, 4294901760
  %v2560 = vsub.f32 %v934, %v2559
  %v2561 = vand.u32 %v2560, 4294901760
  %v2562 = vsub.f32 %v2560, %v2561
  %v2563 = vand.u32 %v2562, 4294901760
  %2564 = vmatmul.mubr.f32.gmra.mxu0 %v2563
  %v2565 = vpop.f32.mrf.mxu0
  %v2566 = vadd.f32 %v931, %v2565
  %v2567 = vpop.f32.mrf.mxu0
  %v2568 = vadd.f32 %v931, %v2567
  %2569 = vdwg.mxu0
  %2570 = vmatprep.subr.mxu0 0.0
  %2571 = vmatpush1.msra.mxu0 0.0
  %2572 = vmatprep.subr.mxu0 0.0
  %2573 = vmatpush1.msra.mxu0 0.0
  %2574 = vmatprep.subr.mxu0 0.0
  %2575 = vmatpush1.msra.mxu0 0.0
  %2576 = vmatprep.subr.mxu0 0.0
  %2577 = vmatpush1.msra.mxu0 0.0
  %2578 = vmatprep.subr.mxu0 0.0
  %2579 = vmatpush1.msra.mxu0 0.0
  %2580 = vmatprep.subr.mxu0 0.0
  %2581 = vmatpush1.msra.mxu0 0.0
  %2582 = vmatprep.subr.mxu0 0.0
  %2583 = vmatpush1.msra.mxu0 0.0
  %v2584 = vand.u32 %v2475, 4294901760
  %v2585 = vsub.f32 %v2475, %v2584
  %v2586 = vand.u32 %v2585, 4294901760
  %v2587 = vsub.f32 %v2585, %v2586
  %v2588 = vand.u32 %v2587, 4294901760
  %2589 = vmatprep.subr.mxu0 %v2588
  %v2590 = vand.u32 %v2474, 4294901760
  %v2591 = vsub.f32 %v2474, %v2590
  %v2592 = vand.u32 %v2591, 4294901760
  %v2593 = vsub.f32 %v2591, %v2592
  %v2594 = vand.u32 %v2593, 4294901760
  %2595 = vmatpush1.msra.mxu0 %v2594
  %v2596 = vand.u32 %v2463, 4294901760
  %v2597 = vsub.f32 %v2463, %v2596
  %v2598 = vand.u32 %v2597, 4294901760
  %v2599 = vsub.f32 %v2597, %v2598
  %v2600 = vand.u32 %v2599, 4294901760
  %2601 = vmatprep.subr.mxu0 %v2600
  %v2602 = vand.u32 %v2462, 4294901760
  %v2603 = vsub.f32 %v2462, %v2602
  %v2604 = vand.u32 %v2603, 4294901760
  %v2605 = vsub.f32 %v2603, %v2604
  %v2606 = vand.u32 %v2605, 4294901760
  %2607 = vmatpush1.msra.mxu0 %v2606
  %v2608 = vand.u32 %v2468, 4294901760
  %v2609 = vsub.f32 %v2468, %v2608
  %v2610 = vand.u32 %v2609, 4294901760
  %v2611 = vsub.f32 %v2609, %v2610
  %v2612 = vand.u32 %v2611, 4294901760
  %2613 = vmatprep.subr.mxu0 %v2612
  %v2614 = vand.u32 %v2469, 4294901760
  %v2615 = vsub.f32 %v2469, %v2614
  %v2616 = vand.u32 %v2615, 4294901760
  %v2617 = vsub.f32 %v2615, %v2616
  %v2618 = vand.u32 %v2617, 4294901760
  %2619 = vmatpush1.msra.mxu0 %v2618
  %v2620 = vand.u32 %v2449, 4294901760
  %v2621 = vsub.f32 %v2449, %v2620
  %v2622 = vand.u32 %v2621, 4294901760
  %v2623 = vsub.f32 %v2621, %v2622
  %v2624 = vand.u32 %v2623, 4294901760
  %2625 = vmatprep.subr.mxu0 %v2624
  %v2626 = vand.u32 %v2448, 4294901760
  %v2627 = vsub.f32 %v2448, %v2626
  %v2628 = vand.u32 %v2627, 4294901760
  %v2629 = vsub.f32 %v2627, %v2628
  %v2630 = vand.u32 %v2629, 4294901760
  %2631 = vmatpush1.msra.mxu0 %v2630
  %v2632 = vand.u32 %v2411, 4294901760
  %v2633 = vsub.f32 %v2411, %v2632
  %v2634 = vand.u32 %v2633, 4294901760
  %v2635 = vsub.f32 %v2633, %v2634
  %v2636 = vand.u32 %v2635, 4294901760
  %2637 = vmatprep.subr.mxu0 %v2636
  %v2638 = vand.u32 %v2410, 4294901760
  %v2639 = vsub.f32 %v2410, %v2638
  %v2640 = vand.u32 %v2639, 4294901760
  %v2641 = vsub.f32 %v2639, %v2640
  %v2642 = vand.u32 %v2641, 4294901760
  %2643 = vmatpush1.msra.mxu0 %v2642
  %v2644 = vand.u32 %v2442, 4294901760
  %v2645 = vsub.f32 %v2442, %v2644
  %v2646 = vand.u32 %v2645, 4294901760
  %v2647 = vsub.f32 %v2645, %v2646
  %v2648 = vand.u32 %v2647, 4294901760
  %2649 = vmatprep.subr.mxu0 %v2648
  %v2650 = vand.u32 %v2443, 4294901760
  %v2651 = vsub.f32 %v2443, %v2650
  %v2652 = vand.u32 %v2651, 4294901760
  %v2653 = vsub.f32 %v2651, %v2652
  %v2654 = vand.u32 %v2653, 4294901760
  %2655 = vmatpush1.msra.mxu0 %v2654
  %v2656 = vand.u32 %v2437, 4294901760
  %v2657 = vsub.f32 %v2437, %v2656
  %v2658 = vand.u32 %v2657, 4294901760
  %v2659 = vsub.f32 %v2657, %v2658
  %v2660 = vand.u32 %v2659, 4294901760
  %2661 = vmatprep.subr.mxu0 %v2660
  %v2662 = vand.u32 %v2436, 4294901760
  %v2663 = vsub.f32 %v2436, %v2662
  %v2664 = vand.u32 %v2663, 4294901760
  %v2665 = vsub.f32 %v2663, %v2664
  %v2666 = vand.u32 %v2665, 4294901760
  %2667 = vmatpush1.msra.mxu0 %v2666
  %v2668 = vand.u32 %v2425, 4294901760
  %v2669 = vsub.f32 %v2425, %v2668
  %v2670 = vand.u32 %v2669, 4294901760
  %v2671 = vsub.f32 %v2669, %v2670
  %v2672 = vand.u32 %v2671, 4294901760
  %2673 = vmatprep.subr.mxu0 %v2672
  %v2674 = vand.u32 %v2424, 4294901760
  %v2675 = vsub.f32 %v2424, %v2674
  %v2676 = vand.u32 %v2675, 4294901760
  %v2677 = vsub.f32 %v2675, %v2676
  %v2678 = vand.u32 %v2677, 4294901760
  %2679 = vmatpush1.msra.mxu0 %v2678
  %v2680 = vand.u32 %v2430, 4294901760
  %v2681 = vsub.f32 %v2430, %v2680
  %v2682 = vand.u32 %v2681, 4294901760
  %v2683 = vsub.f32 %v2681, %v2682
  %v2684 = vand.u32 %v2683, 4294901760
  %2685 = vmatprep.subr.mxu0 %v2684
  %v2686 = vand.u32 %v2431, 4294901760
  %v2687 = vsub.f32 %v2431, %v2686
  %v2688 = vand.u32 %v2687, 4294901760
  %v2689 = vsub.f32 %v2687, %v2688
  %v2690 = vand.u32 %v2689, 4294901760
  %2691 = vmatpush1.msra.mxu0 %v2690
  %2692 = vmatprep.subr.mxu0 0.0
  %2693 = vmatpush2.msra.mxu0 0.0
  %2694 = vmatprep.subr.mxu0 0.0
  %2695 = vmatpush2.msra.mxu0 0.0
  %2696 = vmatprep.subr.mxu0 0.0
  %2697 = vmatpush2.msra.mxu0 0.0
  %2698 = vmatprep.subr.mxu0 0.0
  %2699 = vmatpush2.msra.mxu0 0.0
  %2700 = vmatprep.subr.mxu0 0.0
  %2701 = vmatpush2.msra.mxu0 0.0
  %2702 = vmatprep.subr.mxu0 0.0
  %2703 = vmatpush2.msra.mxu0 0.0
  %2704 = vmatprep.subr.mxu0 0.0
  %2705 = vmatpush2.msra.mxu0 0.0
  %2706 = vmatprep.subr.mxu0 0.0
  %2707 = vmatpush2.msra.mxu0 0.0
  %2708 = vmatprep.subr.mxu0 0.0
  %2709 = vmatpush2.msra.mxu0 0.0
  %2710 = vmatprep.subr.mxu0 0.0
  %2711 = vmatpush2.msra.mxu0 0.0
  %2712 = vmatprep.subr.mxu0 0.0
  %2713 = vmatpush2.msra.mxu0 0.0
  %2714 = vmatprep.subr.mxu0 0.0
  %2715 = vmatpush2.msra.mxu0 0.0
  %2716 = vmatprep.subr.mxu0 0.0
  %2717 = vmatpush2.msra.mxu0 0.0
  %2718 = vmatprep.subr.mxu0 0.0
  %2719 = vmatpush2.msra.mxu0 0.0
  %2720 = vmatprep.subr.mxu0 0.0
  %2721 = vmatpush2.msra.mxu0 0.0
  %2722 = vmatprep.subr.mxu0 0.0
  %2723 = vmatpush2.msra.mxu0 0.0
  %2724 = vmatprep.mubr.f32.mxu0 0.0
  %v2725 = vand.u32 %v934, 4294901760
  %2726 = vmatmul.mubr.f32.gmra.mxu0 %v2725
  %v2727 = vpop.f32.mrf.mxu0
  %v2728 = vadd.f32 %v2566, %v2727
  %v2729 = vpop.f32.mrf.mxu0
  %v2730 = vadd.f32 %v2568, %v2729
  %2731 = vdwg.mxu0
  %2732 = vmatprep.subr.mxu0 0.0
  %2733 = vmatpush1.msra.mxu0 0.0
  %2734 = vmatprep.subr.mxu0 0.0
  %2735 = vmatpush1.msra.mxu0 0.0
  %2736 = vmatprep.subr.mxu0 0.0
  %2737 = vmatpush1.msra.mxu0 0.0
  %2738 = vmatprep.subr.mxu0 0.0
  %2739 = vmatpush1.msra.mxu0 0.0
  %2740 = vmatprep.subr.mxu0 0.0
  %2741 = vmatpush1.msra.mxu0 0.0
  %2742 = vmatprep.subr.mxu0 0.0
  %2743 = vmatpush1.msra.mxu0 0.0
  %2744 = vmatprep.subr.mxu0 0.0
  %2745 = vmatpush1.msra.mxu0 0.0
  %v2746 = vand.u32 %v2475, 4294901760
  %v2747 = vsub.f32 %v2475, %v2746
  %2748 = vmatprep.subr.mxu0 %v2747
  %v2749 = vand.u32 %v2474, 4294901760
  %v2750 = vsub.f32 %v2474, %v2749
  %2751 = vmatpush1.msra.mxu0 %v2750
  %v2752 = vand.u32 %v2463, 4294901760
  %v2753 = vsub.f32 %v2463, %v2752
  %2754 = vmatprep.subr.mxu0 %v2753
  %v2755 = vand.u32 %v2462, 4294901760
  %v2756 = vsub.f32 %v2462, %v2755
  %2757 = vmatpush1.msra.mxu0 %v2756
  %v2758 = vand.u32 %v2468, 4294901760
  %v2759 = vsub.f32 %v2468, %v2758
  %2760 = vmatprep.subr.mxu0 %v2759
  %v2761 = vand.u32 %v2469, 4294901760
  %v2762 = vsub.f32 %v2469, %v2761
  %2763 = vmatpush1.msra.mxu0 %v2762
  %v2764 = vand.u32 %v2449, 4294901760
  %v2765 = vsub.f32 %v2449, %v2764
  %2766 = vmatprep.subr.mxu0 %v2765
  %v2767 = vand.u32 %v2448, 4294901760
  %v2768 = vsub.f32 %v2448, %v2767
  %2769 = vmatpush1.msra.mxu0 %v2768
  %v2770 = vand.u32 %v2411, 4294901760
  %v2771 = vsub.f32 %v2411, %v2770
  %2772 = vmatprep.subr.mxu0 %v2771
  %v2773 = vand.u32 %v2410, 4294901760
  %v2774 = vsub.f32 %v2410, %v2773
  %2775 = vmatpush1.msra.mxu0 %v2774
  %v2776 = vand.u32 %v2442, 4294901760
  %v2777 = vsub.f32 %v2442, %v2776
  %2778 = vmatprep.subr.mxu0 %v2777
  %v2779 = vand.u32 %v2443, 4294901760
  %v2780 = vsub.f32 %v2443, %v2779
  %2781 = vmatpush1.msra.mxu0 %v2780
  %v2782 = vand.u32 %v2437, 4294901760
  %v2783 = vsub.f32 %v2437, %v2782
  %2784 = vmatprep.subr.mxu0 %v2783
  %v2785 = vand.u32 %v2436, 4294901760
  %v2786 = vsub.f32 %v2436, %v2785
  %2787 = vmatpush1.msra.mxu0 %v2786
  %v2788 = vand.u32 %v2425, 4294901760
  %v2789 = vsub.f32 %v2425, %v2788
  %2790 = vmatprep.subr.mxu0 %v2789
  %v2791 = vand.u32 %v2424, 4294901760
  %v2792 = vsub.f32 %v2424, %v2791
  %2793 = vmatpush1.msra.mxu0 %v2792
  %v2794 = vand.u32 %v2430, 4294901760
  %v2795 = vsub.f32 %v2430, %v2794
  %2796 = vmatprep.subr.mxu0 %v2795
  %v2797 = vand.u32 %v2431, 4294901760
  %v2798 = vsub.f32 %v2431, %v2797
  %2799 = vmatpush1.msra.mxu0 %v2798
  %2800 = vmatprep.subr.mxu0 0.0
  %2801 = vmatpush2.msra.mxu0 0.0
  %2802 = vmatprep.subr.mxu0 0.0
  %2803 = vmatpush2.msra.mxu0 0.0
  %2804 = vmatprep.subr.mxu0 0.0
  %2805 = vmatpush2.msra.mxu0 0.0
  %2806 = vmatprep.subr.mxu0 0.0
  %2807 = vmatpush2.msra.mxu0 0.0
  %2808 = vmatprep.subr.mxu0 0.0
  %2809 = vmatpush2.msra.mxu0 0.0
  %2810 = vmatprep.subr.mxu0 0.0
  %2811 = vmatpush2.msra.mxu0 0.0
  %2812 = vmatprep.subr.mxu0 0.0
  %2813 = vmatpush2.msra.mxu0 0.0
  %2814 = vmatprep.subr.mxu0 0.0
  %2815 = vmatpush2.msra.mxu0 0.0
  %2816 = vmatprep.subr.mxu0 0.0
  %2817 = vmatpush2.msra.mxu0 0.0
  %2818 = vmatprep.subr.mxu0 0.0
  %2819 = vmatpush2.msra.mxu0 0.0
  %2820 = vmatprep.subr.mxu0 0.0
  %2821 = vmatpush2.msra.mxu0 0.0
  %2822 = vmatprep.subr.mxu0 0.0
  %2823 = vmatpush2.msra.mxu0 0.0
  %2824 = vmatprep.subr.mxu0 0.0
  %2825 = vmatpush2.msra.mxu0 0.0
  %2826 = vmatprep.subr.mxu0 0.0
  %2827 = vmatpush2.msra.mxu0 0.0
  %2828 = vmatprep.subr.mxu0 0.0
  %2829 = vmatpush2.msra.mxu0 0.0
  %2830 = vmatprep.subr.mxu0 0.0
  %2831 = vmatpush2.msra.mxu0 0.0
  %2832 = vmatprep.mubr.f32.mxu0 0.0
  %v2833 = vand.u32 %v934, 4294901760
  %v2834 = vsub.f32 %v934, %v2833
  %2835 = vmatmul.mubr.f32.gmra.mxu0 %v2834
  %v2836 = vpop.f32.mrf.mxu0
  %v2837 = vadd.f32 %v2728, %v2836
  %v2838 = vpop.f32.mrf.mxu0
  %v2839 = vadd.f32 %v2730, %v2838
  %2840 = vdwg.mxu0
  %2841 = vmatprep.subr.mxu0 0.0
  %2842 = vmatpush1.msra.mxu0 0.0
  %2843 = vmatprep.subr.mxu0 0.0
  %2844 = vmatpush1.msra.mxu0 0.0
  %2845 = vmatprep.subr.mxu0 0.0
  %2846 = vmatpush1.msra.mxu0 0.0
  %2847 = vmatprep.subr.mxu0 0.0
  %2848 = vmatpush1.msra.mxu0 0.0
  %2849 = vmatprep.subr.mxu0 0.0
  %2850 = vmatpush1.msra.mxu0 0.0
  %2851 = vmatprep.subr.mxu0 0.0
  %2852 = vmatpush1.msra.mxu0 0.0
  %2853 = vmatprep.subr.mxu0 0.0
  %2854 = vmatpush1.msra.mxu0 0.0
  %v2855 = vand.u32 %v2475, 4294901760
  %2856 = vmatprep.subr.mxu0 %v2855
  %v2857 = vand.u32 %v2474, 4294901760
  %2858 = vmatpush1.msra.mxu0 %v2857
  %v2859 = vand.u32 %v2463, 4294901760
  %2860 = vmatprep.subr.mxu0 %v2859
  %v2861 = vand.u32 %v2462, 4294901760
  %2862 = vmatpush1.msra.mxu0 %v2861
  %v2863 = vand.u32 %v2468, 4294901760
  %2864 = vmatprep.subr.mxu0 %v2863
  %v2865 = vand.u32 %v2469, 4294901760
  %2866 = vmatpush1.msra.mxu0 %v2865
  %v2867 = vand.u32 %v2449, 4294901760
  %2868 = vmatprep.subr.mxu0 %v2867
  %v2869 = vand.u32 %v2448, 4294901760
  %2870 = vmatpush1.msra.mxu0 %v2869
  %v2871 = vand.u32 %v2411, 4294901760
  %2872 = vmatprep.subr.mxu0 %v2871
  %v2873 = vand.u32 %v2410, 4294901760
  %2874 = vmatpush1.msra.mxu0 %v2873
  %v2875 = vand.u32 %v2442, 4294901760
  %2876 = vmatprep.subr.mxu0 %v2875
  %v2877 = vand.u32 %v2443, 4294901760
  %2878 = vmatpush1.msra.mxu0 %v2877
  %v2879 = vand.u32 %v2437, 4294901760
  %2880 = vmatprep.subr.mxu0 %v2879
  %v2881 = vand.u32 %v2436, 4294901760
  %2882 = vmatpush1.msra.mxu0 %v2881
  %v2883 = vand.u32 %v2425, 4294901760
  %2884 = vmatprep.subr.mxu0 %v2883
  %v2885 = vand.u32 %v2424, 4294901760
  %2886 = vmatpush1.msra.mxu0 %v2885
  %v2887 = vand.u32 %v2430, 4294901760
  %2888 = vmatprep.subr.mxu0 %v2887
  %v2889 = vand.u32 %v2431, 4294901760
  %2890 = vmatpush1.msra.mxu0 %v2889
  %2891 = vmatprep.subr.mxu0 0.0
  %2892 = vmatpush2.msra.mxu0 0.0
  %2893 = vmatprep.subr.mxu0 0.0
  %2894 = vmatpush2.msra.mxu0 0.0
  %2895 = vmatprep.subr.mxu0 0.0
  %2896 = vmatpush2.msra.mxu0 0.0
  %2897 = vmatprep.subr.mxu0 0.0
  %2898 = vmatpush2.msra.mxu0 0.0
  %2899 = vmatprep.subr.mxu0 0.0
  %2900 = vmatpush2.msra.mxu0 0.0
  %2901 = vmatprep.subr.mxu0 0.0
  %2902 = vmatpush2.msra.mxu0 0.0
  %2903 = vmatprep.subr.mxu0 0.0
  %2904 = vmatpush2.msra.mxu0 0.0
  %2905 = vmatprep.subr.mxu0 0.0
  %2906 = vmatpush2.msra.mxu0 0.0
  %2907 = vmatprep.subr.mxu0 0.0
  %2908 = vmatpush2.msra.mxu0 0.0
  %2909 = vmatprep.subr.mxu0 0.0
  %2910 = vmatpush2.msra.mxu0 0.0
  %2911 = vmatprep.subr.mxu0 0.0
  %2912 = vmatpush2.msra.mxu0 0.0
  %2913 = vmatprep.subr.mxu0 0.0
  %2914 = vmatpush2.msra.mxu0 0.0
  %2915 = vmatprep.subr.mxu0 0.0
  %2916 = vmatpush2.msra.mxu0 0.0
  %2917 = vmatprep.subr.mxu0 0.0
  %2918 = vmatpush2.msra.mxu0 0.0
  %2919 = vmatprep.subr.mxu0 0.0
  %2920 = vmatpush2.msra.mxu0 0.0
  %2921 = vmatprep.subr.mxu0 0.0
  %2922 = vmatpush2.msra.mxu0 0.0
  %2923 = vmatprep.mubr.f32.mxu0 0.0
  %v2924 = vand.u32 %v934, 4294901760
  %v2925 = vsub.f32 %v934, %v2924
  %v2926 = vand.u32 %v2925, 4294901760
  %2927 = vmatmul.mubr.f32.gmra.mxu0 %v2926
  %v2928 = vpop.f32.mrf.mxu0
  %v2929 = vadd.f32 %v2837, %v2928
  %v2930 = vpop.f32.mrf.mxu0
  %v2931 = vadd.f32 %v2839, %v2930
  %2932 = vdwg.mxu0
  %2933 = vmatprep.subr.mxu0 0.0
  %2934 = vmatpush1.msra.mxu0 0.0
  %2935 = vmatprep.subr.mxu0 0.0
  %2936 = vmatpush1.msra.mxu0 0.0
  %2937 = vmatprep.subr.mxu0 0.0
  %2938 = vmatpush1.msra.mxu0 0.0
  %2939 = vmatprep.subr.mxu0 0.0
  %2940 = vmatpush1.msra.mxu0 0.0
  %2941 = vmatprep.subr.mxu0 0.0
  %2942 = vmatpush1.msra.mxu0 0.0
  %2943 = vmatprep.subr.mxu0 0.0
  %2944 = vmatpush1.msra.mxu0 0.0
  %2945 = vmatprep.subr.mxu0 0.0
  %2946 = vmatpush1.msra.mxu0 0.0
  %v2947 = vand.u32 %v2475, 4294901760
  %v2948 = vsub.f32 %v2475, %v2947
  %v2949 = vand.u32 %v2948, 4294901760
  %2950 = vmatprep.subr.mxu0 %v2949
  %v2951 = vand.u32 %v2474, 4294901760
  %v2952 = vsub.f32 %v2474, %v2951
  %v2953 = vand.u32 %v2952, 4294901760
  %2954 = vmatpush1.msra.mxu0 %v2953
  %v2955 = vand.u32 %v2463, 4294901760
  %v2956 = vsub.f32 %v2463, %v2955
  %v2957 = vand.u32 %v2956, 4294901760
  %2958 = vmatprep.subr.mxu0 %v2957
  %v2959 = vand.u32 %v2462, 4294901760
  %v2960 = vsub.f32 %v2462, %v2959
  %v2961 = vand.u32 %v2960, 4294901760
  %2962 = vmatpush1.msra.mxu0 %v2961
  %v2963 = vand.u32 %v2468, 4294901760
  %v2964 = vsub.f32 %v2468, %v2963
  %v2965 = vand.u32 %v2964, 4294901760
  %2966 = vmatprep.subr.mxu0 %v2965
  %v2967 = vand.u32 %v2469, 4294901760
  %v2968 = vsub.f32 %v2469, %v2967
  %v2969 = vand.u32 %v2968, 4294901760
  %2970 = vmatpush1.msra.mxu0 %v2969
  %v2971 = vand.u32 %v2449, 4294901760
  %v2972 = vsub.f32 %v2449, %v2971
  %v2973 = vand.u32 %v2972, 4294901760
  %2974 = vmatprep.subr.mxu0 %v2973
  %v2975 = vand.u32 %v2448, 4294901760
  %v2976 = vsub.f32 %v2448, %v2975
  %v2977 = vand.u32 %v2976, 4294901760
  %2978 = vmatpush1.msra.mxu0 %v2977
  %v2979 = vand.u32 %v2411, 4294901760
  %v2980 = vsub.f32 %v2411, %v2979
  %v2981 = vand.u32 %v2980, 4294901760
  %2982 = vmatprep.subr.mxu0 %v2981
  %v2983 = vand.u32 %v2410, 4294901760
  %v2984 = vsub.f32 %v2410, %v2983
  %v2985 = vand.u32 %v2984, 4294901760
  %2986 = vmatpush1.msra.mxu0 %v2985
  %v2987 = vand.u32 %v2442, 4294901760
  %v2988 = vsub.f32 %v2442, %v2987
  %v2989 = vand.u32 %v2988, 4294901760
  %2990 = vmatprep.subr.mxu0 %v2989
  %v2991 = vand.u32 %v2443, 4294901760
  %v2992 = vsub.f32 %v2443, %v2991
  %v2993 = vand.u32 %v2992, 4294901760
  %2994 = vmatpush1.msra.mxu0 %v2993
  %v2995 = vand.u32 %v2437, 4294901760
  %v2996 = vsub.f32 %v2437, %v2995
  %v2997 = vand.u32 %v2996, 4294901760
  %2998 = vmatprep.subr.mxu0 %v2997
  %v2999 = vand.u32 %v2436, 4294901760
  %v3000 = vsub.f32 %v2436, %v2999
  %v3001 = vand.u32 %v3000, 4294901760
  %3002 = vmatpush1.msra.mxu0 %v3001
  %v3003 = vand.u32 %v2425, 4294901760
  %v3004 = vsub.f32 %v2425, %v3003
  %v3005 = vand.u32 %v3004, 4294901760
  %3006 = vmatprep.subr.mxu0 %v3005
  %v3007 = vand.u32 %v2424, 4294901760
  %v3008 = vsub.f32 %v2424, %v3007
  %v3009 = vand.u32 %v3008, 4294901760
  %3010 = vmatpush1.msra.mxu0 %v3009
  %v3011 = vand.u32 %v2430, 4294901760
  %v3012 = vsub.f32 %v2430, %v3011
  %v3013 = vand.u32 %v3012, 4294901760
  %3014 = vmatprep.subr.mxu0 %v3013
  %v3015 = vand.u32 %v2431, 4294901760
  %v3016 = vsub.f32 %v2431, %v3015
  %v3017 = vand.u32 %v3016, 4294901760
  %3018 = vmatpush1.msra.mxu0 %v3017
  %3019 = vmatprep.subr.mxu0 0.0
  %3020 = vmatpush2.msra.mxu0 0.0
  %3021 = vmatprep.subr.mxu0 0.0
  %3022 = vmatpush2.msra.mxu0 0.0
  %3023 = vmatprep.subr.mxu0 0.0
  %3024 = vmatpush2.msra.mxu0 0.0
  %3025 = vmatprep.subr.mxu0 0.0
  %3026 = vmatpush2.msra.mxu0 0.0
  %3027 = vmatprep.subr.mxu0 0.0
  %3028 = vmatpush2.msra.mxu0 0.0
  %3029 = vmatprep.subr.mxu0 0.0
  %3030 = vmatpush2.msra.mxu0 0.0
  %3031 = vmatprep.subr.mxu0 0.0
  %3032 = vmatpush2.msra.mxu0 0.0
  %3033 = vmatprep.subr.mxu0 0.0
  %3034 = vmatpush2.msra.mxu0 0.0
  %3035 = vmatprep.subr.mxu0 0.0
  %3036 = vmatpush2.msra.mxu0 0.0
  %3037 = vmatprep.subr.mxu0 0.0
  %3038 = vmatpush2.msra.mxu0 0.0
  %3039 = vmatprep.subr.mxu0 0.0
  %3040 = vmatpush2.msra.mxu0 0.0
  %3041 = vmatprep.subr.mxu0 0.0
  %3042 = vmatpush2.msra.mxu0 0.0
  %3043 = vmatprep.subr.mxu0 0.0
  %3044 = vmatpush2.msra.mxu0 0.0
  %3045 = vmatprep.subr.mxu0 0.0
  %3046 = vmatpush2.msra.mxu0 0.0
  %3047 = vmatprep.subr.mxu0 0.0
  %3048 = vmatpush2.msra.mxu0 0.0
  %3049 = vmatprep.subr.mxu0 0.0
  %3050 = vmatpush2.msra.mxu0 0.0
  %3051 = vmatprep.mubr.f32.mxu0 0.0
  %v3052 = vand.u32 %v934, 4294901760
  %3053 = vmatmul.mubr.f32.gmra.mxu0 %v3052
  %v3054 = vpop.f32.mrf.mxu0
  %v3055 = vadd.f32 %v2929, %v3054
  %v3056 = vpop.f32.mrf.mxu0
  %v3057 = vadd.f32 %v2931, %v3056
  %3058 = vdwg.mxu0
  %3059 = vmatprep.subr.mxu0 0.0
  %3060 = vmatpush1.msra.mxu0 0.0
  %3061 = vmatprep.subr.mxu0 0.0
  %3062 = vmatpush1.msra.mxu0 0.0
  %3063 = vmatprep.subr.mxu0 0.0
  %3064 = vmatpush1.msra.mxu0 0.0
  %3065 = vmatprep.subr.mxu0 0.0
  %3066 = vmatpush1.msra.mxu0 0.0
  %3067 = vmatprep.subr.mxu0 0.0
  %3068 = vmatpush1.msra.mxu0 0.0
  %3069 = vmatprep.subr.mxu0 0.0
  %3070 = vmatpush1.msra.mxu0 0.0
  %3071 = vmatprep.subr.mxu0 0.0
  %3072 = vmatpush1.msra.mxu0 0.0
  %v3073 = vand.u32 %v2475, 4294901760
  %3074 = vmatprep.subr.mxu0 %v3073
  %v3075 = vand.u32 %v2474, 4294901760
  %3076 = vmatpush1.msra.mxu0 %v3075
  %v3077 = vand.u32 %v2463, 4294901760
  %3078 = vmatprep.subr.mxu0 %v3077
  %v3079 = vand.u32 %v2462, 4294901760
  %3080 = vmatpush1.msra.mxu0 %v3079
  %v3081 = vand.u32 %v2468, 4294901760
  %3082 = vmatprep.subr.mxu0 %v3081
  %v3083 = vand.u32 %v2469, 4294901760
  %3084 = vmatpush1.msra.mxu0 %v3083
  %v3085 = vand.u32 %v2449, 4294901760
  %3086 = vmatprep.subr.mxu0 %v3085
  %v3087 = vand.u32 %v2448, 4294901760
  %3088 = vmatpush1.msra.mxu0 %v3087
  %v3089 = vand.u32 %v2411, 4294901760
  %3090 = vmatprep.subr.mxu0 %v3089
  %v3091 = vand.u32 %v2410, 4294901760
  %3092 = vmatpush1.msra.mxu0 %v3091
  %v3093 = vand.u32 %v2442, 4294901760
  %3094 = vmatprep.subr.mxu0 %v3093
  %v3095 = vand.u32 %v2443, 4294901760
  %3096 = vmatpush1.msra.mxu0 %v3095
  %v3097 = vand.u32 %v2437, 4294901760
  %3098 = vmatprep.subr.mxu0 %v3097
  %v3099 = vand.u32 %v2436, 4294901760
  %3100 = vmatpush1.msra.mxu0 %v3099
  %v3101 = vand.u32 %v2425, 4294901760
  %3102 = vmatprep.subr.mxu0 %v3101
  %v3103 = vand.u32 %v2424, 4294901760
  %3104 = vmatpush1.msra.mxu0 %v3103
  %v3105 = vand.u32 %v2430, 4294901760
  %3106 = vmatprep.subr.mxu0 %v3105
  %v3107 = vand.u32 %v2431, 4294901760
  %3108 = vmatpush1.msra.mxu0 %v3107
  %3109 = vmatprep.subr.mxu0 0.0
  %3110 = vmatpush2.msra.mxu0 0.0
  %3111 = vmatprep.subr.mxu0 0.0
  %3112 = vmatpush2.msra.mxu0 0.0
  %3113 = vmatprep.subr.mxu0 0.0
  %3114 = vmatpush2.msra.mxu0 0.0
  %3115 = vmatprep.subr.mxu0 0.0
  %3116 = vmatpush2.msra.mxu0 0.0
  %3117 = vmatprep.subr.mxu0 0.0
  %3118 = vmatpush2.msra.mxu0 0.0
  %3119 = vmatprep.subr.mxu0 0.0
  %3120 = vmatpush2.msra.mxu0 0.0
  %3121 = vmatprep.subr.mxu0 0.0
  %3122 = vmatpush2.msra.mxu0 0.0
  %3123 = vmatprep.subr.mxu0 0.0
  %3124 = vmatpush2.msra.mxu0 0.0
  %3125 = vmatprep.subr.mxu0 0.0
  %3126 = vmatpush2.msra.mxu0 0.0
  %3127 = vmatprep.subr.mxu0 0.0
  %3128 = vmatpush2.msra.mxu0 0.0
  %3129 = vmatprep.subr.mxu0 0.0
  %3130 = vmatpush2.msra.mxu0 0.0
  %3131 = vmatprep.subr.mxu0 0.0
  %3132 = vmatpush2.msra.mxu0 0.0
  %3133 = vmatprep.subr.mxu0 0.0
  %3134 = vmatpush2.msra.mxu0 0.0
  %3135 = vmatprep.subr.mxu0 0.0
  %3136 = vmatpush2.msra.mxu0 0.0
  %3137 = vmatprep.subr.mxu0 0.0
  %3138 = vmatpush2.msra.mxu0 0.0
  %3139 = vmatprep.subr.mxu0 0.0
  %3140 = vmatpush2.msra.mxu0 0.0
  %3141 = vmatprep.mubr.f32.mxu0 0.0
  %v3142 = vand.u32 %v934, 4294901760
  %3143 = vmatmul.mubr.f32.gmra.mxu0 %v3142
  %v3144 = vpop.f32.mrf.mxu0
  %v3145 = vadd.f32 %v3055, %v3144
  %v3146 = vpop.f32.mrf.mxu0
  %v3147 = vadd.f32 %v3057, %v3146
  %3148 = vdwg.mxu0
  %v3149 = vmax.f32 %v3145, 0.0
  %v3150 = vmax.f32 %v3147, 0.0
  %v3151 = vadd.f32 %v3149, %v3150
  %3152 = vadd.xlane.f32.xlu0 %v3151
  %v3153 = vpop.xlane.xlu0 %3152
  %v3154 = vmul.f32 %v3149, %v3149
  %v3155 = vmul.f32 %v3150, %v3150
  %v3156 = vadd.f32 %v3154, %v3155
  %3157 = vadd.xlane.f32.xlu0 %v3156
  %v3158 = vpop.xlane.xlu0 %3157
  %v3159 = vmul.f32 %v3153, 0.00390625
  %v3160 = vmul.f32 %v3158, 0.00390625
  %v3161 = vmul.f32 %v3159, %v3159
  %v3162 = vsub.f32 %v3160, %v3161
  %v3163 = vmax.f32 %v3162, 0.0
  %v3164 = vadd.f32 %v3163, 1e-05
  %v3165 = vrsqrt.pop %v3164
  %v3166 = vmul.f32 %v44, %v3165
  %v3167 = vsub.f32 %v3149, %v3159
  %v3168 = vsub.f32 %v3150, %v3159
  %3170 = vset.pattern.permute.xlu0 0
  %3171 = vperm.xlu0 %3170, %v3166
  %v3172 = vpop.permute.xlu0 %3171
  %v3174 = vmul.f32 %v3167, %v3172
  %v3175 = vmul.f32 %v3168, %v3172
  %v3176 = vadd.f32 %v3174, %v1639
  %v3177 = vadd.f32 %v3175, %v1639
  %3178 = vst [vmem:[%s11] sm:$0xff] %v1641
  %3179 = vst [vmem:[%s11 + $0x8] sm:$0xff] %v1642
  %3180 = vst [vmem:[%s11 + $0x10] sm:$0xff] %v3176
  %3181 = vst [vmem:[%s11 + $0x18] sm:$0xff] %v3177
  // Predicated region
  $region46: #{conv_block_ine.1} parent=0 // pred_check
    _
  $region47: #{conv_block_ine.1} parent=0 // pred_check_branch
    %3183 = sbr.rel (0) target = $region49
  $region48: #{conv_block_ine.1} parent=0 // pred_region
    _
  $region49: #{conv_block_ine.1} parent=0 // pred_fallthru
    _
  // Predicated region
  $region50: #{conv_block_ine.1} parent=0 // pred_check
    _
  $region51: #{conv_block_ine.1} parent=0 // pred_check_branch
    %3185 = sbr.rel (0) target = $region53
  $region52: #{conv_block_ine.1} parent=0 // pred_region
    _
  $region53: #{conv_block_ine.1} parent=0 // pred_fallthru
    _

</llo_original>
